<compile_context>
chip_gen: v7x
topology: tpu7x:2x2x1
jax: 0.10.0
libtpu: 0.0.40
codegen_flags: <defaults>
</compile_context>

<pallas_src>
import math

import jax
import jax.numpy as jnp
from jax.experimental import pallas as pl
from jax.experimental.pallas import tpu as pltpu

MODEL_SIZE = 32
NUM_HEADS = 4
HEAD_DIM = MODEL_SIZE // NUM_HEADS
HIDDEN_SIZE = 64
NUM_LAYERS = 2
MAX_LEN = 16
SEQ_LEN = 8
BATCH = 2
CONST = 10000.0
LN_EPS = 1e-5
MASK_VALUE = -1e30  # finite large-negative (underflows to exact 0 after softmax)

_VECS_PER_LAYER = 8  # [bq, bo, b1, b2, g1, be1, g2, be2]


# ---------------------------------------------------------------------------
# In-kernel helpers
# ---------------------------------------------------------------------------
def _layer_norm(x, gamma, beta):
    mu = jnp.mean(x, axis=-1, keepdims=True)
    var = jnp.mean((x - mu) ** 2, axis=-1, keepdims=True)
    return (x - mu) * jax.lax.rsqrt(var + LN_EPS) * gamma + beta


# ---------------------------------------------------------------------------
# Single fused kernel: posenc + NUM_LAYERS encoder layers + final LayerNorm.
# Activations live as (B*L, D); batch separation in attention is enforced by
# the block-diagonal additive mask (cross-batch entries = MASK_VALUE).
# ---------------------------------------------------------------------------
def fused_encoder_kernel(xpe_ref, amask_ref, wqo_ref, wffn_ref, vecs_ref, o_ref):
    # ---- positional encoding (dropout p=0.5 is identity in eval) ----
    x = xpe_ref[0] * jnp.float32(math.sqrt(MODEL_SIZE)) + xpe_ref[1]   # (BL, D)
    amask = amask_ref[...]                                             # (BL, BL)
    scale = jnp.float32(1.0 / math.sqrt(HEAD_DIM))

    for l in range(NUM_LAYERS):                 # static unroll (NUM_LAYERS small)
        base = l * _VECS_PER_LAYER
        wq = wqo_ref[l, 0, :, :]                # (D, D)  (in, out)
        wo = wqo_ref[l, 1, :, :]                # (D, D)  (in, out)
        w1 = wffn_ref[l, 0, :, :]               # (D, H)  (in, out)
        w2 = wffn_ref[l, 1, :, :]               # (D, H)  PyTorch (out, in) layout
        bq = vecs_ref[base + 0:base + 1, 0:MODEL_SIZE]
        bo = vecs_ref[base + 1:base + 2, 0:MODEL_SIZE]
        b1 = vecs_ref[base + 2:base + 3, 0:HIDDEN_SIZE]
        b2 = vecs_ref[base + 3:base + 4, 0:MODEL_SIZE]
        g1 = vecs_ref[base + 4:base + 5, 0:MODEL_SIZE]
        be1 = vecs_ref[base + 5:base + 6, 0:MODEL_SIZE]
        g2 = vecs_ref[base + 6:base + 7, 0:MODEL_SIZE]
        be2 = vecs_ref[base + 7:base + 8, 0:MODEL_SIZE]

        # ---- self-attention sublayer (pre-norm) ----
        xn = _layer_norm(x, g1, be1)
        # Reference MultiHeadAttention applies q_transform to querys, keys AND
        # values, so Q == K == V == q_transform(xn).
        qkv = jnp.dot(xn, wq, preferred_element_type=jnp.float32) + bq  # (BL, D)
        q_scaled = qkv * scale                   # scale hoisted out of head loop

        heads = []
        for h in range(NUM_HEADS):               # static unroll
            lo = h * HEAD_DIM
            qh = q_scaled[:, lo:lo + HEAD_DIM]   # (BL, hd)
            kvh = qkv[:, lo:lo + HEAD_DIM]       # (BL, hd)
            # scores = (q*scale) @ k^T + additive mask (contract dim 1 of both)
            e = jax.lax.dot_general(
                qh, kvh,
                dimension_numbers=(((1,), (1,)), ((), ())),
                preferred_element_type=jnp.float32) + amask              # (BL, BL)
            e = e - jnp.max(e, axis=-1, keepdims=True)
            p = jnp.exp(e)
            p = p / jnp.sum(p, axis=-1, keepdims=True)
            heads.append(jnp.dot(p, kvh, preferred_element_type=jnp.float32))

        # Lane-axis concat (XLU, idle here) + ONE output projection matmul.
        head_cat = jnp.concatenate(heads, axis=-1)                       # (BL, D)
        attn = jnp.dot(head_cat, wo, preferred_element_type=jnp.float32) + bo
        x = x + attn                              # dropout1 = identity (eval)

        # ---- feed-forward sublayer (pre-norm) ----
        xn = _layer_norm(x, g2, be2)
        h1 = jnp.dot(xn, w1, preferred_element_type=jnp.float32) + b1    # (BL, H)
        h1 = jnp.maximum(h1, 0.0)
        # w2 stored in PyTorch (out, in) layout -> contract its dim 1 (no transpose).
        ffn = jax.lax.dot_general(
            h1, w2,
            dimension_numbers=(((1,), (1,)), ((), ())),
            preferred_element_type=jnp.float32) + b2                     # (BL, D)
        x = x + ffn                               # dropout2 = identity (eval)

    # ---- final LayerNorm ----
    fbase = NUM_LAYERS * _VECS_PER_LAYER
    gf = vecs_ref[fbase + 0:fbase + 1, 0:MODEL_SIZE]
    bf = vecs_ref[fbase + 1:fbase + 2, 0:MODEL_SIZE]
    o_ref[...] = _layer_norm(x, gf, bf)


# ---------------------------------------------------------------------------
# Wrappers
# ---------------------------------------------------------------------------
def _build_additive_mask(mask):
    """mask: (B, Lq, Lk) float, nonzero => masked out.
    Returns block-diagonal additive mask (B*Lq, B*Lk): 0 where attention is
    allowed, MASK_VALUE where masked or cross-batch."""
    B, Lq, Lk = mask.shape
    neg = jnp.where(mask != 0, jnp.float32(MASK_VALUE), jnp.float32(0.0))  # (B,Lq,Lk)
    same_batch = jnp.eye(B, dtype=jnp.float32)                             # (B, B)
    full = jnp.where(same_batch[:, None, :, None] > 0,
                     neg[:, :, None, :],
                     jnp.float32(MASK_VALUE))                              # (B,Lq,B,Lk)
    return full.reshape(B * Lq, B * Lk)


def pack_params(params):
    """One-time packing: transpose PyTorch (out,in) weights to (in,out) where
    needed and consolidate all per-layer tensors into a few stacked slabs."""
    layers = params["layers"]
    # (L, 2, D, D): [q_transform^T, final_projection^T]
    wqo = jnp.stack([jnp.stack([p["wq"].T, p["wo"].T]) for p in layers])
    # (L, 2, D, H): [layer1^T (in,out), layer2 as-is (out,in) == (D,H)]
    wffn = jnp.stack([jnp.stack([p["w1"].T, p["w2"]]) for p in layers])

    def pad_h(v):
        v = v.reshape(-1).astype(jnp.float32)
        return jnp.pad(v, (0, HIDDEN_SIZE - v.shape[0]))

    rows = []
    for p in layers:
        for key in ("bq", "bo", "b1", "b2", "g1", "be1", "g2", "be2"):
            rows.append(pad_h(p[key]))
    rows.append(pad_h(params["ln_g"]))
    rows.append(pad_h(params["ln_b"]))
    vecs = jnp.stack(rows)                      # (L*8 + 2, H)

    return dict(wqo=wqo, wffn=wffn, vecs=vecs, pe=params["pe"])


@jax.jit
def encoder_forward(vids_padded, mask, packed):
    B, L, D = vids_padded.shape
    BL = B * L

    x2 = vids_padded.reshape(BL, D)
    pe = jnp.broadcast_to(packed["pe"][:, :L, :], (B, L, D)).reshape(BL, D)
    xpe = jnp.stack([x2, pe])                   # (2, BL, D)
    amask = _build_additive_mask(mask)          # (BL, BL)

    args = [xpe, amask, packed["wqo"], packed["wffn"], packed["vecs"]]

    vmem_spec = pl.BlockSpec(memory_space=pltpu.MemorySpace.VMEM)
    # No grid: single invocation, all operands fully resident in VMEM
    # (total working set well under 1 MiB on every TPU generation).
    out = pl.pallas_call(
        fused_encoder_kernel,
        out_shape=jax.ShapeDtypeStruct((BL, D), jnp.float32),
        in_specs=[vmem_spec] * len(args),
        out_specs=vmem_spec,
    )(*args)
    return out.reshape(B, L, D)


# ---------------------------------------------------------------------------
# Pure-JAX reference (mirrors the PyTorch module in eval mode)
# ---------------------------------------------------------------------------
def _ln_ref(x, g, b):
    mu = jnp.mean(x, axis=-1, keepdims=True)
    var = jnp.mean((x - mu) ** 2, axis=-1, keepdims=True)
    return (x - mu) / jnp.sqrt(var + LN_EPS) * g + b


def reference_forward(x, mask, params):
    B, L, D = x.shape
    h = x * math.sqrt(MODEL_SIZE) + params["pe"][:, :L, :]
    addm = jnp.where(mask != 0, jnp.float32(-jnp.inf), jnp.float32(0.0))[:, None, :, :]
    for p in params["layers"]:
        xn = _ln_ref(h, p["g1"], p["be1"])
        qkv = xn @ p["wq"].T + p["bq"]                                     # (B,L,D)
        qh = qkv.reshape(B, L, NUM_HEADS, HEAD_DIM).transpose(0, 2, 1, 3)  # (B,H,L,hd)
        e = jnp.einsum("bhqd,bhkd->bhqk", qh, qh) / math.sqrt(HEAD_DIM) + addm
        a = jax.nn.softmax(e, axis=-1)
        o = jnp.einsum("bhqk,bhkd->bhqd", a, qh).transpose(0, 2, 1, 3).reshape(B, L, D)
        h = h + o @ p["wo"].T + p["bo"]
        xn = _ln_ref(h, p["g2"], p["be2"])
        f = jnp.maximum(xn @ p["w1"].T + p["b1"], 0.0) @ p["w2"].T + p["b2"]
        h = h + f
    return _ln_ref(h, params["ln_g"], params["ln_b"])


# ---------------------------------------------------------------------------
# Deterministic parameter construction
# ---------------------------------------------------------------------------
def make_positional_embed(max_len, d):
    pos = jnp.arange(max_len, dtype=jnp.float32)[:, None]            # (max_len, 1)
    j = jnp.arange(0, d, 2, dtype=jnp.float32)[None, :]              # (1, d/2)
    angle = pos / (CONST ** (j / float(d)))                          # (max_len, d/2)
    pe = jnp.stack([jnp.sin(angle), jnp.cos(angle)], axis=-1)        # interleave
    return pe.reshape(1, max_len, d).astype(jnp.float32)


def _linear(key, out_f, in_f):
    kw, kb = jax.random.split(key)
    bound = 1.0 / math.sqrt(in_f)
    w = jax.random.uniform(kw, (out_f, in_f), jnp.float32, -bound, bound)
    b = jax.random.uniform(kb, (1, out_f), jnp.float32, -bound, bound)
    return w, b


def init_params(key):
    layers = []
    keys = jax.random.split(key, NUM_LAYERS)
    for lk in keys:
        k1, k2, k3, k4 = jax.random.split(lk, 4)
        wq, bq = _linear(k1, MODEL_SIZE, MODEL_SIZE)
        wo, bo = _linear(k2, MODEL_SIZE, MODEL_SIZE)
        w1, b1 = _linear(k3, HIDDEN_SIZE, MODEL_SIZE)
        w2, b2 = _linear(k4, MODEL_SIZE, HIDDEN_SIZE)
        layers.append(dict(
            wq=wq, bq=bq, wo=wo, bo=bo, w1=w1, b1=b1, w2=w2, b2=b2,
            g1=jnp.ones((1, MODEL_SIZE), jnp.float32),
            be1=jnp.zeros((1, MODEL_SIZE), jnp.float32),
            g2=jnp.ones((1, MODEL_SIZE), jnp.float32),
            be2=jnp.zeros((1, MODEL_SIZE), jnp.float32),
        ))
    return dict(
        layers=layers,
        ln_g=jnp.ones((1, MODEL_SIZE), jnp.float32),
        ln_b=jnp.zeros((1, MODEL_SIZE), jnp.float32),
        pe=make_positional_embed(MAX_LEN, MODEL_SIZE),
    )


if __name__ == "__main__":
    key = jax.random.PRNGKey(0)
    kx, kp = jax.random.split(key)

    # vids_padded: (B, L, D); mask: (B, Lq, Lk), nonzero => attention masked out
    x = jax.random.normal(kx, (BATCH, SEQ_LEN, MODEL_SIZE), dtype=jnp.float32)
    valid_len = jnp.array([SEQ_LEN, 6], dtype=jnp.int32)                # padding mask
    key_mask = (jnp.arange(SEQ_LEN)[None, :] >= valid_len[:, None])     # (B, Lk)
    mask = jnp.broadcast_to(key_mask[:, None, :],
                            (BATCH, SEQ_LEN, SEQ_LEN)).astype(jnp.float32)

    params = init_params(kp)
    packed = pack_params(params)        # one-time weight transpose/packing

    out = encoder_forward(x, mask, packed)
    jax.block_until_ready(out)
    assert out.shape == (BATCH, SEQ_LEN, MODEL_SIZE)
    assert bool(jnp.all(jnp.isfinite(out)))

    # Correctness check against a pure-JAX reference (loose tolerance to absorb
    # MXU f32-pass precision differences; structural bugs would be O(1) off).
    ref = reference_forward(x, mask, params)
    max_err = float(jnp.max(jnp.abs(out - ref)))
    assert max_err < 5e-2, f"max abs error vs reference = {max_err}"

    print("KERNEL_OK")
</pallas_src>

<mosaic_0001>
module attributes {stable_mosaic.version = 11 : i64} {
  func.func @fused_encoder_kernel(%arg0: memref<2x16x32xf32, #tpu.memory_space<vmem>>, %arg1: memref<16x16xf32, #tpu.memory_space<vmem>>, %arg2: memref<2x2x32x32xf32, #tpu.memory_space<vmem>>, %arg3: memref<2x2x32x64xf32, #tpu.memory_space<vmem>>, %arg4: memref<18x64xf32, #tpu.memory_space<vmem>>, %arg5: memref<16x32xf32, #tpu.memory_space<vmem>>) attributes {dimension_semantics = [], scalar_prefetch = 0 : i64, scratch_operands = 0 : i64, tpu.core_type = #tpu.core_type<tc>} {
    %c0 = arith.constant 0 : index
    %c0_0 = arith.constant 0 : index
    %c0_1 = arith.constant 0 : index
    %0 = vector.load %arg0[%c0, %c0_0, %c0_1] : memref<2x16x32xf32, #tpu.memory_space<vmem>>, vector<1x16x32xf32>
    %1 = vector.shape_cast %0 : vector<1x16x32xf32> to vector<16x32xf32>
    %cst = arith.constant 5.65685415 : f32
    %2 = vector.broadcast %cst : f32 to vector<16x32xf32>
    %3 = arith.mulf %1, %2 : vector<16x32xf32>
    %c1 = arith.constant 1 : index
    %c0_2 = arith.constant 0 : index
    %c0_3 = arith.constant 0 : index
    %4 = vector.load %arg0[%c1, %c0_2, %c0_3] : memref<2x16x32xf32, #tpu.memory_space<vmem>>, vector<1x16x32xf32>
    %5 = vector.shape_cast %4 : vector<1x16x32xf32> to vector<16x32xf32>
    %6 = arith.addf %3, %5 : vector<16x32xf32>
    %c0_4 = arith.constant 0 : index
    %c0_5 = arith.constant 0 : index
    %7 = vector.load %arg1[%c0_4, %c0_5] : memref<16x16xf32, #tpu.memory_space<vmem>>, vector<16x16xf32>
    %c0_6 = arith.constant 0 : index
    %c0_7 = arith.constant 0 : index
    %c0_8 = arith.constant 0 : index
    %c0_9 = arith.constant 0 : index
    %8 = vector.load %arg2[%c0_6, %c0_7, %c0_8, %c0_9] : memref<2x2x32x32xf32, #tpu.memory_space<vmem>>, vector<1x1x32x32xf32>
    %9 = vector.shape_cast %8 : vector<1x1x32x32xf32> to vector<32x32xf32>
    %c0_10 = arith.constant 0 : index
    %c1_11 = arith.constant 1 : index
    %c0_12 = arith.constant 0 : index
    %c0_13 = arith.constant 0 : index
    %10 = vector.load %arg2[%c0_10, %c1_11, %c0_12, %c0_13] : memref<2x2x32x32xf32, #tpu.memory_space<vmem>>, vector<1x1x32x32xf32>
    %11 = vector.shape_cast %10 : vector<1x1x32x32xf32> to vector<32x32xf32>
    %c0_14 = arith.constant 0 : index
    %c0_15 = arith.constant 0 : index
    %c0_16 = arith.constant 0 : index
    %c0_17 = arith.constant 0 : index
    %12 = vector.load %arg3[%c0_14, %c0_15, %c0_16, %c0_17] : memref<2x2x32x64xf32, #tpu.memory_space<vmem>>, vector<1x1x32x64xf32>
    %13 = vector.shape_cast %12 : vector<1x1x32x64xf32> to vector<32x64xf32>
    %c0_18 = arith.constant 0 : index
    %c1_19 = arith.constant 1 : index
    %c0_20 = arith.constant 0 : index
    %c0_21 = arith.constant 0 : index
    %14 = vector.load %arg3[%c0_18, %c1_19, %c0_20, %c0_21] : memref<2x2x32x64xf32, #tpu.memory_space<vmem>>, vector<1x1x32x64xf32>
    %15 = vector.shape_cast %14 : vector<1x1x32x64xf32> to vector<32x64xf32>
    %c0_22 = arith.constant 0 : index
    %c0_23 = arith.constant 0 : index
    %16 = vector.load %arg4[%c0_22, %c0_23] : memref<18x64xf32, #tpu.memory_space<vmem>>, vector<1x32xf32>
    %c1_24 = arith.constant 1 : index
    %c0_25 = arith.constant 0 : index
    %17 = vector.load %arg4[%c1_24, %c0_25] : memref<18x64xf32, #tpu.memory_space<vmem>>, vector<1x32xf32>
    %c2 = arith.constant 2 : index
    %c0_26 = arith.constant 0 : index
    %18 = vector.load %arg4[%c2, %c0_26] : memref<18x64xf32, #tpu.memory_space<vmem>>, vector<1x64xf32>
    %c3 = arith.constant 3 : index
    %c0_27 = arith.constant 0 : index
    %19 = vector.load %arg4[%c3, %c0_27] : memref<18x64xf32, #tpu.memory_space<vmem>>, vector<1x32xf32>
    %c4 = arith.constant 4 : index
    %c0_28 = arith.constant 0 : index
    %20 = vector.load %arg4[%c4, %c0_28] : memref<18x64xf32, #tpu.memory_space<vmem>>, vector<1x32xf32>
    %c5 = arith.constant 5 : index
    %c0_29 = arith.constant 0 : index
    %21 = vector.load %arg4[%c5, %c0_29] : memref<18x64xf32, #tpu.memory_space<vmem>>, vector<1x32xf32>
    %c6 = arith.constant 6 : index
    %c0_30 = arith.constant 0 : index
    %22 = vector.load %arg4[%c6, %c0_30] : memref<18x64xf32, #tpu.memory_space<vmem>>, vector<1x32xf32>
    %c7 = arith.constant 7 : index
    %c0_31 = arith.constant 0 : index
    %23 = vector.load %arg4[%c7, %c0_31] : memref<18x64xf32, #tpu.memory_space<vmem>>, vector<1x32xf32>
    %cst_32 = arith.constant dense<0.000000e+00> : vector<16xf32>
    %24 = vector.multi_reduction <add>, %6, %cst_32 [1] : vector<16x32xf32> to vector<16xf32>
    %25 = vector.shape_cast %24 : vector<16xf32> to vector<16x1xf32>
    %cst_33 = arith.constant 3.200000e+01 : f32
    %26 = vector.broadcast %cst_33 : f32 to vector<16x1xf32>
    %27 = arith.divf %25, %26 : vector<16x1xf32>
    %28 = vector.broadcast %27 : vector<16x1xf32> to vector<16x32xf32>
    %29 = arith.subf %6, %28 : vector<16x32xf32>
    %30 = arith.mulf %29, %29 : vector<16x32xf32>
    %cst_34 = arith.constant dense<0.000000e+00> : vector<16xf32>
    %31 = vector.multi_reduction <add>, %30, %cst_34 [1] : vector<16x32xf32> to vector<16xf32>
    %32 = vector.shape_cast %31 : vector<16xf32> to vector<16x1xf32>
    %cst_35 = arith.constant 3.200000e+01 : f32
    %33 = vector.broadcast %cst_35 : f32 to vector<16x1xf32>
    %34 = arith.divf %32, %33 : vector<16x1xf32>
    %35 = vector.broadcast %27 : vector<16x1xf32> to vector<16x32xf32>
    %36 = arith.subf %6, %35 : vector<16x32xf32>
    %cst_36 = arith.constant 9.99999974E-6 : f32
    %37 = vector.broadcast %cst_36 : f32 to vector<16x1xf32>
    %38 = arith.addf %34, %37 : vector<16x1xf32>
    %39 = math.rsqrt %38 : vector<16x1xf32>
    %40 = vector.broadcast %39 : vector<16x1xf32> to vector<16x32xf32>
    %41 = arith.mulf %36, %40 : vector<16x32xf32>
    %42 = vector.broadcast %20 : vector<1x32xf32> to vector<16x32xf32>
    %43 = arith.mulf %41, %42 : vector<16x32xf32>
    %44 = vector.broadcast %21 : vector<1x32xf32> to vector<16x32xf32>
    %45 = arith.addf %43, %44 : vector<16x32xf32>
    %cst_37 = arith.constant dense<0.000000e+00> : vector<16x32xf32>
    %46 = tpu.matmul %45, %9, %cst_37 {dimension_numbers = #tpu.dot_dimension_numbers<[1], [0], [0], [1], [0, 0, 1, 1], [], []>} : vector<16x32xf32>, vector<32x32xf32>, vector<16x32xf32> -> vector<16x32xf32>
    %47 = vector.broadcast %16 : vector<1x32xf32> to vector<16x32xf32>
    %48 = arith.addf %46, %47 : vector<16x32xf32>
    %cst_38 = arith.constant 0.353553385 : f32
    %49 = vector.broadcast %cst_38 : f32 to vector<16x32xf32>
    %50 = arith.mulf %48, %49 : vector<16x32xf32>
    %51 = vector.extract_strided_slice %50 {offsets = [0, 0], sizes = [16, 8], strides = [1, 1]} : vector<16x32xf32> to vector<16x8xf32>
    %52 = vector.extract_strided_slice %48 {offsets = [0, 0], sizes = [16, 8], strides = [1, 1]} : vector<16x32xf32> to vector<16x8xf32>
    %cst_39 = arith.constant dense<0.000000e+00> : vector<16x16xf32>
    %53 = tpu.matmul %51, %52, %cst_39 {dimension_numbers = #tpu.dot_dimension_numbers<[1], [1], [0], [0], [0, 0, 1, 0], [], []>} : vector<16x8xf32>, vector<16x8xf32>, vector<16x16xf32> -> vector<16x16xf32>
    %54 = arith.addf %53, %7 : vector<16x16xf32>
    %cst_40 = arith.constant dense<0xFF800000> : vector<16xf32>
    %55 = vector.multi_reduction <maximumf>, %54, %cst_40 [1] : vector<16x16xf32> to vector<16xf32>
    %56 = vector.shape_cast %55 : vector<16xf32> to vector<16x1xf32>
    %57 = vector.broadcast %56 : vector<16x1xf32> to vector<16x16xf32>
    %58 = arith.subf %54, %57 : vector<16x16xf32>
    %59 = math.exp %58 : vector<16x16xf32>
    %cst_41 = arith.constant dense<0.000000e+00> : vector<16xf32>
    %60 = vector.multi_reduction <add>, %59, %cst_41 [1] : vector<16x16xf32> to vector<16xf32>
    %61 = vector.shape_cast %60 : vector<16xf32> to vector<16x1xf32>
    %62 = vector.broadcast %61 : vector<16x1xf32> to vector<16x16xf32>
    %63 = arith.divf %59, %62 : vector<16x16xf32>
    %cst_42 = arith.constant dense<0.000000e+00> : vector<16x8xf32>
    %64 = tpu.matmul %63, %52, %cst_42 {dimension_numbers = #tpu.dot_dimension_numbers<[1], [0], [0], [1], [0, 0, 1, 1], [], []>} : vector<16x16xf32>, vector<16x8xf32>, vector<16x8xf32> -> vector<16x8xf32>
    %65 = vector.extract_strided_slice %50 {offsets = [0, 8], sizes = [16, 8], strides = [1, 1]} : vector<16x32xf32> to vector<16x8xf32>
    %66 = vector.extract_strided_slice %48 {offsets = [0, 8], sizes = [16, 8], strides = [1, 1]} : vector<16x32xf32> to vector<16x8xf32>
    %cst_43 = arith.constant dense<0.000000e+00> : vector<16x16xf32>
    %67 = tpu.matmul %65, %66, %cst_43 {dimension_numbers = #tpu.dot_dimension_numbers<[1], [1], [0], [0], [0, 0, 1, 0], [], []>} : vector<16x8xf32>, vector<16x8xf32>, vector<16x16xf32> -> vector<16x16xf32>
    %68 = arith.addf %67, %7 : vector<16x16xf32>
    %cst_44 = arith.constant dense<0xFF800000> : vector<16xf32>
    %69 = vector.multi_reduction <maximumf>, %68, %cst_44 [1] : vector<16x16xf32> to vector<16xf32>
    %70 = vector.shape_cast %69 : vector<16xf32> to vector<16x1xf32>
    %71 = vector.broadcast %70 : vector<16x1xf32> to vector<16x16xf32>
    %72 = arith.subf %68, %71 : vector<16x16xf32>
    %73 = math.exp %72 : vector<16x16xf32>
    %cst_45 = arith.constant dense<0.000000e+00> : vector<16xf32>
    %74 = vector.multi_reduction <add>, %73, %cst_45 [1] : vector<16x16xf32> to vector<16xf32>
    %75 = vector.shape_cast %74 : vector<16xf32> to vector<16x1xf32>
    %76 = vector.broadcast %75 : vector<16x1xf32> to vector<16x16xf32>
    %77 = arith.divf %73, %76 : vector<16x16xf32>
    %cst_46 = arith.constant dense<0.000000e+00> : vector<16x8xf32>
    %78 = tpu.matmul %77, %66, %cst_46 {dimension_numbers = #tpu.dot_dimension_numbers<[1], [0], [0], [1], [0, 0, 1, 1], [], []>} : vector<16x16xf32>, vector<16x8xf32>, vector<16x8xf32> -> vector<16x8xf32>
    %79 = vector.extract_strided_slice %50 {offsets = [0, 16], sizes = [16, 8], strides = [1, 1]} : vector<16x32xf32> to vector<16x8xf32>
    %80 = vector.extract_strided_slice %48 {offsets = [0, 16], sizes = [16, 8], strides = [1, 1]} : vector<16x32xf32> to vector<16x8xf32>
    %cst_47 = arith.constant dense<0.000000e+00> : vector<16x16xf32>
    %81 = tpu.matmul %79, %80, %cst_47 {dimension_numbers = #tpu.dot_dimension_numbers<[1], [1], [0], [0], [0, 0, 1, 0], [], []>} : vector<16x8xf32>, vector<16x8xf32>, vector<16x16xf32> -> vector<16x16xf32>
    %82 = arith.addf %81, %7 : vector<16x16xf32>
    %cst_48 = arith.constant dense<0xFF800000> : vector<16xf32>
    %83 = vector.multi_reduction <maximumf>, %82, %cst_48 [1] : vector<16x16xf32> to vector<16xf32>
    %84 = vector.shape_cast %83 : vector<16xf32> to vector<16x1xf32>
    %85 = vector.broadcast %84 : vector<16x1xf32> to vector<16x16xf32>
    %86 = arith.subf %82, %85 : vector<16x16xf32>
    %87 = math.exp %86 : vector<16x16xf32>
    %cst_49 = arith.constant dense<0.000000e+00> : vector<16xf32>
    %88 = vector.multi_reduction <add>, %87, %cst_49 [1] : vector<16x16xf32> to vector<16xf32>
    %89 = vector.shape_cast %88 : vector<16xf32> to vector<16x1xf32>
    %90 = vector.broadcast %89 : vector<16x1xf32> to vector<16x16xf32>
    %91 = arith.divf %87, %90 : vector<16x16xf32>
    %cst_50 = arith.constant dense<0.000000e+00> : vector<16x8xf32>
    %92 = tpu.matmul %91, %80, %cst_50 {dimension_numbers = #tpu.dot_dimension_numbers<[1], [0], [0], [1], [0, 0, 1, 1], [], []>} : vector<16x16xf32>, vector<16x8xf32>, vector<16x8xf32> -> vector<16x8xf32>
    %93 = vector.extract_strided_slice %50 {offsets = [0, 24], sizes = [16, 8], strides = [1, 1]} : vector<16x32xf32> to vector<16x8xf32>
    %94 = vector.extract_strided_slice %48 {offsets = [0, 24], sizes = [16, 8], strides = [1, 1]} : vector<16x32xf32> to vector<16x8xf32>
    %cst_51 = arith.constant dense<0.000000e+00> : vector<16x16xf32>
    %95 = tpu.matmul %93, %94, %cst_51 {dimension_numbers = #tpu.dot_dimension_numbers<[1], [1], [0], [0], [0, 0, 1, 0], [], []>} : vector<16x8xf32>, vector<16x8xf32>, vector<16x16xf32> -> vector<16x16xf32>
    %96 = arith.addf %95, %7 : vector<16x16xf32>
    %cst_52 = arith.constant dense<0xFF800000> : vector<16xf32>
    %97 = vector.multi_reduction <maximumf>, %96, %cst_52 [1] : vector<16x16xf32> to vector<16xf32>
    %98 = vector.shape_cast %97 : vector<16xf32> to vector<16x1xf32>
    %99 = vector.broadcast %98 : vector<16x1xf32> to vector<16x16xf32>
    %100 = arith.subf %96, %99 : vector<16x16xf32>
    %101 = math.exp %100 : vector<16x16xf32>
    %cst_53 = arith.constant dense<0.000000e+00> : vector<16xf32>
    %102 = vector.multi_reduction <add>, %101, %cst_53 [1] : vector<16x16xf32> to vector<16xf32>
    %103 = vector.shape_cast %102 : vector<16xf32> to vector<16x1xf32>
    %104 = vector.broadcast %103 : vector<16x1xf32> to vector<16x16xf32>
    %105 = arith.divf %101, %104 : vector<16x16xf32>
    %cst_54 = arith.constant dense<0.000000e+00> : vector<16x8xf32>
    %106 = tpu.matmul %105, %94, %cst_54 {dimension_numbers = #tpu.dot_dimension_numbers<[1], [0], [0], [1], [0, 0, 1, 1], [], []>} : vector<16x16xf32>, vector<16x8xf32>, vector<16x8xf32> -> vector<16x8xf32>
    %107 = tpu.concatenate %64, %78, %92, %106 in 1 : vector<16x8xf32>, vector<16x8xf32>, vector<16x8xf32>, vector<16x8xf32> -> vector<16x32xf32>
    %cst_55 = arith.constant dense<0.000000e+00> : vector<16x32xf32>
    %108 = tpu.matmul %107, %11, %cst_55 {dimension_numbers = #tpu.dot_dimension_numbers<[1], [0], [0], [1], [0, 0, 1, 1], [], []>} : vector<16x32xf32>, vector<32x32xf32>, vector<16x32xf32> -> vector<16x32xf32>
    %109 = vector.broadcast %17 : vector<1x32xf32> to vector<16x32xf32>
    %110 = arith.addf %108, %109 : vector<16x32xf32>
    %111 = arith.addf %6, %110 : vector<16x32xf32>
    %cst_56 = arith.constant dense<0.000000e+00> : vector<16xf32>
    %112 = vector.multi_reduction <add>, %111, %cst_56 [1] : vector<16x32xf32> to vector<16xf32>
    %113 = vector.shape_cast %112 : vector<16xf32> to vector<16x1xf32>
    %cst_57 = arith.constant 3.200000e+01 : f32
    %114 = vector.broadcast %cst_57 : f32 to vector<16x1xf32>
    %115 = arith.divf %113, %114 : vector<16x1xf32>
    %116 = vector.broadcast %115 : vector<16x1xf32> to vector<16x32xf32>
    %117 = arith.subf %111, %116 : vector<16x32xf32>
    %118 = arith.mulf %117, %117 : vector<16x32xf32>
    %cst_58 = arith.constant dense<0.000000e+00> : vector<16xf32>
    %119 = vector.multi_reduction <add>, %118, %cst_58 [1] : vector<16x32xf32> to vector<16xf32>
    %120 = vector.shape_cast %119 : vector<16xf32> to vector<16x1xf32>
    %cst_59 = arith.constant 3.200000e+01 : f32
    %121 = vector.broadcast %cst_59 : f32 to vector<16x1xf32>
    %122 = arith.divf %120, %121 : vector<16x1xf32>
    %123 = vector.broadcast %115 : vector<16x1xf32> to vector<16x32xf32>
    %124 = arith.subf %111, %123 : vector<16x32xf32>
    %cst_60 = arith.constant 9.99999974E-6 : f32
    %125 = vector.broadcast %cst_60 : f32 to vector<16x1xf32>
    %126 = arith.addf %122, %125 : vector<16x1xf32>
    %127 = math.rsqrt %126 : vector<16x1xf32>
    %128 = vector.broadcast %127 : vector<16x1xf32> to vector<16x32xf32>
    %129 = arith.mulf %124, %128 : vector<16x32xf32>
    %130 = vector.broadcast %22 : vector<1x32xf32> to vector<16x32xf32>
    %131 = arith.mulf %129, %130 : vector<16x32xf32>
    %132 = vector.broadcast %23 : vector<1x32xf32> to vector<16x32xf32>
    %133 = arith.addf %131, %132 : vector<16x32xf32>
    %cst_61 = arith.constant dense<0.000000e+00> : vector<16x64xf32>
    %134 = tpu.matmul %133, %13, %cst_61 {dimension_numbers = #tpu.dot_dimension_numbers<[1], [0], [0], [1], [0, 0, 1, 1], [], []>} : vector<16x32xf32>, vector<32x64xf32>, vector<16x64xf32> -> vector<16x64xf32>
    %135 = vector.broadcast %18 : vector<1x64xf32> to vector<16x64xf32>
    %136 = arith.addf %134, %135 : vector<16x64xf32>
    %cst_62 = arith.constant 0.000000e+00 : f32
    %137 = vector.broadcast %cst_62 : f32 to vector<16x64xf32>
    %138 = arith.maximumf %136, %137 : vector<16x64xf32>
    %cst_63 = arith.constant dense<0.000000e+00> : vector<16x32xf32>
    %139 = tpu.matmul %138, %15, %cst_63 {dimension_numbers = #tpu.dot_dimension_numbers<[1], [1], [0], [0], [0, 0, 1, 0], [], []>} : vector<16x64xf32>, vector<32x64xf32>, vector<16x32xf32> -> vector<16x32xf32>
    %140 = vector.broadcast %19 : vector<1x32xf32> to vector<16x32xf32>
    %141 = arith.addf %139, %140 : vector<16x32xf32>
    %142 = arith.addf %111, %141 : vector<16x32xf32>
    %c1_64 = arith.constant 1 : index
    %c0_65 = arith.constant 0 : index
    %c0_66 = arith.constant 0 : index
    %c0_67 = arith.constant 0 : index
    %143 = vector.load %arg2[%c1_64, %c0_65, %c0_66, %c0_67] : memref<2x2x32x32xf32, #tpu.memory_space<vmem>>, vector<1x1x32x32xf32>
    %144 = vector.shape_cast %143 : vector<1x1x32x32xf32> to vector<32x32xf32>
    %c1_68 = arith.constant 1 : index
    %c1_69 = arith.constant 1 : index
    %c0_70 = arith.constant 0 : index
    %c0_71 = arith.constant 0 : index
    %145 = vector.load %arg2[%c1_68, %c1_69, %c0_70, %c0_71] : memref<2x2x32x32xf32, #tpu.memory_space<vmem>>, vector<1x1x32x32xf32>
    %146 = vector.shape_cast %145 : vector<1x1x32x32xf32> to vector<32x32xf32>
    %c1_72 = arith.constant 1 : index
    %c0_73 = arith.constant 0 : index
    %c0_74 = arith.constant 0 : index
    %c0_75 = arith.constant 0 : index
    %147 = vector.load %arg3[%c1_72, %c0_73, %c0_74, %c0_75] : memref<2x2x32x64xf32, #tpu.memory_space<vmem>>, vector<1x1x32x64xf32>
    %148 = vector.shape_cast %147 : vector<1x1x32x64xf32> to vector<32x64xf32>
    %c1_76 = arith.constant 1 : index
    %c1_77 = arith.constant 1 : index
    %c0_78 = arith.constant 0 : index
    %c0_79 = arith.constant 0 : index
    %149 = vector.load %arg3[%c1_76, %c1_77, %c0_78, %c0_79] : memref<2x2x32x64xf32, #tpu.memory_space<vmem>>, vector<1x1x32x64xf32>
    %150 = vector.shape_cast %149 : vector<1x1x32x64xf32> to vector<32x64xf32>
    %c8 = arith.constant 8 : index
    %c0_80 = arith.constant 0 : index
    %151 = vector.load %arg4[%c8, %c0_80] : memref<18x64xf32, #tpu.memory_space<vmem>>, vector<1x32xf32>
    %c9 = arith.constant 9 : index
    %c0_81 = arith.constant 0 : index
    %152 = vector.load %arg4[%c9, %c0_81] : memref<18x64xf32, #tpu.memory_space<vmem>>, vector<1x32xf32>
    %c10 = arith.constant 10 : index
    %c0_82 = arith.constant 0 : index
    %153 = vector.load %arg4[%c10, %c0_82] : memref<18x64xf32, #tpu.memory_space<vmem>>, vector<1x64xf32>
    %c11 = arith.constant 11 : index
    %c0_83 = arith.constant 0 : index
    %154 = vector.load %arg4[%c11, %c0_83] : memref<18x64xf32, #tpu.memory_space<vmem>>, vector<1x32xf32>
    %c12 = arith.constant 12 : index
    %c0_84 = arith.constant 0 : index
    %155 = vector.load %arg4[%c12, %c0_84] : memref<18x64xf32, #tpu.memory_space<vmem>>, vector<1x32xf32>
    %c13 = arith.constant 13 : index
    %c0_85 = arith.constant 0 : index
    %156 = vector.load %arg4[%c13, %c0_85] : memref<18x64xf32, #tpu.memory_space<vmem>>, vector<1x32xf32>
    %c14 = arith.constant 14 : index
    %c0_86 = arith.constant 0 : index
    %157 = vector.load %arg4[%c14, %c0_86] : memref<18x64xf32, #tpu.memory_space<vmem>>, vector<1x32xf32>
    %c15 = arith.constant 15 : index
    %c0_87 = arith.constant 0 : index
    %158 = vector.load %arg4[%c15, %c0_87] : memref<18x64xf32, #tpu.memory_space<vmem>>, vector<1x32xf32>
    %cst_88 = arith.constant dense<0.000000e+00> : vector<16xf32>
    %159 = vector.multi_reduction <add>, %142, %cst_88 [1] : vector<16x32xf32> to vector<16xf32>
    %160 = vector.shape_cast %159 : vector<16xf32> to vector<16x1xf32>
    %cst_89 = arith.constant 3.200000e+01 : f32
    %161 = vector.broadcast %cst_89 : f32 to vector<16x1xf32>
    %162 = arith.divf %160, %161 : vector<16x1xf32>
    %163 = vector.broadcast %162 : vector<16x1xf32> to vector<16x32xf32>
    %164 = arith.subf %142, %163 : vector<16x32xf32>
    %165 = arith.mulf %164, %164 : vector<16x32xf32>
    %cst_90 = arith.constant dense<0.000000e+00> : vector<16xf32>
    %166 = vector.multi_reduction <add>, %165, %cst_90 [1] : vector<16x32xf32> to vector<16xf32>
    %167 = vector.shape_cast %166 : vector<16xf32> to vector<16x1xf32>
    %cst_91 = arith.constant 3.200000e+01 : f32
    %168 = vector.broadcast %cst_91 : f32 to vector<16x1xf32>
    %169 = arith.divf %167, %168 : vector<16x1xf32>
    %170 = vector.broadcast %162 : vector<16x1xf32> to vector<16x32xf32>
    %171 = arith.subf %142, %170 : vector<16x32xf32>
    %cst_92 = arith.constant 9.99999974E-6 : f32
    %172 = vector.broadcast %cst_92 : f32 to vector<16x1xf32>
    %173 = arith.addf %169, %172 : vector<16x1xf32>
    %174 = math.rsqrt %173 : vector<16x1xf32>
    %175 = vector.broadcast %174 : vector<16x1xf32> to vector<16x32xf32>
    %176 = arith.mulf %171, %175 : vector<16x32xf32>
    %177 = vector.broadcast %155 : vector<1x32xf32> to vector<16x32xf32>
    %178 = arith.mulf %176, %177 : vector<16x32xf32>
    %179 = vector.broadcast %156 : vector<1x32xf32> to vector<16x32xf32>
    %180 = arith.addf %178, %179 : vector<16x32xf32>
    %cst_93 = arith.constant dense<0.000000e+00> : vector<16x32xf32>
    %181 = tpu.matmul %180, %144, %cst_93 {dimension_numbers = #tpu.dot_dimension_numbers<[1], [0], [0], [1], [0, 0, 1, 1], [], []>} : vector<16x32xf32>, vector<32x32xf32>, vector<16x32xf32> -> vector<16x32xf32>
    %182 = vector.broadcast %151 : vector<1x32xf32> to vector<16x32xf32>
    %183 = arith.addf %181, %182 : vector<16x32xf32>
    %cst_94 = arith.constant 0.353553385 : f32
    %184 = vector.broadcast %cst_94 : f32 to vector<16x32xf32>
    %185 = arith.mulf %183, %184 : vector<16x32xf32>
    %186 = vector.extract_strided_slice %185 {offsets = [0, 0], sizes = [16, 8], strides = [1, 1]} : vector<16x32xf32> to vector<16x8xf32>
    %187 = vector.extract_strided_slice %183 {offsets = [0, 0], sizes = [16, 8], strides = [1, 1]} : vector<16x32xf32> to vector<16x8xf32>
    %cst_95 = arith.constant dense<0.000000e+00> : vector<16x16xf32>
    %188 = tpu.matmul %186, %187, %cst_95 {dimension_numbers = #tpu.dot_dimension_numbers<[1], [1], [0], [0], [0, 0, 1, 0], [], []>} : vector<16x8xf32>, vector<16x8xf32>, vector<16x16xf32> -> vector<16x16xf32>
    %189 = arith.addf %188, %7 : vector<16x16xf32>
    %cst_96 = arith.constant dense<0xFF800000> : vector<16xf32>
    %190 = vector.multi_reduction <maximumf>, %189, %cst_96 [1] : vector<16x16xf32> to vector<16xf32>
    %191 = vector.shape_cast %190 : vector<16xf32> to vector<16x1xf32>
    %192 = vector.broadcast %191 : vector<16x1xf32> to vector<16x16xf32>
    %193 = arith.subf %189, %192 : vector<16x16xf32>
    %194 = math.exp %193 : vector<16x16xf32>
    %cst_97 = arith.constant dense<0.000000e+00> : vector<16xf32>
    %195 = vector.multi_reduction <add>, %194, %cst_97 [1] : vector<16x16xf32> to vector<16xf32>
    %196 = vector.shape_cast %195 : vector<16xf32> to vector<16x1xf32>
    %197 = vector.broadcast %196 : vector<16x1xf32> to vector<16x16xf32>
    %198 = arith.divf %194, %197 : vector<16x16xf32>
    %cst_98 = arith.constant dense<0.000000e+00> : vector<16x8xf32>
    %199 = tpu.matmul %198, %187, %cst_98 {dimension_numbers = #tpu.dot_dimension_numbers<[1], [0], [0], [1], [0, 0, 1, 1], [], []>} : vector<16x16xf32>, vector<16x8xf32>, vector<16x8xf32> -> vector<16x8xf32>
    %200 = vector.extract_strided_slice %185 {offsets = [0, 8], sizes = [16, 8], strides = [1, 1]} : vector<16x32xf32> to vector<16x8xf32>
    %201 = vector.extract_strided_slice %183 {offsets = [0, 8], sizes = [16, 8], strides = [1, 1]} : vector<16x32xf32> to vector<16x8xf32>
    %cst_99 = arith.constant dense<0.000000e+00> : vector<16x16xf32>
    %202 = tpu.matmul %200, %201, %cst_99 {dimension_numbers = #tpu.dot_dimension_numbers<[1], [1], [0], [0], [0, 0, 1, 0], [], []>} : vector<16x8xf32>, vector<16x8xf32>, vector<16x16xf32> -> vector<16x16xf32>
    %203 = arith.addf %202, %7 : vector<16x16xf32>
    %cst_100 = arith.constant dense<0xFF800000> : vector<16xf32>
    %204 = vector.multi_reduction <maximumf>, %203, %cst_100 [1] : vector<16x16xf32> to vector<16xf32>
    %205 = vector.shape_cast %204 : vector<16xf32> to vector<16x1xf32>
    %206 = vector.broadcast %205 : vector<16x1xf32> to vector<16x16xf32>
    %207 = arith.subf %203, %206 : vector<16x16xf32>
    %208 = math.exp %207 : vector<16x16xf32>
    %cst_101 = arith.constant dense<0.000000e+00> : vector<16xf32>
    %209 = vector.multi_reduction <add>, %208, %cst_101 [1] : vector<16x16xf32> to vector<16xf32>
    %210 = vector.shape_cast %209 : vector<16xf32> to vector<16x1xf32>
    %211 = vector.broadcast %210 : vector<16x1xf32> to vector<16x16xf32>
    %212 = arith.divf %208, %211 : vector<16x16xf32>
    %cst_102 = arith.constant dense<0.000000e+00> : vector<16x8xf32>
    %213 = tpu.matmul %212, %201, %cst_102 {dimension_numbers = #tpu.dot_dimension_numbers<[1], [0], [0], [1], [0, 0, 1, 1], [], []>} : vector<16x16xf32>, vector<16x8xf32>, vector<16x8xf32> -> vector<16x8xf32>
    %214 = vector.extract_strided_slice %185 {offsets = [0, 16], sizes = [16, 8], strides = [1, 1]} : vector<16x32xf32> to vector<16x8xf32>
    %215 = vector.extract_strided_slice %183 {offsets = [0, 16], sizes = [16, 8], strides = [1, 1]} : vector<16x32xf32> to vector<16x8xf32>
    %cst_103 = arith.constant dense<0.000000e+00> : vector<16x16xf32>
    %216 = tpu.matmul %214, %215, %cst_103 {dimension_numbers = #tpu.dot_dimension_numbers<[1], [1], [0], [0], [0, 0, 1, 0], [], []>} : vector<16x8xf32>, vector<16x8xf32>, vector<16x16xf32> -> vector<16x16xf32>
    %217 = arith.addf %216, %7 : vector<16x16xf32>
    %cst_104 = arith.constant dense<0xFF800000> : vector<16xf32>
    %218 = vector.multi_reduction <maximumf>, %217, %cst_104 [1] : vector<16x16xf32> to vector<16xf32>
    %219 = vector.shape_cast %218 : vector<16xf32> to vector<16x1xf32>
    %220 = vector.broadcast %219 : vector<16x1xf32> to vector<16x16xf32>
    %221 = arith.subf %217, %220 : vector<16x16xf32>
    %222 = math.exp %221 : vector<16x16xf32>
    %cst_105 = arith.constant dense<0.000000e+00> : vector<16xf32>
    %223 = vector.multi_reduction <add>, %222, %cst_105 [1] : vector<16x16xf32> to vector<16xf32>
    %224 = vector.shape_cast %223 : vector<16xf32> to vector<16x1xf32>
    %225 = vector.broadcast %224 : vector<16x1xf32> to vector<16x16xf32>
    %226 = arith.divf %222, %225 : vector<16x16xf32>
    %cst_106 = arith.constant dense<0.000000e+00> : vector<16x8xf32>
    %227 = tpu.matmul %226, %215, %cst_106 {dimension_numbers = #tpu.dot_dimension_numbers<[1], [0], [0], [1], [0, 0, 1, 1], [], []>} : vector<16x16xf32>, vector<16x8xf32>, vector<16x8xf32> -> vector<16x8xf32>
    %228 = vector.extract_strided_slice %185 {offsets = [0, 24], sizes = [16, 8], strides = [1, 1]} : vector<16x32xf32> to vector<16x8xf32>
    %229 = vector.extract_strided_slice %183 {offsets = [0, 24], sizes = [16, 8], strides = [1, 1]} : vector<16x32xf32> to vector<16x8xf32>
    %cst_107 = arith.constant dense<0.000000e+00> : vector<16x16xf32>
    %230 = tpu.matmul %228, %229, %cst_107 {dimension_numbers = #tpu.dot_dimension_numbers<[1], [1], [0], [0], [0, 0, 1, 0], [], []>} : vector<16x8xf32>, vector<16x8xf32>, vector<16x16xf32> -> vector<16x16xf32>
    %231 = arith.addf %230, %7 : vector<16x16xf32>
    %cst_108 = arith.constant dense<0xFF800000> : vector<16xf32>
    %232 = vector.multi_reduction <maximumf>, %231, %cst_108 [1] : vector<16x16xf32> to vector<16xf32>
    %233 = vector.shape_cast %232 : vector<16xf32> to vector<16x1xf32>
    %234 = vector.broadcast %233 : vector<16x1xf32> to vector<16x16xf32>
    %235 = arith.subf %231, %234 : vector<16x16xf32>
    %236 = math.exp %235 : vector<16x16xf32>
    %cst_109 = arith.constant dense<0.000000e+00> : vector<16xf32>
    %237 = vector.multi_reduction <add>, %236, %cst_109 [1] : vector<16x16xf32> to vector<16xf32>
    %238 = vector.shape_cast %237 : vector<16xf32> to vector<16x1xf32>
    %239 = vector.broadcast %238 : vector<16x1xf32> to vector<16x16xf32>
    %240 = arith.divf %236, %239 : vector<16x16xf32>
    %cst_110 = arith.constant dense<0.000000e+00> : vector<16x8xf32>
    %241 = tpu.matmul %240, %229, %cst_110 {dimension_numbers = #tpu.dot_dimension_numbers<[1], [0], [0], [1], [0, 0, 1, 1], [], []>} : vector<16x16xf32>, vector<16x8xf32>, vector<16x8xf32> -> vector<16x8xf32>
    %242 = tpu.concatenate %199, %213, %227, %241 in 1 : vector<16x8xf32>, vector<16x8xf32>, vector<16x8xf32>, vector<16x8xf32> -> vector<16x32xf32>
    %cst_111 = arith.constant dense<0.000000e+00> : vector<16x32xf32>
    %243 = tpu.matmul %242, %146, %cst_111 {dimension_numbers = #tpu.dot_dimension_numbers<[1], [0], [0], [1], [0, 0, 1, 1], [], []>} : vector<16x32xf32>, vector<32x32xf32>, vector<16x32xf32> -> vector<16x32xf32>
    %244 = vector.broadcast %152 : vector<1x32xf32> to vector<16x32xf32>
    %245 = arith.addf %243, %244 : vector<16x32xf32>
    %246 = arith.addf %142, %245 : vector<16x32xf32>
    %cst_112 = arith.constant dense<0.000000e+00> : vector<16xf32>
    %247 = vector.multi_reduction <add>, %246, %cst_112 [1] : vector<16x32xf32> to vector<16xf32>
    %248 = vector.shape_cast %247 : vector<16xf32> to vector<16x1xf32>
    %cst_113 = arith.constant 3.200000e+01 : f32
    %249 = vector.broadcast %cst_113 : f32 to vector<16x1xf32>
    %250 = arith.divf %248, %249 : vector<16x1xf32>
    %251 = vector.broadcast %250 : vector<16x1xf32> to vector<16x32xf32>
    %252 = arith.subf %246, %251 : vector<16x32xf32>
    %253 = arith.mulf %252, %252 : vector<16x32xf32>
    %cst_114 = arith.constant dense<0.000000e+00> : vector<16xf32>
    %254 = vector.multi_reduction <add>, %253, %cst_114 [1] : vector<16x32xf32> to vector<16xf32>
    %255 = vector.shape_cast %254 : vector<16xf32> to vector<16x1xf32>
    %cst_115 = arith.constant 3.200000e+01 : f32
    %256 = vector.broadcast %cst_115 : f32 to vector<16x1xf32>
    %257 = arith.divf %255, %256 : vector<16x1xf32>
    %258 = vector.broadcast %250 : vector<16x1xf32> to vector<16x32xf32>
    %259 = arith.subf %246, %258 : vector<16x32xf32>
    %cst_116 = arith.constant 9.99999974E-6 : f32
    %260 = vector.broadcast %cst_116 : f32 to vector<16x1xf32>
    %261 = arith.addf %257, %260 : vector<16x1xf32>
    %262 = math.rsqrt %261 : vector<16x1xf32>
    %263 = vector.broadcast %262 : vector<16x1xf32> to vector<16x32xf32>
    %264 = arith.mulf %259, %263 : vector<16x32xf32>
    %265 = vector.broadcast %157 : vector<1x32xf32> to vector<16x32xf32>
    %266 = arith.mulf %264, %265 : vector<16x32xf32>
    %267 = vector.broadcast %158 : vector<1x32xf32> to vector<16x32xf32>
    %268 = arith.addf %266, %267 : vector<16x32xf32>
    %cst_117 = arith.constant dense<0.000000e+00> : vector<16x64xf32>
    %269 = tpu.matmul %268, %148, %cst_117 {dimension_numbers = #tpu.dot_dimension_numbers<[1], [0], [0], [1], [0, 0, 1, 1], [], []>} : vector<16x32xf32>, vector<32x64xf32>, vector<16x64xf32> -> vector<16x64xf32>
    %270 = vector.broadcast %153 : vector<1x64xf32> to vector<16x64xf32>
    %271 = arith.addf %269, %270 : vector<16x64xf32>
    %cst_118 = arith.constant 0.000000e+00 : f32
    %272 = vector.broadcast %cst_118 : f32 to vector<16x64xf32>
    %273 = arith.maximumf %271, %272 : vector<16x64xf32>
    %cst_119 = arith.constant dense<0.000000e+00> : vector<16x32xf32>
    %274 = tpu.matmul %273, %150, %cst_119 {dimension_numbers = #tpu.dot_dimension_numbers<[1], [1], [0], [0], [0, 0, 1, 0], [], []>} : vector<16x64xf32>, vector<32x64xf32>, vector<16x32xf32> -> vector<16x32xf32>
    %275 = vector.broadcast %154 : vector<1x32xf32> to vector<16x32xf32>
    %276 = arith.addf %274, %275 : vector<16x32xf32>
    %277 = arith.addf %246, %276 : vector<16x32xf32>
    %c16 = arith.constant 16 : index
    %c0_120 = arith.constant 0 : index
    %278 = vector.load %arg4[%c16, %c0_120] : memref<18x64xf32, #tpu.memory_space<vmem>>, vector<1x32xf32>
    %c17 = arith.constant 17 : index
    %c0_121 = arith.constant 0 : index
    %279 = vector.load %arg4[%c17, %c0_121] : memref<18x64xf32, #tpu.memory_space<vmem>>, vector<1x32xf32>
    %cst_122 = arith.constant dense<0.000000e+00> : vector<16xf32>
    %280 = vector.multi_reduction <add>, %277, %cst_122 [1] : vector<16x32xf32> to vector<16xf32>
    %281 = vector.shape_cast %280 : vector<16xf32> to vector<16x1xf32>
    %cst_123 = arith.constant 3.200000e+01 : f32
    %282 = vector.broadcast %cst_123 : f32 to vector<16x1xf32>
    %283 = arith.divf %281, %282 : vector<16x1xf32>
    %284 = vector.broadcast %283 : vector<16x1xf32> to vector<16x32xf32>
    %285 = arith.subf %277, %284 : vector<16x32xf32>
    %286 = arith.mulf %285, %285 : vector<16x32xf32>
    %cst_124 = arith.constant dense<0.000000e+00> : vector<16xf32>
    %287 = vector.multi_reduction <add>, %286, %cst_124 [1] : vector<16x32xf32> to vector<16xf32>
    %288 = vector.shape_cast %287 : vector<16xf32> to vector<16x1xf32>
    %cst_125 = arith.constant 3.200000e+01 : f32
    %289 = vector.broadcast %cst_125 : f32 to vector<16x1xf32>
    %290 = arith.divf %288, %289 : vector<16x1xf32>
    %291 = vector.broadcast %283 : vector<16x1xf32> to vector<16x32xf32>
    %292 = arith.subf %277, %291 : vector<16x32xf32>
    %cst_126 = arith.constant 9.99999974E-6 : f32
    %293 = vector.broadcast %cst_126 : f32 to vector<16x1xf32>
    %294 = arith.addf %290, %293 : vector<16x1xf32>
    %295 = math.rsqrt %294 : vector<16x1xf32>
    %296 = vector.broadcast %295 : vector<16x1xf32> to vector<16x32xf32>
    %297 = arith.mulf %292, %296 : vector<16x32xf32>
    %298 = vector.broadcast %278 : vector<1x32xf32> to vector<16x32xf32>
    %299 = arith.mulf %297, %298 : vector<16x32xf32>
    %300 = vector.broadcast %279 : vector<1x32xf32> to vector<16x32xf32>
    %301 = arith.addf %299, %300 : vector<16x32xf32>
    %c0_127 = arith.constant 0 : index
    %c0_128 = arith.constant 0 : index
    %302 = vector.load %arg5[%c0_127, %c0_128] : memref<16x32xf32, #tpu.memory_space<vmem>>, vector<16x32xf32>
    tpu.vector_store %arg5[%c0_127, %c0_128], %301 {strides = array<i32>} : memref<16x32xf32, #tpu.memory_space<vmem>>, vector<16x32xf32>,
    return
  }
}

</mosaic_0001>

<llo_original>
// kernel: encoder_forward.1
$region0: #{encoder_forward.1}
  #allocation0 [shape = 'u32[]', space=smem, size = 0x4, offset = 0x4, fixed_abs, tag = 'smem constant byte address 0x4 - core index']
  #allocation1 [shape = 'u32[144,128]{1,0:T(1,128)}', space=vmem, size = 0x12000, scoped, tag = 'internal scratch']
  %s0 = inlined_call_operand.vmem [shape: f32[2,16,32], index: 0, kind: input, shape index: {}]
  %s1 = inlined_call_operand.vmem [shape: f32[16,16], index: 1, kind: input, shape index: {}]
  %s2 = inlined_call_operand.vmem [shape: f32[2,2,32,32], index: 2, kind: input, shape index: {}]
  %s3 = inlined_call_operand.hbm [shape: f32[2,2,32,64], index: 3, kind: input, shape index: {}]
  %s4 = inlined_call_operand.vmem [shape: f32[18,64], index: 4, kind: input, shape index: {}]
  %s5 = inlined_call_operand.hbm [shape: f32[16,32], index: 5, kind: output, shape index: {}]
  %s6 = sld [smem:[#allocation0]]
  $region34: #{encoder_forward.1} parent=0
    _
  %s8 = ssub.s32 1, %s6
  %s9 = scalar_select 0, %s8, %s6
  $region1: #{encoder_forward.1} parent=0
    #allocation2 [shape = 'u8[65536]{0}', space=vmem, size = 0x10000, scoped, tag = 'input window, operand 3, single buffered']
    #allocation3 [shape = 's32[1]{0}', space=sflag, size = 0x4, scoped, tag = 'scoped memory for encoder_forward.1']
    #allocation4 [shape = 's32[1]{0}', space=sflag, size = 0x4, scoped, tag = 'scoped memory for encoder_forward.1']
    #allocation5 [shape = 'u8[8192]{0}', space=vmem, size = 0x2000, scoped, tag = 'output window, operand 0, single buffered']
    %10 = vsyncpa [#allocation3], 0
    %11 = vsyncpa [#allocation4], 0
    // Predicated region
    $region2: #{encoder_forward.1} parent=1 // pred_check
      _
    $region3: #{encoder_forward.1} parent=1 // pred_check_branch
      %13 = sbr.rel (0) target = $region5
    $region4: #{encoder_forward.1} parent=1 // pred_region
      _
    $region5: #{encoder_forward.1} parent=1 // pred_fallthru
      _
    // Predicated region
    $region6: #{encoder_forward.1} parent=1 // pred_check
      _
    $region7: #{encoder_forward.1} parent=1 // pred_check_branch
      %15 = sbr.rel (0) target = $region9
    $region8: #{encoder_forward.1} parent=1 // pred_region
      _
    $region9: #{encoder_forward.1} parent=1 // pred_fallthru
      _
    // Predicated region
    $region10: #{encoder_forward.1} parent=1 // pred_check
      _
    $region11: #{encoder_forward.1} parent=1 // pred_check_branch
      %17 = sbr.rel (0) target = $region13
    $region12: #{encoder_forward.1} parent=1 // pred_region
      _
    $region13: #{encoder_forward.1} parent=1 // pred_fallthru
      _
    // Predicated region
    $region14: #{encoder_forward.1} parent=1 // pred_check
      _
    $region15: #{encoder_forward.1} parent=1 // pred_check_branch
      %19 = sbr.rel (0) target = $region17
    $region16: #{encoder_forward.1} parent=1 // pred_region
      %s21 = ssub.s32 2048, 2048
      %22 = vsyncadd [#allocation3], %s21
      %s23 = sshll.u32 [#allocation2], 4
      %s24 = int_to_ptr.vmem [resolvable:$true] %s23
      %29 = dma.hbm_to_vmem [thread:$0]  %s3, 2048, %s24, [#allocation3], 128, 128, 8
    $region17: #{encoder_forward.1} parent=1 // pred_fallthru
      _
    // Predicated region
    $region18: #{encoder_forward.1} parent=1 // pred_check
      _
    $region19: #{encoder_forward.1} parent=1 // pred_check_branch
      %31 = sbr.rel (0) target = $region21
    $region20: #{encoder_forward.1} parent=1 // pred_region
      _
    $region21: #{encoder_forward.1} parent=1 // pred_fallthru
      _
    // Predicated region
    $region22: #{encoder_forward.1} parent=1 // pred_check
      _
    $region23: #{encoder_forward.1} parent=1 // pred_check_branch
      %33 = sbr.rel (0) target = $region25
    $region24: #{encoder_forward.1} parent=1 // pred_region
      %34 = dma.done [#allocation3], 2048
    $region25: #{encoder_forward.1} parent=1 // pred_fallthru
      _
    %v35 = vld [vmem:[%s0] sm:$0xff]
    %v36 = vld [vmem:[%s0 + $0x8] sm:$0xff]
    %v37 = vmul.f32 %v35, 5.656854
    %v38 = vmul.f32 %v36, 5.656854
    %s39 = scalar_lea.vmem %s0, 16
    %v40 = vld [vmem:[%s39] sm:$0xff]
    %v41 = vld [vmem:[%s39 + $0x8] sm:$0xff]
    %v42 = vadd.f32 %v37, %v40
    %v43 = vadd.f32 %v38, %v41
    %v44 = vld [vmem:[%s1] sm:$0xff]
    %v45 = vld [vmem:[%s1 + $0x8] sm:$0xff]
    %v46 = vld [vmem:[%s2] sm:$0xff]
    %v47 = vld [vmem:[%s2 + $0x8] sm:$0xff]
    %v48 = vld [vmem:[%s2 + $0x10] sm:$0xff]
    %v49 = vld [vmem:[%s2 + $0x18] sm:$0xff]
    %s50 = scalar_lea.vmem %s2, 32
    %v51 = vld [vmem:[%s50] sm:$0xff]
    %v52 = vld [vmem:[%s50 + $0x8] sm:$0xff]
    %v53 = vld [vmem:[%s50 + $0x10] sm:$0xff]
    %v54 = vld [vmem:[%s50 + $0x18] sm:$0xff]
    %v55 = vld [vmem:[#allocation2] sm:$0xff]
    %v56 = vld [vmem:[#allocation2 + $0x8] sm:$0xff]
    %v57 = vld [vmem:[#allocation2 + $0x10] sm:$0xff]
    %v58 = vld [vmem:[#allocation2 + $0x18] sm:$0xff]
    %s59 = scalar_lea.vmem [#allocation2], 32
    %v60 = vld [vmem:[%s59] sm:$0xff]
    %v61 = vld [vmem:[%s59 + $0x8] sm:$0xff]
    %v62 = vld [vmem:[%s59 + $0x10] sm:$0xff]
    %v63 = vld [vmem:[%s59 + $0x18] sm:$0xff]
    %v64 = vld [vmem:[%s4] sm:$0x1]
    %v65 = vld [vmem:[%s4 + $0x1] sm:$0x1]
    %v66 = vld [vmem:[%s4 + $0x2] sm:$0x1]
    %v67 = vld [vmem:[%s4 + $0x3] sm:$0x1]
    %v68 = vld [vmem:[%s4 + $0x4] sm:$0x1]
    %v69 = vld [vmem:[%s4 + $0x5] sm:$0x1]
    %v70 = vld [vmem:[%s4 + $0x6] sm:$0x1]
    %v71 = vld [vmem:[%s4 + $0x7] sm:$0x1]
    %vm72 = vcmask 261120
    %v73 = vsel %vm72, %v42, 0.0
    %74 = vadd.xlane.f32.xlu0 %v73
    %v75 = vpop.xlane.xlu0 %74
    %v76 = vsel %vm72, %v43, 0.0
    %77 = vadd.xlane.f32.xlu0 %v76
    %v78 = vpop.xlane.xlu0 %77
    %v79 = vrcp.pop 32.0
    %v80 = vmul.f32 %v75, %v79
    %v81 = vmul.f32 %v78, %v79
    %v82 = vsub.f32 %v42, %v80
    %v83 = vsub.f32 %v43, %v81
    %v84 = vmul.f32 %v82, %v82
    %v85 = vmul.f32 %v83, %v83
    %v86 = vsel %vm72, %v84, 0.0
    %87 = vadd.xlane.f32.xlu0 %v86
    %v88 = vpop.xlane.xlu0 %87
    %v89 = vsel %vm72, %v85, 0.0
    %90 = vadd.xlane.f32.xlu0 %v89
    %v91 = vpop.xlane.xlu0 %90
    %v92 = vmul.f32 %v88, %v79
    %v93 = vmul.f32 %v91, %v79
    %v94 = vadd.f32 %v92, 1e-05
    %v95 = vadd.f32 %v93, 1e-05
    %v96 = vrsqrt.pop %v94
    %v97 = vrsqrt.pop %v95
    %v98 = vmul.f32 %v82, %v96
    %v99 = vmul.f32 %v83, %v97
    %v100 = vlaneseq
    %v101 = vshrl.u32 %v100, 7
    %v102 = vsub.s32 0, %v101
    %v103 = vrot.slane %v68, %v102
    %v104 = vmul.f32 %v98, %v103
    %v105 = vmul.f32 %v99, %v103
    %v106 = vlaneseq
    %v107 = vshrl.u32 %v106, 7
    %v108 = vsub.s32 0, %v107
    %v109 = vrot.slane %v69, %v108
    %v110 = vadd.f32 %v104, %v109
    %v111 = vadd.f32 %v105, %v109
    %v112 = vlaneseq
    %v113 = vshrl.u32 %v112, 7
    %v114 = vsub.s32 0, %v113
    %v115 = vrot.slane %v64, %v114
    %v117 = vsel %vm72, %v110, 0
    %v120 = vsel %vm72, %v111, 0
    %122 = vmatprep.subr.mxu0 0.0
    %123 = vmatpush1.msra.mxu0 %v46
    %124 = vmatprep.subr.mxu0 0.0
    %125 = vmatpush1.msra.mxu0 %v47
    %126 = vmatprep.subr.mxu0 0.0
    %127 = vmatpush1.msra.mxu0 %v48
    %128 = vmatprep.subr.mxu0 0.0
    %129 = vmatpush1.msra.mxu0 %v49
    %130 = vmatprep.subr.mxu0 0.0
    %131 = vmatpush1.msra.mxu0 0.0
    %132 = vmatprep.subr.mxu0 0.0
    %133 = vmatpush1.msra.mxu0 0.0
    %134 = vmatprep.subr.mxu0 0.0
    %135 = vmatpush1.msra.mxu0 0.0
    %136 = vmatprep.subr.mxu0 0.0
    %137 = vmatpush1.msra.mxu0 0.0
    %138 = vmatprep.subr.mxu0 0.0
    %139 = vmatpush1.msra.mxu0 0.0
    %140 = vmatprep.subr.mxu0 0.0
    %141 = vmatpush1.msra.mxu0 0.0
    %142 = vmatprep.subr.mxu0 0.0
    %143 = vmatpush1.msra.mxu0 0.0
    %144 = vmatprep.subr.mxu0 0.0
    %145 = vmatpush1.msra.mxu0 0.0
    %146 = vmatprep.subr.mxu0 0.0
    %147 = vmatpush1.msra.mxu0 0.0
    %148 = vmatprep.subr.mxu0 0.0
    %149 = vmatpush1.msra.mxu0 0.0
    %150 = vmatprep.subr.mxu0 0.0
    %151 = vmatpush1.msra.mxu0 0.0
    %152 = vmatprep.subr.mxu0 0.0
    %153 = vmatpush1.msra.mxu0 0.0
    %154 = vmatprep.subr.mxu0 0.0
    %155 = vmatpush1.msra.mxu0 0.0
    %156 = vmatprep.subr.mxu0 0.0
    %157 = vmatpush1.msra.mxu0 0.0
    %158 = vmatprep.subr.mxu0 0.0
    %159 = vmatpush1.msra.mxu0 0.0
    %160 = vmatprep.subr.mxu0 0.0
    %161 = vmatpush1.msra.mxu0 0.0
    %162 = vmatprep.subr.mxu0 0.0
    %163 = vmatpush1.msra.mxu0 0.0
    %164 = vmatprep.subr.mxu0 0.0
    %165 = vmatpush1.msra.mxu0 0.0
    %166 = vmatprep.subr.mxu0 0.0
    %167 = vmatpush1.msra.mxu0 0.0
    %168 = vmatprep.subr.mxu0 0.0
    %169 = vmatpush1.msra.mxu0 0.0
    %170 = vmatprep.subr.mxu0 0.0
    %171 = vmatpush1.msra.mxu0 0.0
    %172 = vmatprep.subr.mxu0 0.0
    %173 = vmatpush1.msra.mxu0 0.0
    %174 = vmatprep.subr.mxu0 0.0
    %175 = vmatpush1.msra.mxu0 0.0
    %176 = vmatprep.subr.mxu0 0.0
    %177 = vmatpush1.msra.mxu0 0.0
    %178 = vmatprep.subr.mxu0 0.0
    %179 = vmatpush1.msra.mxu0 0.0
    %180 = vmatprep.subr.mxu0 0.0
    %181 = vmatpush1.msra.mxu0 0.0
    %182 = vmatprep.subr.mxu0 0.0
    %183 = vmatpush1.msra.mxu0 0.0
    %184 = vmatprep.subr.mxu0 0.0
    %185 = vmatpush1.msra.mxu0 0.0
    %186 = vmatprep.mubr.f32.mxu0 0.0
    %187 = vmatmul.mubr.f32.gmra.mrb[0].mxu0 %v117
    %v188 = vpop.f32.mrb[0].mxu0
    %v189 = vadd.f32 %v115, %v188
    %v190 = vpop.f32.mrb[0].mxu0
    %191 = vmatprep.mubr.f32.mxu0 0.0
    %192 = vmatmul.mubr.f32.gmra.mrb[0].mxu0 %v120
    %v193 = vpop.f32.mrb[0].mxu0
    %v194 = vadd.f32 %v115, %v193
    %v195 = vpop.f32.mrb[0].mxu0
    %196 = vdwg.mxu0
    %v197 = vmul.f32 %v189, 0.35355338
    %v198 = vmul.f32 %v194, 0.35355338
    %vm199 = vcmask 64512
    %v201 = vsel %vm199, %v197, 0
    %v204 = vsel %vm199, %v198, 0
    %v207 = vsel %vm199, %v189, 0
    %v210 = vsel %vm199, %v194, 0
    %212 = vmatprep.subr.mxu0 0.0
    %213 = vmatpush1.xpose.msra.mxu0 %v207
    %214 = vmatprep.subr.mxu0 0.0
    %215 = vmatpush1.xpose.msra.mxu0 %v210
    %216 = vmatprep.subr.mxu0 0.0
    %217 = vmatpush1.xpose.msra.mxu0 0.0
    %218 = vmatprep.subr.mxu0 0.0
    %219 = vmatpush1.xpose.msra.mxu0 0.0
    %220 = vmatprep.subr.mxu0 0.0
    %221 = vmatpush1.xpose.msra.mxu0 0.0
    %222 = vmatprep.subr.mxu0 0.0
    %223 = vmatpush1.xpose.msra.mxu0 0.0
    %224 = vmatprep.subr.mxu0 0.0
    %225 = vmatpush1.xpose.msra.mxu0 0.0
    %226 = vmatprep.subr.mxu0 0.0
    %227 = vmatpush1.xpose.msra.mxu0 0.0
    %228 = vmatprep.subr.mxu0 0.0
    %229 = vmatpush1.xpose.msra.mxu0 0.0
    %230 = vmatprep.subr.mxu0 0.0
    %231 = vmatpush1.xpose.msra.mxu0 0.0
    %232 = vmatprep.subr.mxu0 0.0
    %233 = vmatpush1.xpose.msra.mxu0 0.0
    %234 = vmatprep.subr.mxu0 0.0
    %235 = vmatpush1.xpose.msra.mxu0 0.0
    %236 = vmatprep.subr.mxu0 0.0
    %237 = vmatpush1.xpose.msra.mxu0 0.0
    %238 = vmatprep.subr.mxu0 0.0
    %239 = vmatpush1.xpose.msra.mxu0 0.0
    %240 = vmatprep.subr.mxu0 0.0
    %241 = vmatpush1.xpose.msra.mxu0 0.0
    %242 = vmatprep.subr.mxu0 0.0
    %243 = vmatpush1.xpose.msra.mxu0 0.0
    %244 = vmatprep.subr.mxu0 0.0
    %245 = vmatpush1.xpose.msra.mxu0 0.0
    %246 = vmatprep.subr.mxu0 0.0
    %247 = vmatpush1.xpose.msra.mxu0 0.0
    %248 = vmatprep.subr.mxu0 0.0
    %249 = vmatpush1.xpose.msra.mxu0 0.0
    %250 = vmatprep.subr.mxu0 0.0
    %251 = vmatpush1.xpose.msra.mxu0 0.0
    %252 = vmatprep.subr.mxu0 0.0
    %253 = vmatpush1.xpose.msra.mxu0 0.0
    %254 = vmatprep.subr.mxu0 0.0
    %255 = vmatpush1.xpose.msra.mxu0 0.0
    %256 = vmatprep.subr.mxu0 0.0
    %257 = vmatpush1.xpose.msra.mxu0 0.0
    %258 = vmatprep.subr.mxu0 0.0
    %259 = vmatpush1.xpose.msra.mxu0 0.0
    %260 = vmatprep.subr.mxu0 0.0
    %261 = vmatpush1.xpose.msra.mxu0 0.0
    %262 = vmatprep.subr.mxu0 0.0
    %263 = vmatpush1.xpose.msra.mxu0 0.0
    %264 = vmatprep.subr.mxu0 0.0
    %265 = vmatpush1.xpose.msra.mxu0 0.0
    %266 = vmatprep.subr.mxu0 0.0
    %267 = vmatpush1.xpose.msra.mxu0 0.0
    %268 = vmatprep.subr.mxu0 0.0
    %269 = vmatpush1.xpose.msra.mxu0 0.0
    %270 = vmatprep.subr.mxu0 0.0
    %271 = vmatpush1.xpose.msra.mxu0 0.0
    %272 = vmatprep.subr.mxu0 0.0
    %273 = vmatpush1.xpose.msra.mxu0 0.0
    %274 = vmatprep.subr.mxu0 0.0
    %275 = vmatpush1.xpose.msra.mxu0 0.0
    %276 = vmatprep.mubr.f32.mxu0 0.0
    %277 = vmatmul.mubr.f32.gmra.mrb[0].mxu0 %v201
    %v278 = vpop.f32.mrb[0].mxu0
    %v279 = vadd.f32 %v44, %v278
    %v280 = vpop.f32.mrb[0].mxu0
    %281 = vmatprep.mubr.f32.mxu0 0.0
    %282 = vmatmul.mubr.f32.gmra.mrb[0].mxu0 %v204
    %v283 = vpop.f32.mrb[0].mxu0
    %v284 = vadd.f32 %v45, %v283
    %v285 = vpop.f32.mrb[0].mxu0
    %286 = vdwg.mxu0
    %vm287 = vcmask 130048
    %v288 = vsel %vm287, %v279, -inf
    %289 = vmax.xlane.f32.xlu0 %v288
    %v290 = vpop.xlane.xlu0 %289
    %v291 = vsel %vm287, %v284, -inf
    %292 = vmax.xlane.f32.xlu0 %v291
    %v293 = vpop.xlane.xlu0 %292
    %v294 = vsub.f32 %v279, %v290
    %v295 = vsub.f32 %v284, %v293
    %v296 = vmul.f32 %v294, 1.442695
    %v297 = vpow.pop %v296
    %v298 = vmul.f32 %v295, 1.442695
    %v299 = vpow.pop %v298
    %v300 = vsel %vm287, %v297, 0.0
    %301 = vadd.xlane.f32.xlu0 %v300
    %v302 = vpop.xlane.xlu0 %301
    %v303 = vsel %vm287, %v299, 0.0
    %304 = vadd.xlane.f32.xlu0 %v303
    %v305 = vpop.xlane.xlu0 %304
    %v306 = vrcp.pop %v302
    %v307 = vmul.f32 %v297, %v306
    %v308 = vrcp.pop %v305
    %v309 = vmul.f32 %v299, %v308
    %v311 = vsel %vm287, %v307, 0
    %v314 = vsel %vm287, %v309, 0
    %316 = vmatprep.subr.mxu0 0.0
    %317 = vmatpush1.msra.mxu0 %v189
    %318 = vmatprep.subr.mxu0 0.0
    %319 = vmatpush1.msra.mxu0 %v194
    %320 = vmatprep.subr.mxu0 0.0
    %321 = vmatpush1.msra.mxu0 0.0
    %322 = vmatprep.subr.mxu0 0.0
    %323 = vmatpush1.msra.mxu0 0.0
    %324 = vmatprep.subr.mxu0 0.0
    %325 = vmatpush1.msra.mxu0 0.0
    %326 = vmatprep.subr.mxu0 0.0
    %327 = vmatpush1.msra.mxu0 0.0
    %328 = vmatprep.subr.mxu0 0.0
    %329 = vmatpush1.msra.mxu0 0.0
    %330 = vmatprep.subr.mxu0 0.0
    %331 = vmatpush1.msra.mxu0 0.0
    %332 = vmatprep.subr.mxu0 0.0
    %333 = vmatpush1.msra.mxu0 0.0
    %334 = vmatprep.subr.mxu0 0.0
    %335 = vmatpush1.msra.mxu0 0.0
    %336 = vmatprep.subr.mxu0 0.0
    %337 = vmatpush1.msra.mxu0 0.0
    %338 = vmatprep.subr.mxu0 0.0
    %339 = vmatpush1.msra.mxu0 0.0
    %340 = vmatprep.subr.mxu0 0.0
    %341 = vmatpush1.msra.mxu0 0.0
    %342 = vmatprep.subr.mxu0 0.0
    %343 = vmatpush1.msra.mxu0 0.0
    %344 = vmatprep.subr.mxu0 0.0
    %345 = vmatpush1.msra.mxu0 0.0
    %346 = vmatprep.subr.mxu0 0.0
    %347 = vmatpush1.msra.mxu0 0.0
    %348 = vmatprep.subr.mxu0 0.0
    %349 = vmatpush1.msra.mxu0 0.0
    %350 = vmatprep.subr.mxu0 0.0
    %351 = vmatpush1.msra.mxu0 0.0
    %352 = vmatprep.subr.mxu0 0.0
    %353 = vmatpush1.msra.mxu0 0.0
    %354 = vmatprep.subr.mxu0 0.0
    %355 = vmatpush1.msra.mxu0 0.0
    %356 = vmatprep.subr.mxu0 0.0
    %357 = vmatpush1.msra.mxu0 0.0
    %358 = vmatprep.subr.mxu0 0.0
    %359 = vmatpush1.msra.mxu0 0.0
    %360 = vmatprep.subr.mxu0 0.0
    %361 = vmatpush1.msra.mxu0 0.0
    %362 = vmatprep.subr.mxu0 0.0
    %363 = vmatpush1.msra.mxu0 0.0
    %364 = vmatprep.subr.mxu0 0.0
    %365 = vmatpush1.msra.mxu0 0.0
    %366 = vmatprep.subr.mxu0 0.0
    %367 = vmatpush1.msra.mxu0 0.0
    %368 = vmatprep.subr.mxu0 0.0
    %369 = vmatpush1.msra.mxu0 0.0
    %370 = vmatprep.subr.mxu0 0.0
    %371 = vmatpush1.msra.mxu0 0.0
    %372 = vmatprep.subr.mxu0 0.0
    %373 = vmatpush1.msra.mxu0 0.0
    %374 = vmatprep.subr.mxu0 0.0
    %375 = vmatpush1.msra.mxu0 0.0
    %376 = vmatprep.subr.mxu0 0.0
    %377 = vmatpush1.msra.mxu0 0.0
    %378 = vmatprep.subr.mxu0 0.0
    %379 = vmatpush1.msra.mxu0 0.0
    %380 = vmatprep.mubr.f32.mxu0 0.0
    %381 = vmatmul.mubr.f32.gmra.mrb[0].mxu0 %v311
    %v382 = vpop.f32.mrb[0].mxu0
    %v383 = vadd.f32 0.0, %v382
    %v384 = vpop.f32.mrb[0].mxu0
    %385 = vmatprep.mubr.f32.mxu0 0.0
    %386 = vmatmul.mubr.f32.gmra.mrb[0].mxu0 %v314
    %v387 = vpop.f32.mrb[0].mxu0
    %v388 = vadd.f32 0.0, %v387
    %v389 = vpop.f32.mrb[0].mxu0
    %390 = vdwg.mxu0
    %391 = vrot.lane.b32.xlu0 %v197, 120
    %v392 = vpop.permute.xlu0 %391
    %393 = vrot.lane.b32.xlu0 %v198, 120
    %v394 = vpop.permute.xlu0 %393
    %395 = vrot.lane.b32.xlu0 %v189, 120
    %v396 = vpop.permute.xlu0 %395
    %397 = vrot.lane.b32.xlu0 %v194, 120
    %v398 = vpop.permute.xlu0 %397
    %v399 = vsel %vm199, %v392, 0
    %v401 = vsel %vm199, %v394, 0
    %v403 = vsel %vm199, %v396, 0
    %v405 = vsel %vm199, %v398, 0
    %407 = vmatprep.subr.mxu0 0.0
    %408 = vmatpush1.xpose.msra.mxu0 %v403
    %409 = vmatprep.subr.mxu0 0.0
    %410 = vmatpush1.xpose.msra.mxu0 %v405
    %411 = vmatprep.subr.mxu0 0.0
    %412 = vmatpush1.xpose.msra.mxu0 0.0
    %413 = vmatprep.subr.mxu0 0.0
    %414 = vmatpush1.xpose.msra.mxu0 0.0
    %415 = vmatprep.subr.mxu0 0.0
    %416 = vmatpush1.xpose.msra.mxu0 0.0
    %417 = vmatprep.subr.mxu0 0.0
    %418 = vmatpush1.xpose.msra.mxu0 0.0
    %419 = vmatprep.subr.mxu0 0.0
    %420 = vmatpush1.xpose.msra.mxu0 0.0
    %421 = vmatprep.subr.mxu0 0.0
    %422 = vmatpush1.xpose.msra.mxu0 0.0
    %423 = vmatprep.subr.mxu0 0.0
    %424 = vmatpush1.xpose.msra.mxu0 0.0
    %425 = vmatprep.subr.mxu0 0.0
    %426 = vmatpush1.xpose.msra.mxu0 0.0
    %427 = vmatprep.subr.mxu0 0.0
    %428 = vmatpush1.xpose.msra.mxu0 0.0
    %429 = vmatprep.subr.mxu0 0.0
    %430 = vmatpush1.xpose.msra.mxu0 0.0
    %431 = vmatprep.subr.mxu0 0.0
    %432 = vmatpush1.xpose.msra.mxu0 0.0
    %433 = vmatprep.subr.mxu0 0.0
    %434 = vmatpush1.xpose.msra.mxu0 0.0
    %435 = vmatprep.subr.mxu0 0.0
    %436 = vmatpush1.xpose.msra.mxu0 0.0
    %437 = vmatprep.subr.mxu0 0.0
    %438 = vmatpush1.xpose.msra.mxu0 0.0
    %439 = vmatprep.subr.mxu0 0.0
    %440 = vmatpush1.xpose.msra.mxu0 0.0
    %441 = vmatprep.subr.mxu0 0.0
    %442 = vmatpush1.xpose.msra.mxu0 0.0
    %443 = vmatprep.subr.mxu0 0.0
    %444 = vmatpush1.xpose.msra.mxu0 0.0
    %445 = vmatprep.subr.mxu0 0.0
    %446 = vmatpush1.xpose.msra.mxu0 0.0
    %447 = vmatprep.subr.mxu0 0.0
    %448 = vmatpush1.xpose.msra.mxu0 0.0
    %449 = vmatprep.subr.mxu0 0.0
    %450 = vmatpush1.xpose.msra.mxu0 0.0
    %451 = vmatprep.subr.mxu0 0.0
    %452 = vmatpush1.xpose.msra.mxu0 0.0
    %453 = vmatprep.subr.mxu0 0.0
    %454 = vmatpush1.xpose.msra.mxu0 0.0
    %455 = vmatprep.subr.mxu0 0.0
    %456 = vmatpush1.xpose.msra.mxu0 0.0
    %457 = vmatprep.subr.mxu0 0.0
    %458 = vmatpush1.xpose.msra.mxu0 0.0
    %459 = vmatprep.subr.mxu0 0.0
    %460 = vmatpush1.xpose.msra.mxu0 0.0
    %461 = vmatprep.subr.mxu0 0.0
    %462 = vmatpush1.xpose.msra.mxu0 0.0
    %463 = vmatprep.subr.mxu0 0.0
    %464 = vmatpush1.xpose.msra.mxu0 0.0
    %465 = vmatprep.subr.mxu0 0.0
    %466 = vmatpush1.xpose.msra.mxu0 0.0
    %467 = vmatprep.subr.mxu0 0.0
    %468 = vmatpush1.xpose.msra.mxu0 0.0
    %469 = vmatprep.subr.mxu0 0.0
    %470 = vmatpush1.xpose.msra.mxu0 0.0
    %471 = vmatprep.mubr.f32.mxu0 0.0
    %472 = vmatmul.mubr.f32.gmra.mrb[0].mxu0 %v399
    %v473 = vpop.f32.mrb[0].mxu0
    %v474 = vadd.f32 %v44, %v473
    %v475 = vpop.f32.mrb[0].mxu0
    %476 = vmatprep.mubr.f32.mxu0 0.0
    %477 = vmatmul.mubr.f32.gmra.mrb[0].mxu0 %v401
    %v478 = vpop.f32.mrb[0].mxu0
    %v479 = vadd.f32 %v45, %v478
    %v480 = vpop.f32.mrb[0].mxu0
    %481 = vdwg.mxu0
    %v482 = vsel %vm287, %v474, -inf
    %483 = vmax.xlane.f32.xlu0 %v482
    %v484 = vpop.xlane.xlu0 %483
    %v485 = vsel %vm287, %v479, -inf
    %486 = vmax.xlane.f32.xlu0 %v485
    %v487 = vpop.xlane.xlu0 %486
    %v488 = vsub.f32 %v474, %v484
    %v489 = vsub.f32 %v479, %v487
    %v490 = vmul.f32 %v488, 1.442695
    %v491 = vpow.pop %v490
    %v492 = vmul.f32 %v489, 1.442695
    %v493 = vpow.pop %v492
    %v494 = vsel %vm287, %v491, 0.0
    %495 = vadd.xlane.f32.xlu0 %v494
    %v496 = vpop.xlane.xlu0 %495
    %v497 = vsel %vm287, %v493, 0.0
    %498 = vadd.xlane.f32.xlu0 %v497
    %v499 = vpop.xlane.xlu0 %498
    %v500 = vrcp.pop %v496
    %v501 = vmul.f32 %v491, %v500
    %v502 = vrcp.pop %v499
    %v503 = vmul.f32 %v493, %v502
    %v507 = vsel %vm287, %v501, 0
    %v510 = vsel %vm287, %v503, 0
    %512 = vmatprep.subr.mxu0 0.0
    %513 = vmatpush1.msra.mxu0 %v396
    %514 = vmatprep.subr.mxu0 0.0
    %515 = vmatpush1.msra.mxu0 %v398
    %516 = vmatprep.subr.mxu0 0.0
    %517 = vmatpush1.msra.mxu0 0.0
    %518 = vmatprep.subr.mxu0 0.0
    %519 = vmatpush1.msra.mxu0 0.0
    %520 = vmatprep.subr.mxu0 0.0
    %521 = vmatpush1.msra.mxu0 0.0
    %522 = vmatprep.subr.mxu0 0.0
    %523 = vmatpush1.msra.mxu0 0.0
    %524 = vmatprep.subr.mxu0 0.0
    %525 = vmatpush1.msra.mxu0 0.0
    %526 = vmatprep.subr.mxu0 0.0
    %527 = vmatpush1.msra.mxu0 0.0
    %528 = vmatprep.subr.mxu0 0.0
    %529 = vmatpush1.msra.mxu0 0.0
    %530 = vmatprep.subr.mxu0 0.0
    %531 = vmatpush1.msra.mxu0 0.0
    %532 = vmatprep.subr.mxu0 0.0
    %533 = vmatpush1.msra.mxu0 0.0
    %534 = vmatprep.subr.mxu0 0.0
    %535 = vmatpush1.msra.mxu0 0.0
    %536 = vmatprep.subr.mxu0 0.0
    %537 = vmatpush1.msra.mxu0 0.0
    %538 = vmatprep.subr.mxu0 0.0
    %539 = vmatpush1.msra.mxu0 0.0
    %540 = vmatprep.subr.mxu0 0.0
    %541 = vmatpush1.msra.mxu0 0.0
    %542 = vmatprep.subr.mxu0 0.0
    %543 = vmatpush1.msra.mxu0 0.0
    %544 = vmatprep.subr.mxu0 0.0
    %545 = vmatpush1.msra.mxu0 0.0
    %546 = vmatprep.subr.mxu0 0.0
    %547 = vmatpush1.msra.mxu0 0.0
    %548 = vmatprep.subr.mxu0 0.0
    %549 = vmatpush1.msra.mxu0 0.0
    %550 = vmatprep.subr.mxu0 0.0
    %551 = vmatpush1.msra.mxu0 0.0
    %552 = vmatprep.subr.mxu0 0.0
    %553 = vmatpush1.msra.mxu0 0.0
    %554 = vmatprep.subr.mxu0 0.0
    %555 = vmatpush1.msra.mxu0 0.0
    %556 = vmatprep.subr.mxu0 0.0
    %557 = vmatpush1.msra.mxu0 0.0
    %558 = vmatprep.subr.mxu0 0.0
    %559 = vmatpush1.msra.mxu0 0.0
    %560 = vmatprep.subr.mxu0 0.0
    %561 = vmatpush1.msra.mxu0 0.0
    %562 = vmatprep.subr.mxu0 0.0
    %563 = vmatpush1.msra.mxu0 0.0
    %564 = vmatprep.subr.mxu0 0.0
    %565 = vmatpush1.msra.mxu0 0.0
    %566 = vmatprep.subr.mxu0 0.0
    %567 = vmatpush1.msra.mxu0 0.0
    %568 = vmatprep.subr.mxu0 0.0
    %569 = vmatpush1.msra.mxu0 0.0
    %570 = vmatprep.subr.mxu0 0.0
    %571 = vmatpush1.msra.mxu0 0.0
    %572 = vmatprep.subr.mxu0 0.0
    %573 = vmatpush1.msra.mxu0 0.0
    %574 = vmatprep.subr.mxu0 0.0
    %575 = vmatpush1.msra.mxu0 0.0
    %576 = vmatprep.mubr.f32.mxu0 0.0
    %577 = vmatmul.mubr.f32.gmra.mrb[0].mxu0 %v507
    %v578 = vpop.f32.mrb[0].mxu0
    %v579 = vadd.f32 0.0, %v578
    %v580 = vpop.f32.mrb[0].mxu0
    %581 = vmatprep.mubr.f32.mxu0 0.0
    %582 = vmatmul.mubr.f32.gmra.mrb[0].mxu0 %v510
    %v583 = vpop.f32.mrb[0].mxu0
    %v584 = vadd.f32 0.0, %v583
    %v585 = vpop.f32.mrb[0].mxu0
    %586 = vdwg.mxu0
    %587 = vrot.lane.b32.xlu0 %v197, 112
    %v588 = vpop.permute.xlu0 %587
    %589 = vrot.lane.b32.xlu0 %v198, 112
    %v590 = vpop.permute.xlu0 %589
    %591 = vrot.lane.b32.xlu0 %v189, 112
    %v592 = vpop.permute.xlu0 %591
    %593 = vrot.lane.b32.xlu0 %v194, 112
    %v594 = vpop.permute.xlu0 %593
    %v595 = vsel %vm199, %v588, 0
    %v597 = vsel %vm199, %v590, 0
    %v599 = vsel %vm199, %v592, 0
    %v601 = vsel %vm199, %v594, 0
    %603 = vmatprep.subr.mxu0 0.0
    %604 = vmatpush1.xpose.msra.mxu0 %v599
    %605 = vmatprep.subr.mxu0 0.0
    %606 = vmatpush1.xpose.msra.mxu0 %v601
    %607 = vmatprep.subr.mxu0 0.0
    %608 = vmatpush1.xpose.msra.mxu0 0.0
    %609 = vmatprep.subr.mxu0 0.0
    %610 = vmatpush1.xpose.msra.mxu0 0.0
    %611 = vmatprep.subr.mxu0 0.0
    %612 = vmatpush1.xpose.msra.mxu0 0.0
    %613 = vmatprep.subr.mxu0 0.0
    %614 = vmatpush1.xpose.msra.mxu0 0.0
    %615 = vmatprep.subr.mxu0 0.0
    %616 = vmatpush1.xpose.msra.mxu0 0.0
    %617 = vmatprep.subr.mxu0 0.0
    %618 = vmatpush1.xpose.msra.mxu0 0.0
    %619 = vmatprep.subr.mxu0 0.0
    %620 = vmatpush1.xpose.msra.mxu0 0.0
    %621 = vmatprep.subr.mxu0 0.0
    %622 = vmatpush1.xpose.msra.mxu0 0.0
    %623 = vmatprep.subr.mxu0 0.0
    %624 = vmatpush1.xpose.msra.mxu0 0.0
    %625 = vmatprep.subr.mxu0 0.0
    %626 = vmatpush1.xpose.msra.mxu0 0.0
    %627 = vmatprep.subr.mxu0 0.0
    %628 = vmatpush1.xpose.msra.mxu0 0.0
    %629 = vmatprep.subr.mxu0 0.0
    %630 = vmatpush1.xpose.msra.mxu0 0.0
    %631 = vmatprep.subr.mxu0 0.0
    %632 = vmatpush1.xpose.msra.mxu0 0.0
    %633 = vmatprep.subr.mxu0 0.0
    %634 = vmatpush1.xpose.msra.mxu0 0.0
    %635 = vmatprep.subr.mxu0 0.0
    %636 = vmatpush1.xpose.msra.mxu0 0.0
    %637 = vmatprep.subr.mxu0 0.0
    %638 = vmatpush1.xpose.msra.mxu0 0.0
    %639 = vmatprep.subr.mxu0 0.0
    %640 = vmatpush1.xpose.msra.mxu0 0.0
    %641 = vmatprep.subr.mxu0 0.0
    %642 = vmatpush1.xpose.msra.mxu0 0.0
    %643 = vmatprep.subr.mxu0 0.0
    %644 = vmatpush1.xpose.msra.mxu0 0.0
    %645 = vmatprep.subr.mxu0 0.0
    %646 = vmatpush1.xpose.msra.mxu0 0.0
    %647 = vmatprep.subr.mxu0 0.0
    %648 = vmatpush1.xpose.msra.mxu0 0.0
    %649 = vmatprep.subr.mxu0 0.0
    %650 = vmatpush1.xpose.msra.mxu0 0.0
    %651 = vmatprep.subr.mxu0 0.0
    %652 = vmatpush1.xpose.msra.mxu0 0.0
    %653 = vmatprep.subr.mxu0 0.0
    %654 = vmatpush1.xpose.msra.mxu0 0.0
    %655 = vmatprep.subr.mxu0 0.0
    %656 = vmatpush1.xpose.msra.mxu0 0.0
    %657 = vmatprep.subr.mxu0 0.0
    %658 = vmatpush1.xpose.msra.mxu0 0.0
    %659 = vmatprep.subr.mxu0 0.0
    %660 = vmatpush1.xpose.msra.mxu0 0.0
    %661 = vmatprep.subr.mxu0 0.0
    %662 = vmatpush1.xpose.msra.mxu0 0.0
    %663 = vmatprep.subr.mxu0 0.0
    %664 = vmatpush1.xpose.msra.mxu0 0.0
    %665 = vmatprep.subr.mxu0 0.0
    %666 = vmatpush1.xpose.msra.mxu0 0.0
    %667 = vmatprep.mubr.f32.mxu0 0.0
    %668 = vmatmul.mubr.f32.gmra.mrb[0].mxu0 %v595
    %v669 = vpop.f32.mrb[0].mxu0
    %v670 = vadd.f32 %v44, %v669
    %v671 = vpop.f32.mrb[0].mxu0
    %672 = vmatprep.mubr.f32.mxu0 0.0
    %673 = vmatmul.mubr.f32.gmra.mrb[0].mxu0 %v597
    %v674 = vpop.f32.mrb[0].mxu0
    %v675 = vadd.f32 %v45, %v674
    %v676 = vpop.f32.mrb[0].mxu0
    %677 = vdwg.mxu0
    %v678 = vsel %vm287, %v670, -inf
    %679 = vmax.xlane.f32.xlu0 %v678
    %v680 = vpop.xlane.xlu0 %679
    %v681 = vsel %vm287, %v675, -inf
    %682 = vmax.xlane.f32.xlu0 %v681
    %v683 = vpop.xlane.xlu0 %682
    %v684 = vsub.f32 %v670, %v680
    %v685 = vsub.f32 %v675, %v683
    %v686 = vmul.f32 %v684, 1.442695
    %v687 = vpow.pop %v686
    %v688 = vmul.f32 %v685, 1.442695
    %v689 = vpow.pop %v688
    %v690 = vsel %vm287, %v687, 0.0
    %691 = vadd.xlane.f32.xlu0 %v690
    %v692 = vpop.xlane.xlu0 %691
    %v693 = vsel %vm287, %v689, 0.0
    %694 = vadd.xlane.f32.xlu0 %v693
    %v695 = vpop.xlane.xlu0 %694
    %v696 = vrcp.pop %v692
    %v697 = vmul.f32 %v687, %v696
    %v698 = vrcp.pop %v695
    %v699 = vmul.f32 %v689, %v698
    %v703 = vsel %vm287, %v697, 0
    %v706 = vsel %vm287, %v699, 0
    %708 = vmatprep.subr.mxu0 0.0
    %709 = vmatpush1.msra.mxu0 %v592
    %710 = vmatprep.subr.mxu0 0.0
    %711 = vmatpush1.msra.mxu0 %v594
    %712 = vmatprep.subr.mxu0 0.0
    %713 = vmatpush1.msra.mxu0 0.0
    %714 = vmatprep.subr.mxu0 0.0
    %715 = vmatpush1.msra.mxu0 0.0
    %716 = vmatprep.subr.mxu0 0.0
    %717 = vmatpush1.msra.mxu0 0.0
    %718 = vmatprep.subr.mxu0 0.0
    %719 = vmatpush1.msra.mxu0 0.0
    %720 = vmatprep.subr.mxu0 0.0
    %721 = vmatpush1.msra.mxu0 0.0
    %722 = vmatprep.subr.mxu0 0.0
    %723 = vmatpush1.msra.mxu0 0.0
    %724 = vmatprep.subr.mxu0 0.0
    %725 = vmatpush1.msra.mxu0 0.0
    %726 = vmatprep.subr.mxu0 0.0
    %727 = vmatpush1.msra.mxu0 0.0
    %728 = vmatprep.subr.mxu0 0.0
    %729 = vmatpush1.msra.mxu0 0.0
    %730 = vmatprep.subr.mxu0 0.0
    %731 = vmatpush1.msra.mxu0 0.0
    %732 = vmatprep.subr.mxu0 0.0
    %733 = vmatpush1.msra.mxu0 0.0
    %734 = vmatprep.subr.mxu0 0.0
    %735 = vmatpush1.msra.mxu0 0.0
    %736 = vmatprep.subr.mxu0 0.0
    %737 = vmatpush1.msra.mxu0 0.0
    %738 = vmatprep.subr.mxu0 0.0
    %739 = vmatpush1.msra.mxu0 0.0
    %740 = vmatprep.subr.mxu0 0.0
    %741 = vmatpush1.msra.mxu0 0.0
    %742 = vmatprep.subr.mxu0 0.0
    %743 = vmatpush1.msra.mxu0 0.0
    %744 = vmatprep.subr.mxu0 0.0
    %745 = vmatpush1.msra.mxu0 0.0
    %746 = vmatprep.subr.mxu0 0.0
    %747 = vmatpush1.msra.mxu0 0.0
    %748 = vmatprep.subr.mxu0 0.0
    %749 = vmatpush1.msra.mxu0 0.0
    %750 = vmatprep.subr.mxu0 0.0
    %751 = vmatpush1.msra.mxu0 0.0
    %752 = vmatprep.subr.mxu0 0.0
    %753 = vmatpush1.msra.mxu0 0.0
    %754 = vmatprep.subr.mxu0 0.0
    %755 = vmatpush1.msra.mxu0 0.0
    %756 = vmatprep.subr.mxu0 0.0
    %757 = vmatpush1.msra.mxu0 0.0
    %758 = vmatprep.subr.mxu0 0.0
    %759 = vmatpush1.msra.mxu0 0.0
    %760 = vmatprep.subr.mxu0 0.0
    %761 = vmatpush1.msra.mxu0 0.0
    %762 = vmatprep.subr.mxu0 0.0
    %763 = vmatpush1.msra.mxu0 0.0
    %764 = vmatprep.subr.mxu0 0.0
    %765 = vmatpush1.msra.mxu0 0.0
    %766 = vmatprep.subr.mxu0 0.0
    %767 = vmatpush1.msra.mxu0 0.0
    %768 = vmatprep.subr.mxu0 0.0
    %769 = vmatpush1.msra.mxu0 0.0
    %770 = vmatprep.subr.mxu0 0.0
    %771 = vmatpush1.msra.mxu0 0.0
    %772 = vmatprep.mubr.f32.mxu0 0.0
    %773 = vmatmul.mubr.f32.gmra.mrb[0].mxu0 %v703
    %v774 = vpop.f32.mrb[0].mxu0
    %v775 = vadd.f32 0.0, %v774
    %v776 = vpop.f32.mrb[0].mxu0
    %777 = vmatprep.mubr.f32.mxu0 0.0
    %778 = vmatmul.mubr.f32.gmra.mrb[0].mxu0 %v706
    %v779 = vpop.f32.mrb[0].mxu0
    %v780 = vadd.f32 0.0, %v779
    %v781 = vpop.f32.mrb[0].mxu0
    %782 = vdwg.mxu0
    %783 = vrot.lane.b32.xlu0 %v197, 104
    %v784 = vpop.permute.xlu0 %783
    %785 = vrot.lane.b32.xlu0 %v198, 104
    %v786 = vpop.permute.xlu0 %785
    %787 = vrot.lane.b32.xlu0 %v189, 104
    %v788 = vpop.permute.xlu0 %787
    %789 = vrot.lane.b32.xlu0 %v194, 104
    %v790 = vpop.permute.xlu0 %789
    %v791 = vsel %vm199, %v784, 0
    %v793 = vsel %vm199, %v786, 0
    %v795 = vsel %vm199, %v788, 0
    %v797 = vsel %vm199, %v790, 0
    %799 = vmatprep.subr.mxu0 0.0
    %800 = vmatpush1.xpose.msra.mxu0 %v795
    %801 = vmatprep.subr.mxu0 0.0
    %802 = vmatpush1.xpose.msra.mxu0 %v797
    %803 = vmatprep.subr.mxu0 0.0
    %804 = vmatpush1.xpose.msra.mxu0 0.0
    %805 = vmatprep.subr.mxu0 0.0
    %806 = vmatpush1.xpose.msra.mxu0 0.0
    %807 = vmatprep.subr.mxu0 0.0
    %808 = vmatpush1.xpose.msra.mxu0 0.0
    %809 = vmatprep.subr.mxu0 0.0
    %810 = vmatpush1.xpose.msra.mxu0 0.0
    %811 = vmatprep.subr.mxu0 0.0
    %812 = vmatpush1.xpose.msra.mxu0 0.0
    %813 = vmatprep.subr.mxu0 0.0
    %814 = vmatpush1.xpose.msra.mxu0 0.0
    %815 = vmatprep.subr.mxu0 0.0
    %816 = vmatpush1.xpose.msra.mxu0 0.0
    %817 = vmatprep.subr.mxu0 0.0
    %818 = vmatpush1.xpose.msra.mxu0 0.0
    %819 = vmatprep.subr.mxu0 0.0
    %820 = vmatpush1.xpose.msra.mxu0 0.0
    %821 = vmatprep.subr.mxu0 0.0
    %822 = vmatpush1.xpose.msra.mxu0 0.0
    %823 = vmatprep.subr.mxu0 0.0
    %824 = vmatpush1.xpose.msra.mxu0 0.0
    %825 = vmatprep.subr.mxu0 0.0
    %826 = vmatpush1.xpose.msra.mxu0 0.0
    %827 = vmatprep.subr.mxu0 0.0
    %828 = vmatpush1.xpose.msra.mxu0 0.0
    %829 = vmatprep.subr.mxu0 0.0
    %830 = vmatpush1.xpose.msra.mxu0 0.0
    %831 = vmatprep.subr.mxu0 0.0
    %832 = vmatpush1.xpose.msra.mxu0 0.0
    %833 = vmatprep.subr.mxu0 0.0
    %834 = vmatpush1.xpose.msra.mxu0 0.0
    %835 = vmatprep.subr.mxu0 0.0
    %836 = vmatpush1.xpose.msra.mxu0 0.0
    %837 = vmatprep.subr.mxu0 0.0
    %838 = vmatpush1.xpose.msra.mxu0 0.0
    %839 = vmatprep.subr.mxu0 0.0
    %840 = vmatpush1.xpose.msra.mxu0 0.0
    %841 = vmatprep.subr.mxu0 0.0
    %842 = vmatpush1.xpose.msra.mxu0 0.0
    %843 = vmatprep.subr.mxu0 0.0
    %844 = vmatpush1.xpose.msra.mxu0 0.0
    %845 = vmatprep.subr.mxu0 0.0
    %846 = vmatpush1.xpose.msra.mxu0 0.0
    %847 = vmatprep.subr.mxu0 0.0
    %848 = vmatpush1.xpose.msra.mxu0 0.0
    %849 = vmatprep.subr.mxu0 0.0
    %850 = vmatpush1.xpose.msra.mxu0 0.0
    %851 = vmatprep.subr.mxu0 0.0
    %852 = vmatpush1.xpose.msra.mxu0 0.0
    %853 = vmatprep.subr.mxu0 0.0
    %854 = vmatpush1.xpose.msra.mxu0 0.0
    %855 = vmatprep.subr.mxu0 0.0
    %856 = vmatpush1.xpose.msra.mxu0 0.0
    %857 = vmatprep.subr.mxu0 0.0
    %858 = vmatpush1.xpose.msra.mxu0 0.0
    %859 = vmatprep.subr.mxu0 0.0
    %860 = vmatpush1.xpose.msra.mxu0 0.0
    %861 = vmatprep.subr.mxu0 0.0
    %862 = vmatpush1.xpose.msra.mxu0 0.0
    %863 = vmatprep.mubr.f32.mxu0 0.0
    %864 = vmatmul.mubr.f32.gmra.mrb[0].mxu0 %v791
    %v865 = vpop.f32.mrb[0].mxu0
    %v866 = vadd.f32 %v44, %v865
    %v867 = vpop.f32.mrb[0].mxu0
    %868 = vmatprep.mubr.f32.mxu0 0.0
    %869 = vmatmul.mubr.f32.gmra.mrb[0].mxu0 %v793
    %v870 = vpop.f32.mrb[0].mxu0
    %v871 = vadd.f32 %v45, %v870
    %v872 = vpop.f32.mrb[0].mxu0
    %873 = vdwg.mxu0
    %v874 = vsel %vm287, %v866, -inf
    %875 = vmax.xlane.f32.xlu0 %v874
    %v876 = vpop.xlane.xlu0 %875
    %v877 = vsel %vm287, %v871, -inf
    %878 = vmax.xlane.f32.xlu0 %v877
    %v879 = vpop.xlane.xlu0 %878
    %v880 = vsub.f32 %v866, %v876
    %v881 = vsub.f32 %v871, %v879
    %v882 = vmul.f32 %v880, 1.442695
    %v883 = vpow.pop %v882
    %v884 = vmul.f32 %v881, 1.442695
    %v885 = vpow.pop %v884
    %v886 = vsel %vm287, %v883, 0.0
    %887 = vadd.xlane.f32.xlu0 %v886
    %v888 = vpop.xlane.xlu0 %887
    %v889 = vsel %vm287, %v885, 0.0
    %890 = vadd.xlane.f32.xlu0 %v889
    %v891 = vpop.xlane.xlu0 %890
    %v892 = vrcp.pop %v888
    %v893 = vmul.f32 %v883, %v892
    %v894 = vrcp.pop %v891
    %v895 = vmul.f32 %v885, %v894
    %v899 = vsel %vm287, %v893, 0
    %v902 = vsel %vm287, %v895, 0
    %904 = vmatprep.subr.mxu0 0.0
    %905 = vmatpush1.msra.mxu0 %v788
    %906 = vmatprep.subr.mxu0 0.0
    %907 = vmatpush1.msra.mxu0 %v790
    %908 = vmatprep.subr.mxu0 0.0
    %909 = vmatpush1.msra.mxu0 0.0
    %910 = vmatprep.subr.mxu0 0.0
    %911 = vmatpush1.msra.mxu0 0.0
    %912 = vmatprep.subr.mxu0 0.0
    %913 = vmatpush1.msra.mxu0 0.0
    %914 = vmatprep.subr.mxu0 0.0
    %915 = vmatpush1.msra.mxu0 0.0
    %916 = vmatprep.subr.mxu0 0.0
    %917 = vmatpush1.msra.mxu0 0.0
    %918 = vmatprep.subr.mxu0 0.0
    %919 = vmatpush1.msra.mxu0 0.0
    %920 = vmatprep.subr.mxu0 0.0
    %921 = vmatpush1.msra.mxu0 0.0
    %922 = vmatprep.subr.mxu0 0.0
    %923 = vmatpush1.msra.mxu0 0.0
    %924 = vmatprep.subr.mxu0 0.0
    %925 = vmatpush1.msra.mxu0 0.0
    %926 = vmatprep.subr.mxu0 0.0
    %927 = vmatpush1.msra.mxu0 0.0
    %928 = vmatprep.subr.mxu0 0.0
    %929 = vmatpush1.msra.mxu0 0.0
    %930 = vmatprep.subr.mxu0 0.0
    %931 = vmatpush1.msra.mxu0 0.0
    %932 = vmatprep.subr.mxu0 0.0
    %933 = vmatpush1.msra.mxu0 0.0
    %934 = vmatprep.subr.mxu0 0.0
    %935 = vmatpush1.msra.mxu0 0.0
    %936 = vmatprep.subr.mxu0 0.0
    %937 = vmatpush1.msra.mxu0 0.0
    %938 = vmatprep.subr.mxu0 0.0
    %939 = vmatpush1.msra.mxu0 0.0
    %940 = vmatprep.subr.mxu0 0.0
    %941 = vmatpush1.msra.mxu0 0.0
    %942 = vmatprep.subr.mxu0 0.0
    %943 = vmatpush1.msra.mxu0 0.0
    %944 = vmatprep.subr.mxu0 0.0
    %945 = vmatpush1.msra.mxu0 0.0
    %946 = vmatprep.subr.mxu0 0.0
    %947 = vmatpush1.msra.mxu0 0.0
    %948 = vmatprep.subr.mxu0 0.0
    %949 = vmatpush1.msra.mxu0 0.0
    %950 = vmatprep.subr.mxu0 0.0
    %951 = vmatpush1.msra.mxu0 0.0
    %952 = vmatprep.subr.mxu0 0.0
    %953 = vmatpush1.msra.mxu0 0.0
    %954 = vmatprep.subr.mxu0 0.0
    %955 = vmatpush1.msra.mxu0 0.0
    %956 = vmatprep.subr.mxu0 0.0
    %957 = vmatpush1.msra.mxu0 0.0
    %958 = vmatprep.subr.mxu0 0.0
    %959 = vmatpush1.msra.mxu0 0.0
    %960 = vmatprep.subr.mxu0 0.0
    %961 = vmatpush1.msra.mxu0 0.0
    %962 = vmatprep.subr.mxu0 0.0
    %963 = vmatpush1.msra.mxu0 0.0
    %964 = vmatprep.subr.mxu0 0.0
    %965 = vmatpush1.msra.mxu0 0.0
    %966 = vmatprep.subr.mxu0 0.0
    %967 = vmatpush1.msra.mxu0 0.0
    %968 = vmatprep.mubr.f32.mxu0 0.0
    %969 = vmatmul.mubr.f32.gmra.mrb[0].mxu0 %v899
    %v970 = vpop.f32.mrb[0].mxu0
    %v971 = vadd.f32 0.0, %v970
    %v972 = vpop.f32.mrb[0].mxu0
    %973 = vmatprep.mubr.f32.mxu0 0.0
    %974 = vmatmul.mubr.f32.gmra.mrb[0].mxu0 %v902
    %v975 = vpop.f32.mrb[0].mxu0
    %v976 = vadd.f32 0.0, %v975
    %v977 = vpop.f32.mrb[0].mxu0
    %978 = vdwg.mxu0
    %981 = vrot.lane.b32.xlu0 %v579, 8
    %v982 = vpop.permute.xlu0 %981
    %983 = vrot.lane.b32.xlu0 %v584, 8
    %v984 = vpop.permute.xlu0 %983
    %989 = vrot.lane.b32.xlu0 %v775, 16
    %v990 = vpop.permute.xlu0 %989
    %991 = vrot.lane.b32.xlu0 %v780, 16
    %v992 = vpop.permute.xlu0 %991
    %997 = vrot.lane.b32.xlu0 %v971, 24
    %v998 = vpop.permute.xlu0 %997
    %999 = vrot.lane.b32.xlu0 %v976, 24
    %v1000 = vpop.permute.xlu0 %999
    %v1003 = vsel %vm199, %v383, %v982
    %v1004 = vsel %vm199, %v388, %v984
    %v1005 = vsel %vm287, %v1003, %v990
    %v1006 = vsel %vm287, %v1004, %v992
    %vm1007 = vcmask 195584
    %v1008 = vsel %vm1007, %v1005, %v998
    %v1009 = vsel %vm1007, %v1006, %v1000
    %v1010 = vlaneseq
    %v1011 = vshrl.u32 %v1010, 7
    %v1012 = vsub.s32 0, %v1011
    %v1013 = vrot.slane %v65, %v1012
    %v1015 = vsel %vm72, %v1008, 0
    %v1018 = vsel %vm72, %v1009, 0
    %1020 = vmatprep.subr.mxu0 0.0
    %1021 = vmatpush1.msra.mxu0 %v51
    %1022 = vmatprep.subr.mxu0 0.0
    %1023 = vmatpush1.msra.mxu0 %v52
    %1024 = vmatprep.subr.mxu0 0.0
    %1025 = vmatpush1.msra.mxu0 %v53
    %1026 = vmatprep.subr.mxu0 0.0
    %1027 = vmatpush1.msra.mxu0 %v54
    %1028 = vmatprep.subr.mxu0 0.0
    %1029 = vmatpush1.msra.mxu0 0.0
    %1030 = vmatprep.subr.mxu0 0.0
    %1031 = vmatpush1.msra.mxu0 0.0
    %1032 = vmatprep.subr.mxu0 0.0
    %1033 = vmatpush1.msra.mxu0 0.0
    %1034 = vmatprep.subr.mxu0 0.0
    %1035 = vmatpush1.msra.mxu0 0.0
    %1036 = vmatprep.subr.mxu0 0.0
    %1037 = vmatpush1.msra.mxu0 0.0
    %1038 = vmatprep.subr.mxu0 0.0
    %1039 = vmatpush1.msra.mxu0 0.0
    %1040 = vmatprep.subr.mxu0 0.0
    %1041 = vmatpush1.msra.mxu0 0.0
    %1042 = vmatprep.subr.mxu0 0.0
    %1043 = vmatpush1.msra.mxu0 0.0
    %1044 = vmatprep.subr.mxu0 0.0
    %1045 = vmatpush1.msra.mxu0 0.0
    %1046 = vmatprep.subr.mxu0 0.0
    %1047 = vmatpush1.msra.mxu0 0.0
    %1048 = vmatprep.subr.mxu0 0.0
    %1049 = vmatpush1.msra.mxu0 0.0
    %1050 = vmatprep.subr.mxu0 0.0
    %1051 = vmatpush1.msra.mxu0 0.0
    %1052 = vmatprep.subr.mxu0 0.0
    %1053 = vmatpush1.msra.mxu0 0.0
    %1054 = vmatprep.subr.mxu0 0.0
    %1055 = vmatpush1.msra.mxu0 0.0
    %1056 = vmatprep.subr.mxu0 0.0
    %1057 = vmatpush1.msra.mxu0 0.0
    %1058 = vmatprep.subr.mxu0 0.0
    %1059 = vmatpush1.msra.mxu0 0.0
    %1060 = vmatprep.subr.mxu0 0.0
    %1061 = vmatpush1.msra.mxu0 0.0
    %1062 = vmatprep.subr.mxu0 0.0
    %1063 = vmatpush1.msra.mxu0 0.0
    %1064 = vmatprep.subr.mxu0 0.0
    %1065 = vmatpush1.msra.mxu0 0.0
    %1066 = vmatprep.subr.mxu0 0.0
    %1067 = vmatpush1.msra.mxu0 0.0
    %1068 = vmatprep.subr.mxu0 0.0
    %1069 = vmatpush1.msra.mxu0 0.0
    %1070 = vmatprep.subr.mxu0 0.0
    %1071 = vmatpush1.msra.mxu0 0.0
    %1072 = vmatprep.subr.mxu0 0.0
    %1073 = vmatpush1.msra.mxu0 0.0
    %1074 = vmatprep.subr.mxu0 0.0
    %1075 = vmatpush1.msra.mxu0 0.0
    %1076 = vmatprep.subr.mxu0 0.0
    %1077 = vmatpush1.msra.mxu0 0.0
    %1078 = vmatprep.subr.mxu0 0.0
    %1079 = vmatpush1.msra.mxu0 0.0
    %1080 = vmatprep.subr.mxu0 0.0
    %1081 = vmatpush1.msra.mxu0 0.0
    %1082 = vmatprep.subr.mxu0 0.0
    %1083 = vmatpush1.msra.mxu0 0.0
    %1084 = vmatprep.mubr.f32.mxu0 0.0
    %1085 = vmatmul.mubr.f32.gmra.mrb[0].mxu0 %v1015
    %v1086 = vpop.f32.mrb[0].mxu0
    %v1087 = vadd.f32 %v1013, %v1086
    %v1088 = vpop.f32.mrb[0].mxu0
    %1089 = vmatprep.mubr.f32.mxu0 0.0
    %1090 = vmatmul.mubr.f32.gmra.mrb[0].mxu0 %v1018
    %v1091 = vpop.f32.mrb[0].mxu0
    %v1092 = vadd.f32 %v1013, %v1091
    %v1093 = vpop.f32.mrb[0].mxu0
    %1094 = vdwg.mxu0
    %v1095 = vadd.f32 %v42, %v1087
    %v1096 = vadd.f32 %v43, %v1092
    %v1097 = vsel %vm72, %v1095, 0.0
    %1098 = vadd.xlane.f32.xlu0 %v1097
    %v1099 = vpop.xlane.xlu0 %1098
    %v1100 = vsel %vm72, %v1096, 0.0
    %1101 = vadd.xlane.f32.xlu0 %v1100
    %v1102 = vpop.xlane.xlu0 %1101
    %v1103 = vmul.f32 %v1099, %v79
    %v1104 = vmul.f32 %v1102, %v79
    %v1105 = vsub.f32 %v1095, %v1103
    %v1106 = vsub.f32 %v1096, %v1104
    %v1107 = vmul.f32 %v1105, %v1105
    %v1108 = vmul.f32 %v1106, %v1106
    %v1109 = vsel %vm72, %v1107, 0.0
    %1110 = vadd.xlane.f32.xlu0 %v1109
    %v1111 = vpop.xlane.xlu0 %1110
    %v1112 = vsel %vm72, %v1108, 0.0
    %1113 = vadd.xlane.f32.xlu0 %v1112
    %v1114 = vpop.xlane.xlu0 %1113
    %v1115 = vmul.f32 %v1111, %v79
    %v1116 = vmul.f32 %v1114, %v79
    %v1117 = vadd.f32 %v1115, 1e-05
    %v1118 = vadd.f32 %v1116, 1e-05
    %v1119 = vrsqrt.pop %v1117
    %v1120 = vrsqrt.pop %v1118
    %v1121 = vmul.f32 %v1105, %v1119
    %v1122 = vmul.f32 %v1106, %v1120
    %v1123 = vlaneseq
    %v1124 = vshrl.u32 %v1123, 7
    %v1125 = vsub.s32 0, %v1124
    %v1126 = vrot.slane %v70, %v1125
    %v1127 = vmul.f32 %v1121, %v1126
    %v1128 = vmul.f32 %v1122, %v1126
    %v1129 = vlaneseq
    %v1130 = vshrl.u32 %v1129, 7
    %v1131 = vsub.s32 0, %v1130
    %v1132 = vrot.slane %v71, %v1131
    %v1133 = vadd.f32 %v1127, %v1132
    %v1134 = vadd.f32 %v1128, %v1132
    %v1135 = vlaneseq
    %v1136 = vshrl.u32 %v1135, 7
    %v1137 = vsub.s32 0, %v1136
    %v1138 = vrot.slane %v66, %v1137
    %v1140 = vsel %vm72, %v1133, 0
    %v1143 = vsel %vm72, %v1134, 0
    %1145 = vmatprep.subr.mxu0 0.0
    %1146 = vmatpush1.msra.mxu0 %v55
    %1147 = vmatprep.subr.mxu0 0.0
    %1148 = vmatpush1.msra.mxu0 %v56
    %1149 = vmatprep.subr.mxu0 0.0
    %1150 = vmatpush1.msra.mxu0 %v57
    %1151 = vmatprep.subr.mxu0 0.0
    %1152 = vmatpush1.msra.mxu0 %v58
    %1153 = vmatprep.subr.mxu0 0.0
    %1154 = vmatpush1.msra.mxu0 0.0
    %1155 = vmatprep.subr.mxu0 0.0
    %1156 = vmatpush1.msra.mxu0 0.0
    %1157 = vmatprep.subr.mxu0 0.0
    %1158 = vmatpush1.msra.mxu0 0.0
    %1159 = vmatprep.subr.mxu0 0.0
    %1160 = vmatpush1.msra.mxu0 0.0
    %1161 = vmatprep.subr.mxu0 0.0
    %1162 = vmatpush1.msra.mxu0 0.0
    %1163 = vmatprep.subr.mxu0 0.0
    %1164 = vmatpush1.msra.mxu0 0.0
    %1165 = vmatprep.subr.mxu0 0.0
    %1166 = vmatpush1.msra.mxu0 0.0
    %1167 = vmatprep.subr.mxu0 0.0
    %1168 = vmatpush1.msra.mxu0 0.0
    %1169 = vmatprep.subr.mxu0 0.0
    %1170 = vmatpush1.msra.mxu0 0.0
    %1171 = vmatprep.subr.mxu0 0.0
    %1172 = vmatpush1.msra.mxu0 0.0
    %1173 = vmatprep.subr.mxu0 0.0
    %1174 = vmatpush1.msra.mxu0 0.0
    %1175 = vmatprep.subr.mxu0 0.0
    %1176 = vmatpush1.msra.mxu0 0.0
    %1177 = vmatprep.subr.mxu0 0.0
    %1178 = vmatpush1.msra.mxu0 0.0
    %1179 = vmatprep.subr.mxu0 0.0
    %1180 = vmatpush1.msra.mxu0 0.0
    %1181 = vmatprep.subr.mxu0 0.0
    %1182 = vmatpush1.msra.mxu0 0.0
    %1183 = vmatprep.subr.mxu0 0.0
    %1184 = vmatpush1.msra.mxu0 0.0
    %1185 = vmatprep.subr.mxu0 0.0
    %1186 = vmatpush1.msra.mxu0 0.0
    %1187 = vmatprep.subr.mxu0 0.0
    %1188 = vmatpush1.msra.mxu0 0.0
    %1189 = vmatprep.subr.mxu0 0.0
    %1190 = vmatpush1.msra.mxu0 0.0
    %1191 = vmatprep.subr.mxu0 0.0
    %1192 = vmatpush1.msra.mxu0 0.0
    %1193 = vmatprep.subr.mxu0 0.0
    %1194 = vmatpush1.msra.mxu0 0.0
    %1195 = vmatprep.subr.mxu0 0.0
    %1196 = vmatpush1.msra.mxu0 0.0
    %1197 = vmatprep.subr.mxu0 0.0
    %1198 = vmatpush1.msra.mxu0 0.0
    %1199 = vmatprep.subr.mxu0 0.0
    %1200 = vmatpush1.msra.mxu0 0.0
    %1201 = vmatprep.subr.mxu0 0.0
    %1202 = vmatpush1.msra.mxu0 0.0
    %1203 = vmatprep.subr.mxu0 0.0
    %1204 = vmatpush1.msra.mxu0 0.0
    %1205 = vmatprep.subr.mxu0 0.0
    %1206 = vmatpush1.msra.mxu0 0.0
    %1207 = vmatprep.subr.mxu0 0.0
    %1208 = vmatpush1.msra.mxu0 0.0
    %1209 = vmatprep.mubr.f32.mxu0 0.0
    %1210 = vmatmul.mubr.f32.gmra.mrb[0].mxu0 %v1140
    %v1211 = vpop.f32.mrb[0].mxu0
    %v1212 = vadd.f32 %v1138, %v1211
    %v1213 = vpop.f32.mrb[0].mxu0
    %1214 = vmatprep.mubr.f32.mxu0 0.0
    %1215 = vmatmul.mubr.f32.gmra.mrb[0].mxu0 %v1143
    %v1216 = vpop.f32.mrb[0].mxu0
    %v1217 = vadd.f32 %v1138, %v1216
    %v1218 = vpop.f32.mrb[0].mxu0
    %1219 = vdwg.mxu0
    %v1220 = vmax.f32 %v1212, 0.0
    %v1221 = vmax.f32 %v1217, 0.0
    %v1222 = vlaneseq
    %v1223 = vshrl.u32 %v1222, 7
    %v1224 = vsub.s32 0, %v1223
    %v1225 = vrot.slane %v67, %v1224
    %vm1226 = vcmask 523264
    %v1228 = vsel %vm1226, %v1220, 0
    %v1231 = vsel %vm1226, %v1221, 0
    %v1234 = vsel %vm1226, %v60, 0
    %v1237 = vsel %vm1226, %v61, 0
    %v1240 = vsel %vm1226, %v62, 0
    %v1243 = vsel %vm1226, %v63, 0
    %1245 = vmatprep.subr.mxu0 0.0
    %1246 = vmatpush1.xpose.msra.mxu0 %v1234
    %1247 = vmatprep.subr.mxu0 0.0
    %1248 = vmatpush1.xpose.msra.mxu0 %v1237
    %1249 = vmatprep.subr.mxu0 0.0
    %1250 = vmatpush1.xpose.msra.mxu0 %v1240
    %1251 = vmatprep.subr.mxu0 0.0
    %1252 = vmatpush1.xpose.msra.mxu0 %v1243
    %1253 = vmatprep.subr.mxu0 0.0
    %1254 = vmatpush1.xpose.msra.mxu0 0.0
    %1255 = vmatprep.subr.mxu0 0.0
    %1256 = vmatpush1.xpose.msra.mxu0 0.0
    %1257 = vmatprep.subr.mxu0 0.0
    %1258 = vmatpush1.xpose.msra.mxu0 0.0
    %1259 = vmatprep.subr.mxu0 0.0
    %1260 = vmatpush1.xpose.msra.mxu0 0.0
    %1261 = vmatprep.subr.mxu0 0.0
    %1262 = vmatpush1.xpose.msra.mxu0 0.0
    %1263 = vmatprep.subr.mxu0 0.0
    %1264 = vmatpush1.xpose.msra.mxu0 0.0
    %1265 = vmatprep.subr.mxu0 0.0
    %1266 = vmatpush1.xpose.msra.mxu0 0.0
    %1267 = vmatprep.subr.mxu0 0.0
    %1268 = vmatpush1.xpose.msra.mxu0 0.0
    %1269 = vmatprep.subr.mxu0 0.0
    %1270 = vmatpush1.xpose.msra.mxu0 0.0
    %1271 = vmatprep.subr.mxu0 0.0
    %1272 = vmatpush1.xpose.msra.mxu0 0.0
    %1273 = vmatprep.subr.mxu0 0.0
    %1274 = vmatpush1.xpose.msra.mxu0 0.0
    %1275 = vmatprep.subr.mxu0 0.0
    %1276 = vmatpush1.xpose.msra.mxu0 0.0
    %1277 = vmatprep.subr.mxu0 0.0
    %1278 = vmatpush1.xpose.msra.mxu0 0.0
    %1279 = vmatprep.subr.mxu0 0.0
    %1280 = vmatpush1.xpose.msra.mxu0 0.0
    %1281 = vmatprep.subr.mxu0 0.0
    %1282 = vmatpush1.xpose.msra.mxu0 0.0
    %1283 = vmatprep.subr.mxu0 0.0
    %1284 = vmatpush1.xpose.msra.mxu0 0.0
    %1285 = vmatprep.subr.mxu0 0.0
    %1286 = vmatpush1.xpose.msra.mxu0 0.0
    %1287 = vmatprep.subr.mxu0 0.0
    %1288 = vmatpush1.xpose.msra.mxu0 0.0
    %1289 = vmatprep.subr.mxu0 0.0
    %1290 = vmatpush1.xpose.msra.mxu0 0.0
    %1291 = vmatprep.subr.mxu0 0.0
    %1292 = vmatpush1.xpose.msra.mxu0 0.0
    %1293 = vmatprep.subr.mxu0 0.0
    %1294 = vmatpush1.xpose.msra.mxu0 0.0
    %1295 = vmatprep.subr.mxu0 0.0
    %1296 = vmatpush1.xpose.msra.mxu0 0.0
    %1297 = vmatprep.subr.mxu0 0.0
    %1298 = vmatpush1.xpose.msra.mxu0 0.0
    %1299 = vmatprep.subr.mxu0 0.0
    %1300 = vmatpush1.xpose.msra.mxu0 0.0
    %1301 = vmatprep.subr.mxu0 0.0
    %1302 = vmatpush1.xpose.msra.mxu0 0.0
    %1303 = vmatprep.subr.mxu0 0.0
    %1304 = vmatpush1.xpose.msra.mxu0 0.0
    %1305 = vmatprep.subr.mxu0 0.0
    %1306 = vmatpush1.xpose.msra.mxu0 0.0
    %1307 = vmatprep.subr.mxu0 0.0
    %1308 = vmatpush1.xpose.msra.mxu0 0.0
    %1309 = vmatprep.mubr.f32.mxu0 0.0
    %1310 = vmatmul.mubr.f32.gmra.mrb[0].mxu0 %v1228
    %v1311 = vpop.f32.mrb[0].mxu0
    %v1312 = vadd.f32 %v1225, %v1311
    %v1313 = vpop.f32.mrb[0].mxu0
    %1314 = vmatprep.mubr.f32.mxu0 0.0
    %1315 = vmatmul.mubr.f32.gmra.mrb[0].mxu0 %v1231
    %v1316 = vpop.f32.mrb[0].mxu0
    %v1317 = vadd.f32 %v1225, %v1316
    %v1318 = vpop.f32.mrb[0].mxu0
    %1319 = vdwg.mxu0
    %v1320 = vadd.f32 %v1095, %v1312
    %v1321 = vadd.f32 %v1096, %v1317
    %s1322 = scalar_lea.vmem %s2, 64
    %v1323 = vld [vmem:[%s1322] sm:$0xff]
    %v1324 = vld [vmem:[%s1322 + $0x8] sm:$0xff]
    %v1325 = vld [vmem:[%s1322 + $0x10] sm:$0xff]
    %v1326 = vld [vmem:[%s1322 + $0x18] sm:$0xff]
    %s1327 = scalar_lea.vmem %s2, 96
    %v1328 = vld [vmem:[%s1327] sm:$0xff]
    %v1329 = vld [vmem:[%s1327 + $0x8] sm:$0xff]
    %v1330 = vld [vmem:[%s1327 + $0x10] sm:$0xff]
    %v1331 = vld [vmem:[%s1327 + $0x18] sm:$0xff]
    %s1332 = scalar_lea.vmem [#allocation2], 64
    %v1333 = vld [vmem:[%s1332] sm:$0xff]
    %v1334 = vld [vmem:[%s1332 + $0x8] sm:$0xff]
    %v1335 = vld [vmem:[%s1332 + $0x10] sm:$0xff]
    %v1336 = vld [vmem:[%s1332 + $0x18] sm:$0xff]
    %s1337 = scalar_lea.vmem [#allocation2], 96
    %v1338 = vld [vmem:[%s1337] sm:$0xff]
    %v1339 = vld [vmem:[%s1337 + $0x8] sm:$0xff]
    %v1340 = vld [vmem:[%s1337 + $0x10] sm:$0xff]
    %v1341 = vld [vmem:[%s1337 + $0x18] sm:$0xff]
    %v1342 = vld [vmem:[%s4 + $0x8] sm:$0x1]
    %v1343 = vld [vmem:[%s4 + $0x9] sm:$0x1]
    %v1344 = vld [vmem:[%s4 + $0xa] sm:$0x1]
    %v1345 = vld [vmem:[%s4 + $0xb] sm:$0x1]
    %v1346 = vld [vmem:[%s4 + $0xc] sm:$0x1]
    %v1347 = vld [vmem:[%s4 + $0xd] sm:$0x1]
    %v1348 = vld [vmem:[%s4 + $0xe] sm:$0x1]
    %v1349 = vld [vmem:[%s4 + $0xf] sm:$0x1]
    %v1350 = vsel %vm72, %v1320, 0.0
    %1351 = vadd.xlane.f32.xlu0 %v1350
    %v1352 = vpop.xlane.xlu0 %1351
    %v1353 = vsel %vm72, %v1321, 0.0
    %1354 = vadd.xlane.f32.xlu0 %v1353
    %v1355 = vpop.xlane.xlu0 %1354
    %v1356 = vmul.f32 %v1352, %v79
    %v1357 = vmul.f32 %v1355, %v79
    %v1358 = vsub.f32 %v1320, %v1356
    %v1359 = vsub.f32 %v1321, %v1357
    %v1360 = vmul.f32 %v1358, %v1358
    %v1361 = vmul.f32 %v1359, %v1359
    %v1362 = vsel %vm72, %v1360, 0.0
    %1363 = vadd.xlane.f32.xlu0 %v1362
    %v1364 = vpop.xlane.xlu0 %1363
    %v1365 = vsel %vm72, %v1361, 0.0
    %1366 = vadd.xlane.f32.xlu0 %v1365
    %v1367 = vpop.xlane.xlu0 %1366
    %v1368 = vmul.f32 %v1364, %v79
    %v1369 = vmul.f32 %v1367, %v79
    %v1370 = vadd.f32 %v1368, 1e-05
    %v1371 = vadd.f32 %v1369, 1e-05
    %v1372 = vrsqrt.pop %v1370
    %v1373 = vrsqrt.pop %v1371
    %v1374 = vmul.f32 %v1358, %v1372
    %v1375 = vmul.f32 %v1359, %v1373
    %v1376 = vlaneseq
    %v1377 = vshrl.u32 %v1376, 7
    %v1378 = vsub.s32 0, %v1377
    %v1379 = vrot.slane %v1346, %v1378
    %v1380 = vmul.f32 %v1374, %v1379
    %v1381 = vmul.f32 %v1375, %v1379
    %v1382 = vlaneseq
    %v1383 = vshrl.u32 %v1382, 7
    %v1384 = vsub.s32 0, %v1383
    %v1385 = vrot.slane %v1347, %v1384
    %v1386 = vadd.f32 %v1380, %v1385
    %v1387 = vadd.f32 %v1381, %v1385
    %v1388 = vlaneseq
    %v1389 = vshrl.u32 %v1388, 7
    %v1390 = vsub.s32 0, %v1389
    %v1391 = vrot.slane %v1342, %v1390
    %v1393 = vsel %vm72, %v1386, 0
    %v1396 = vsel %vm72, %v1387, 0
    %1398 = vmatprep.subr.mxu0 0.0
    %1399 = vmatpush1.msra.mxu0 %v1323
    %1400 = vmatprep.subr.mxu0 0.0
    %1401 = vmatpush1.msra.mxu0 %v1324
    %1402 = vmatprep.subr.mxu0 0.0
    %1403 = vmatpush1.msra.mxu0 %v1325
    %1404 = vmatprep.subr.mxu0 0.0
    %1405 = vmatpush1.msra.mxu0 %v1326
    %1406 = vmatprep.subr.mxu0 0.0
    %1407 = vmatpush1.msra.mxu0 0.0
    %1408 = vmatprep.subr.mxu0 0.0
    %1409 = vmatpush1.msra.mxu0 0.0
    %1410 = vmatprep.subr.mxu0 0.0
    %1411 = vmatpush1.msra.mxu0 0.0
    %1412 = vmatprep.subr.mxu0 0.0
    %1413 = vmatpush1.msra.mxu0 0.0
    %1414 = vmatprep.subr.mxu0 0.0
    %1415 = vmatpush1.msra.mxu0 0.0
    %1416 = vmatprep.subr.mxu0 0.0
    %1417 = vmatpush1.msra.mxu0 0.0
    %1418 = vmatprep.subr.mxu0 0.0
    %1419 = vmatpush1.msra.mxu0 0.0
    %1420 = vmatprep.subr.mxu0 0.0
    %1421 = vmatpush1.msra.mxu0 0.0
    %1422 = vmatprep.subr.mxu0 0.0
    %1423 = vmatpush1.msra.mxu0 0.0
    %1424 = vmatprep.subr.mxu0 0.0
    %1425 = vmatpush1.msra.mxu0 0.0
    %1426 = vmatprep.subr.mxu0 0.0
    %1427 = vmatpush1.msra.mxu0 0.0
    %1428 = vmatprep.subr.mxu0 0.0
    %1429 = vmatpush1.msra.mxu0 0.0
    %1430 = vmatprep.subr.mxu0 0.0
    %1431 = vmatpush1.msra.mxu0 0.0
    %1432 = vmatprep.subr.mxu0 0.0
    %1433 = vmatpush1.msra.mxu0 0.0
    %1434 = vmatprep.subr.mxu0 0.0
    %1435 = vmatpush1.msra.mxu0 0.0
    %1436 = vmatprep.subr.mxu0 0.0
    %1437 = vmatpush1.msra.mxu0 0.0
    %1438 = vmatprep.subr.mxu0 0.0
    %1439 = vmatpush1.msra.mxu0 0.0
    %1440 = vmatprep.subr.mxu0 0.0
    %1441 = vmatpush1.msra.mxu0 0.0
    %1442 = vmatprep.subr.mxu0 0.0
    %1443 = vmatpush1.msra.mxu0 0.0
    %1444 = vmatprep.subr.mxu0 0.0
    %1445 = vmatpush1.msra.mxu0 0.0
    %1446 = vmatprep.subr.mxu0 0.0
    %1447 = vmatpush1.msra.mxu0 0.0
    %1448 = vmatprep.subr.mxu0 0.0
    %1449 = vmatpush1.msra.mxu0 0.0
    %1450 = vmatprep.subr.mxu0 0.0
    %1451 = vmatpush1.msra.mxu0 0.0
    %1452 = vmatprep.subr.mxu0 0.0
    %1453 = vmatpush1.msra.mxu0 0.0
    %1454 = vmatprep.subr.mxu0 0.0
    %1455 = vmatpush1.msra.mxu0 0.0
    %1456 = vmatprep.subr.mxu0 0.0
    %1457 = vmatpush1.msra.mxu0 0.0
    %1458 = vmatprep.subr.mxu0 0.0
    %1459 = vmatpush1.msra.mxu0 0.0
    %1460 = vmatprep.subr.mxu0 0.0
    %1461 = vmatpush1.msra.mxu0 0.0
    %1462 = vmatprep.mubr.f32.mxu0 0.0
    %1463 = vmatmul.mubr.f32.gmra.mrb[0].mxu0 %v1393
    %v1464 = vpop.f32.mrb[0].mxu0
    %v1465 = vadd.f32 %v1391, %v1464
    %v1466 = vpop.f32.mrb[0].mxu0
    %1467 = vmatprep.mubr.f32.mxu0 0.0
    %1468 = vmatmul.mubr.f32.gmra.mrb[0].mxu0 %v1396
    %v1469 = vpop.f32.mrb[0].mxu0
    %v1470 = vadd.f32 %v1391, %v1469
    %v1471 = vpop.f32.mrb[0].mxu0
    %1472 = vdwg.mxu0
    %v1473 = vmul.f32 %v1465, 0.35355338
    %v1474 = vmul.f32 %v1470, 0.35355338
    %v1476 = vsel %vm199, %v1473, 0
    %v1479 = vsel %vm199, %v1474, 0
    %v1482 = vsel %vm199, %v1465, 0
    %v1485 = vsel %vm199, %v1470, 0
    %1487 = vmatprep.subr.mxu0 0.0
    %1488 = vmatpush1.xpose.msra.mxu0 %v1482
    %1489 = vmatprep.subr.mxu0 0.0
    %1490 = vmatpush1.xpose.msra.mxu0 %v1485
    %1491 = vmatprep.subr.mxu0 0.0
    %1492 = vmatpush1.xpose.msra.mxu0 0.0
    %1493 = vmatprep.subr.mxu0 0.0
    %1494 = vmatpush1.xpose.msra.mxu0 0.0
    %1495 = vmatprep.subr.mxu0 0.0
    %1496 = vmatpush1.xpose.msra.mxu0 0.0
    %1497 = vmatprep.subr.mxu0 0.0
    %1498 = vmatpush1.xpose.msra.mxu0 0.0
    %1499 = vmatprep.subr.mxu0 0.0
    %1500 = vmatpush1.xpose.msra.mxu0 0.0
    %1501 = vmatprep.subr.mxu0 0.0
    %1502 = vmatpush1.xpose.msra.mxu0 0.0
    %1503 = vmatprep.subr.mxu0 0.0
    %1504 = vmatpush1.xpose.msra.mxu0 0.0
    %1505 = vmatprep.subr.mxu0 0.0
    %1506 = vmatpush1.xpose.msra.mxu0 0.0
    %1507 = vmatprep.subr.mxu0 0.0
    %1508 = vmatpush1.xpose.msra.mxu0 0.0
    %1509 = vmatprep.subr.mxu0 0.0
    %1510 = vmatpush1.xpose.msra.mxu0 0.0
    %1511 = vmatprep.subr.mxu0 0.0
    %1512 = vmatpush1.xpose.msra.mxu0 0.0
    %1513 = vmatprep.subr.mxu0 0.0
    %1514 = vmatpush1.xpose.msra.mxu0 0.0
    %1515 = vmatprep.subr.mxu0 0.0
    %1516 = vmatpush1.xpose.msra.mxu0 0.0
    %1517 = vmatprep.subr.mxu0 0.0
    %1518 = vmatpush1.xpose.msra.mxu0 0.0
    %1519 = vmatprep.subr.mxu0 0.0
    %1520 = vmatpush1.xpose.msra.mxu0 0.0
    %1521 = vmatprep.subr.mxu0 0.0
    %1522 = vmatpush1.xpose.msra.mxu0 0.0
    %1523 = vmatprep.subr.mxu0 0.0
    %1524 = vmatpush1.xpose.msra.mxu0 0.0
    %1525 = vmatprep.subr.mxu0 0.0
    %1526 = vmatpush1.xpose.msra.mxu0 0.0
    %1527 = vmatprep.subr.mxu0 0.0
    %1528 = vmatpush1.xpose.msra.mxu0 0.0
    %1529 = vmatprep.subr.mxu0 0.0
    %1530 = vmatpush1.xpose.msra.mxu0 0.0
    %1531 = vmatprep.subr.mxu0 0.0
    %1532 = vmatpush1.xpose.msra.mxu0 0.0
    %1533 = vmatprep.subr.mxu0 0.0
    %1534 = vmatpush1.xpose.msra.mxu0 0.0
    %1535 = vmatprep.subr.mxu0 0.0
    %1536 = vmatpush1.xpose.msra.mxu0 0.0
    %1537 = vmatprep.subr.mxu0 0.0
    %1538 = vmatpush1.xpose.msra.mxu0 0.0
    %1539 = vmatprep.subr.mxu0 0.0
    %1540 = vmatpush1.xpose.msra.mxu0 0.0
    %1541 = vmatprep.subr.mxu0 0.0
    %1542 = vmatpush1.xpose.msra.mxu0 0.0
    %1543 = vmatprep.subr.mxu0 0.0
    %1544 = vmatpush1.xpose.msra.mxu0 0.0
    %1545 = vmatprep.subr.mxu0 0.0
    %1546 = vmatpush1.xpose.msra.mxu0 0.0
    %1547 = vmatprep.subr.mxu0 0.0
    %1548 = vmatpush1.xpose.msra.mxu0 0.0
    %1549 = vmatprep.subr.mxu0 0.0
    %1550 = vmatpush1.xpose.msra.mxu0 0.0
    %1551 = vmatprep.mubr.f32.mxu0 0.0
    %1552 = vmatmul.mubr.f32.gmra.mrb[0].mxu0 %v1476
    %v1553 = vpop.f32.mrb[0].mxu0
    %v1554 = vadd.f32 %v44, %v1553
    %v1555 = vpop.f32.mrb[0].mxu0
    %1556 = vmatprep.mubr.f32.mxu0 0.0
    %1557 = vmatmul.mubr.f32.gmra.mrb[0].mxu0 %v1479
    %v1558 = vpop.f32.mrb[0].mxu0
    %v1559 = vadd.f32 %v45, %v1558
    %v1560 = vpop.f32.mrb[0].mxu0
    %1561 = vdwg.mxu0
    %v1562 = vsel %vm287, %v1554, -inf
    %1563 = vmax.xlane.f32.xlu0 %v1562
    %v1564 = vpop.xlane.xlu0 %1563
    %v1565 = vsel %vm287, %v1559, -inf
    %1566 = vmax.xlane.f32.xlu0 %v1565
    %v1567 = vpop.xlane.xlu0 %1566
    %v1568 = vsub.f32 %v1554, %v1564
    %v1569 = vsub.f32 %v1559, %v1567
    %v1570 = vmul.f32 %v1568, 1.442695
    %v1571 = vpow.pop %v1570
    %v1572 = vmul.f32 %v1569, 1.442695
    %v1573 = vpow.pop %v1572
    %v1574 = vsel %vm287, %v1571, 0.0
    %1575 = vadd.xlane.f32.xlu0 %v1574
    %v1576 = vpop.xlane.xlu0 %1575
    %v1577 = vsel %vm287, %v1573, 0.0
    %1578 = vadd.xlane.f32.xlu0 %v1577
    %v1579 = vpop.xlane.xlu0 %1578
    %v1580 = vrcp.pop %v1576
    %v1581 = vmul.f32 %v1571, %v1580
    %v1582 = vrcp.pop %v1579
    %v1583 = vmul.f32 %v1573, %v1582
    %v1585 = vsel %vm287, %v1581, 0
    %v1588 = vsel %vm287, %v1583, 0
    %1590 = vmatprep.subr.mxu0 0.0
    %1591 = vmatpush1.msra.mxu0 %v1465
    %1592 = vmatprep.subr.mxu0 0.0
    %1593 = vmatpush1.msra.mxu0 %v1470
    %1594 = vmatprep.subr.mxu0 0.0
    %1595 = vmatpush1.msra.mxu0 0.0
    %1596 = vmatprep.subr.mxu0 0.0
    %1597 = vmatpush1.msra.mxu0 0.0
    %1598 = vmatprep.subr.mxu0 0.0
    %1599 = vmatpush1.msra.mxu0 0.0
    %1600 = vmatprep.subr.mxu0 0.0
    %1601 = vmatpush1.msra.mxu0 0.0
    %1602 = vmatprep.subr.mxu0 0.0
    %1603 = vmatpush1.msra.mxu0 0.0
    %1604 = vmatprep.subr.mxu0 0.0
    %1605 = vmatpush1.msra.mxu0 0.0
    %1606 = vmatprep.subr.mxu0 0.0
    %1607 = vmatpush1.msra.mxu0 0.0
    %1608 = vmatprep.subr.mxu0 0.0
    %1609 = vmatpush1.msra.mxu0 0.0
    %1610 = vmatprep.subr.mxu0 0.0
    %1611 = vmatpush1.msra.mxu0 0.0
    %1612 = vmatprep.subr.mxu0 0.0
    %1613 = vmatpush1.msra.mxu0 0.0
    %1614 = vmatprep.subr.mxu0 0.0
    %1615 = vmatpush1.msra.mxu0 0.0
    %1616 = vmatprep.subr.mxu0 0.0
    %1617 = vmatpush1.msra.mxu0 0.0
    %1618 = vmatprep.subr.mxu0 0.0
    %1619 = vmatpush1.msra.mxu0 0.0
    %1620 = vmatprep.subr.mxu0 0.0
    %1621 = vmatpush1.msra.mxu0 0.0
    %1622 = vmatprep.subr.mxu0 0.0
    %1623 = vmatpush1.msra.mxu0 0.0
    %1624 = vmatprep.subr.mxu0 0.0
    %1625 = vmatpush1.msra.mxu0 0.0
    %1626 = vmatprep.subr.mxu0 0.0
    %1627 = vmatpush1.msra.mxu0 0.0
    %1628 = vmatprep.subr.mxu0 0.0
    %1629 = vmatpush1.msra.mxu0 0.0
    %1630 = vmatprep.subr.mxu0 0.0
    %1631 = vmatpush1.msra.mxu0 0.0
    %1632 = vmatprep.subr.mxu0 0.0
    %1633 = vmatpush1.msra.mxu0 0.0
    %1634 = vmatprep.subr.mxu0 0.0
    %1635 = vmatpush1.msra.mxu0 0.0
    %1636 = vmatprep.subr.mxu0 0.0
    %1637 = vmatpush1.msra.mxu0 0.0
    %1638 = vmatprep.subr.mxu0 0.0
    %1639 = vmatpush1.msra.mxu0 0.0
    %1640 = vmatprep.subr.mxu0 0.0
    %1641 = vmatpush1.msra.mxu0 0.0
    %1642 = vmatprep.subr.mxu0 0.0
    %1643 = vmatpush1.msra.mxu0 0.0
    %1644 = vmatprep.subr.mxu0 0.0
    %1645 = vmatpush1.msra.mxu0 0.0
    %1646 = vmatprep.subr.mxu0 0.0
    %1647 = vmatpush1.msra.mxu0 0.0
    %1648 = vmatprep.subr.mxu0 0.0
    %1649 = vmatpush1.msra.mxu0 0.0
    %1650 = vmatprep.subr.mxu0 0.0
    %1651 = vmatpush1.msra.mxu0 0.0
    %1652 = vmatprep.subr.mxu0 0.0
    %1653 = vmatpush1.msra.mxu0 0.0
    %1654 = vmatprep.mubr.f32.mxu0 0.0
    %1655 = vmatmul.mubr.f32.gmra.mrb[0].mxu0 %v1585
    %v1656 = vpop.f32.mrb[0].mxu0
    %v1657 = vadd.f32 0.0, %v1656
    %v1658 = vpop.f32.mrb[0].mxu0
    %1659 = vmatprep.mubr.f32.mxu0 0.0
    %1660 = vmatmul.mubr.f32.gmra.mrb[0].mxu0 %v1588
    %v1661 = vpop.f32.mrb[0].mxu0
    %v1662 = vadd.f32 0.0, %v1661
    %v1663 = vpop.f32.mrb[0].mxu0
    %1664 = vdwg.mxu0
    %1665 = vrot.lane.b32.xlu0 %v1473, 120
    %v1666 = vpop.permute.xlu0 %1665
    %1667 = vrot.lane.b32.xlu0 %v1474, 120
    %v1668 = vpop.permute.xlu0 %1667
    %1669 = vrot.lane.b32.xlu0 %v1465, 120
    %v1670 = vpop.permute.xlu0 %1669
    %1671 = vrot.lane.b32.xlu0 %v1470, 120
    %v1672 = vpop.permute.xlu0 %1671
    %v1673 = vsel %vm199, %v1666, 0
    %v1675 = vsel %vm199, %v1668, 0
    %v1677 = vsel %vm199, %v1670, 0
    %v1679 = vsel %vm199, %v1672, 0
    %1681 = vmatprep.subr.mxu0 0.0
    %1682 = vmatpush1.xpose.msra.mxu0 %v1677
    %1683 = vmatprep.subr.mxu0 0.0
    %1684 = vmatpush1.xpose.msra.mxu0 %v1679
    %1685 = vmatprep.subr.mxu0 0.0
    %1686 = vmatpush1.xpose.msra.mxu0 0.0
    %1687 = vmatprep.subr.mxu0 0.0
    %1688 = vmatpush1.xpose.msra.mxu0 0.0
    %1689 = vmatprep.subr.mxu0 0.0
    %1690 = vmatpush1.xpose.msra.mxu0 0.0
    %1691 = vmatprep.subr.mxu0 0.0
    %1692 = vmatpush1.xpose.msra.mxu0 0.0
    %1693 = vmatprep.subr.mxu0 0.0
    %1694 = vmatpush1.xpose.msra.mxu0 0.0
    %1695 = vmatprep.subr.mxu0 0.0
    %1696 = vmatpush1.xpose.msra.mxu0 0.0
    %1697 = vmatprep.subr.mxu0 0.0
    %1698 = vmatpush1.xpose.msra.mxu0 0.0
    %1699 = vmatprep.subr.mxu0 0.0
    %1700 = vmatpush1.xpose.msra.mxu0 0.0
    %1701 = vmatprep.subr.mxu0 0.0
    %1702 = vmatpush1.xpose.msra.mxu0 0.0
    %1703 = vmatprep.subr.mxu0 0.0
    %1704 = vmatpush1.xpose.msra.mxu0 0.0
    %1705 = vmatprep.subr.mxu0 0.0
    %1706 = vmatpush1.xpose.msra.mxu0 0.0
    %1707 = vmatprep.subr.mxu0 0.0
    %1708 = vmatpush1.xpose.msra.mxu0 0.0
    %1709 = vmatprep.subr.mxu0 0.0
    %1710 = vmatpush1.xpose.msra.mxu0 0.0
    %1711 = vmatprep.subr.mxu0 0.0
    %1712 = vmatpush1.xpose.msra.mxu0 0.0
    %1713 = vmatprep.subr.mxu0 0.0
    %1714 = vmatpush1.xpose.msra.mxu0 0.0
    %1715 = vmatprep.subr.mxu0 0.0
    %1716 = vmatpush1.xpose.msra.mxu0 0.0
    %1717 = vmatprep.subr.mxu0 0.0
    %1718 = vmatpush1.xpose.msra.mxu0 0.0
    %1719 = vmatprep.subr.mxu0 0.0
    %1720 = vmatpush1.xpose.msra.mxu0 0.0
    %1721 = vmatprep.subr.mxu0 0.0
    %1722 = vmatpush1.xpose.msra.mxu0 0.0
    %1723 = vmatprep.subr.mxu0 0.0
    %1724 = vmatpush1.xpose.msra.mxu0 0.0
    %1725 = vmatprep.subr.mxu0 0.0
    %1726 = vmatpush1.xpose.msra.mxu0 0.0
    %1727 = vmatprep.subr.mxu0 0.0
    %1728 = vmatpush1.xpose.msra.mxu0 0.0
    %1729 = vmatprep.subr.mxu0 0.0
    %1730 = vmatpush1.xpose.msra.mxu0 0.0
    %1731 = vmatprep.subr.mxu0 0.0
    %1732 = vmatpush1.xpose.msra.mxu0 0.0
    %1733 = vmatprep.subr.mxu0 0.0
    %1734 = vmatpush1.xpose.msra.mxu0 0.0
    %1735 = vmatprep.subr.mxu0 0.0
    %1736 = vmatpush1.xpose.msra.mxu0 0.0
    %1737 = vmatprep.subr.mxu0 0.0
    %1738 = vmatpush1.xpose.msra.mxu0 0.0
    %1739 = vmatprep.subr.mxu0 0.0
    %1740 = vmatpush1.xpose.msra.mxu0 0.0
    %1741 = vmatprep.subr.mxu0 0.0
    %1742 = vmatpush1.xpose.msra.mxu0 0.0
    %1743 = vmatprep.subr.mxu0 0.0
    %1744 = vmatpush1.xpose.msra.mxu0 0.0
    %1745 = vmatprep.mubr.f32.mxu0 0.0
    %1746 = vmatmul.mubr.f32.gmra.mrb[0].mxu0 %v1673
    %v1747 = vpop.f32.mrb[0].mxu0
    %v1748 = vadd.f32 %v44, %v1747
    %v1749 = vpop.f32.mrb[0].mxu0
    %1750 = vmatprep.mubr.f32.mxu0 0.0
    %1751 = vmatmul.mubr.f32.gmra.mrb[0].mxu0 %v1675
    %v1752 = vpop.f32.mrb[0].mxu0
    %v1753 = vadd.f32 %v45, %v1752
    %v1754 = vpop.f32.mrb[0].mxu0
    %1755 = vdwg.mxu0
    %v1756 = vsel %vm287, %v1748, -inf
    %1757 = vmax.xlane.f32.xlu0 %v1756
    %v1758 = vpop.xlane.xlu0 %1757
    %v1759 = vsel %vm287, %v1753, -inf
    %1760 = vmax.xlane.f32.xlu0 %v1759
    %v1761 = vpop.xlane.xlu0 %1760
    %v1762 = vsub.f32 %v1748, %v1758
    %v1763 = vsub.f32 %v1753, %v1761
    %v1764 = vmul.f32 %v1762, 1.442695
    %v1765 = vpow.pop %v1764
    %v1766 = vmul.f32 %v1763, 1.442695
    %v1767 = vpow.pop %v1766
    %v1768 = vsel %vm287, %v1765, 0.0
    %1769 = vadd.xlane.f32.xlu0 %v1768
    %v1770 = vpop.xlane.xlu0 %1769
    %v1771 = vsel %vm287, %v1767, 0.0
    %1772 = vadd.xlane.f32.xlu0 %v1771
    %v1773 = vpop.xlane.xlu0 %1772
    %v1774 = vrcp.pop %v1770
    %v1775 = vmul.f32 %v1765, %v1774
    %v1776 = vrcp.pop %v1773
    %v1777 = vmul.f32 %v1767, %v1776
    %v1781 = vsel %vm287, %v1775, 0
    %v1784 = vsel %vm287, %v1777, 0
    %1786 = vmatprep.subr.mxu0 0.0
    %1787 = vmatpush1.msra.mxu0 %v1670
    %1788 = vmatprep.subr.mxu0 0.0
    %1789 = vmatpush1.msra.mxu0 %v1672
    %1790 = vmatprep.subr.mxu0 0.0
    %1791 = vmatpush1.msra.mxu0 0.0
    %1792 = vmatprep.subr.mxu0 0.0
    %1793 = vmatpush1.msra.mxu0 0.0
    %1794 = vmatprep.subr.mxu0 0.0
    %1795 = vmatpush1.msra.mxu0 0.0
    %1796 = vmatprep.subr.mxu0 0.0
    %1797 = vmatpush1.msra.mxu0 0.0
    %1798 = vmatprep.subr.mxu0 0.0
    %1799 = vmatpush1.msra.mxu0 0.0
    %1800 = vmatprep.subr.mxu0 0.0
    %1801 = vmatpush1.msra.mxu0 0.0
    %1802 = vmatprep.subr.mxu0 0.0
    %1803 = vmatpush1.msra.mxu0 0.0
    %1804 = vmatprep.subr.mxu0 0.0
    %1805 = vmatpush1.msra.mxu0 0.0
    %1806 = vmatprep.subr.mxu0 0.0
    %1807 = vmatpush1.msra.mxu0 0.0
    %1808 = vmatprep.subr.mxu0 0.0
    %1809 = vmatpush1.msra.mxu0 0.0
    %1810 = vmatprep.subr.mxu0 0.0
    %1811 = vmatpush1.msra.mxu0 0.0
    %1812 = vmatprep.subr.mxu0 0.0
    %1813 = vmatpush1.msra.mxu0 0.0
    %1814 = vmatprep.subr.mxu0 0.0
    %1815 = vmatpush1.msra.mxu0 0.0
    %1816 = vmatprep.subr.mxu0 0.0
    %1817 = vmatpush1.msra.mxu0 0.0
    %1818 = vmatprep.subr.mxu0 0.0
    %1819 = vmatpush1.msra.mxu0 0.0
    %1820 = vmatprep.subr.mxu0 0.0
    %1821 = vmatpush1.msra.mxu0 0.0
    %1822 = vmatprep.subr.mxu0 0.0
    %1823 = vmatpush1.msra.mxu0 0.0
    %1824 = vmatprep.subr.mxu0 0.0
    %1825 = vmatpush1.msra.mxu0 0.0
    %1826 = vmatprep.subr.mxu0 0.0
    %1827 = vmatpush1.msra.mxu0 0.0
    %1828 = vmatprep.subr.mxu0 0.0
    %1829 = vmatpush1.msra.mxu0 0.0
    %1830 = vmatprep.subr.mxu0 0.0
    %1831 = vmatpush1.msra.mxu0 0.0
    %1832 = vmatprep.subr.mxu0 0.0
    %1833 = vmatpush1.msra.mxu0 0.0
    %1834 = vmatprep.subr.mxu0 0.0
    %1835 = vmatpush1.msra.mxu0 0.0
    %1836 = vmatprep.subr.mxu0 0.0
    %1837 = vmatpush1.msra.mxu0 0.0
    %1838 = vmatprep.subr.mxu0 0.0
    %1839 = vmatpush1.msra.mxu0 0.0
    %1840 = vmatprep.subr.mxu0 0.0
    %1841 = vmatpush1.msra.mxu0 0.0
    %1842 = vmatprep.subr.mxu0 0.0
    %1843 = vmatpush1.msra.mxu0 0.0
    %1844 = vmatprep.subr.mxu0 0.0
    %1845 = vmatpush1.msra.mxu0 0.0
    %1846 = vmatprep.subr.mxu0 0.0
    %1847 = vmatpush1.msra.mxu0 0.0
    %1848 = vmatprep.subr.mxu0 0.0
    %1849 = vmatpush1.msra.mxu0 0.0
    %1850 = vmatprep.mubr.f32.mxu0 0.0
    %1851 = vmatmul.mubr.f32.gmra.mrb[0].mxu0 %v1781
    %v1852 = vpop.f32.mrb[0].mxu0
    %v1853 = vadd.f32 0.0, %v1852
    %v1854 = vpop.f32.mrb[0].mxu0
    %1855 = vmatprep.mubr.f32.mxu0 0.0
    %1856 = vmatmul.mubr.f32.gmra.mrb[0].mxu0 %v1784
    %v1857 = vpop.f32.mrb[0].mxu0
    %v1858 = vadd.f32 0.0, %v1857
    %v1859 = vpop.f32.mrb[0].mxu0
    %1860 = vdwg.mxu0
    %1861 = vrot.lane.b32.xlu0 %v1473, 112
    %v1862 = vpop.permute.xlu0 %1861
    %1863 = vrot.lane.b32.xlu0 %v1474, 112
    %v1864 = vpop.permute.xlu0 %1863
    %1865 = vrot.lane.b32.xlu0 %v1465, 112
    %v1866 = vpop.permute.xlu0 %1865
    %1867 = vrot.lane.b32.xlu0 %v1470, 112
    %v1868 = vpop.permute.xlu0 %1867
    %v1869 = vsel %vm199, %v1862, 0
    %v1871 = vsel %vm199, %v1864, 0
    %v1873 = vsel %vm199, %v1866, 0
    %v1875 = vsel %vm199, %v1868, 0
    %1877 = vmatprep.subr.mxu0 0.0
    %1878 = vmatpush1.xpose.msra.mxu0 %v1873
    %1879 = vmatprep.subr.mxu0 0.0
    %1880 = vmatpush1.xpose.msra.mxu0 %v1875
    %1881 = vmatprep.subr.mxu0 0.0
    %1882 = vmatpush1.xpose.msra.mxu0 0.0
    %1883 = vmatprep.subr.mxu0 0.0
    %1884 = vmatpush1.xpose.msra.mxu0 0.0
    %1885 = vmatprep.subr.mxu0 0.0
    %1886 = vmatpush1.xpose.msra.mxu0 0.0
    %1887 = vmatprep.subr.mxu0 0.0
    %1888 = vmatpush1.xpose.msra.mxu0 0.0
    %1889 = vmatprep.subr.mxu0 0.0
    %1890 = vmatpush1.xpose.msra.mxu0 0.0
    %1891 = vmatprep.subr.mxu0 0.0
    %1892 = vmatpush1.xpose.msra.mxu0 0.0
    %1893 = vmatprep.subr.mxu0 0.0
    %1894 = vmatpush1.xpose.msra.mxu0 0.0
    %1895 = vmatprep.subr.mxu0 0.0
    %1896 = vmatpush1.xpose.msra.mxu0 0.0
    %1897 = vmatprep.subr.mxu0 0.0
    %1898 = vmatpush1.xpose.msra.mxu0 0.0
    %1899 = vmatprep.subr.mxu0 0.0
    %1900 = vmatpush1.xpose.msra.mxu0 0.0
    %1901 = vmatprep.subr.mxu0 0.0
    %1902 = vmatpush1.xpose.msra.mxu0 0.0
    %1903 = vmatprep.subr.mxu0 0.0
    %1904 = vmatpush1.xpose.msra.mxu0 0.0
    %1905 = vmatprep.subr.mxu0 0.0
    %1906 = vmatpush1.xpose.msra.mxu0 0.0
    %1907 = vmatprep.subr.mxu0 0.0
    %1908 = vmatpush1.xpose.msra.mxu0 0.0
    %1909 = vmatprep.subr.mxu0 0.0
    %1910 = vmatpush1.xpose.msra.mxu0 0.0
    %1911 = vmatprep.subr.mxu0 0.0
    %1912 = vmatpush1.xpose.msra.mxu0 0.0
    %1913 = vmatprep.subr.mxu0 0.0
    %1914 = vmatpush1.xpose.msra.mxu0 0.0
    %1915 = vmatprep.subr.mxu0 0.0
    %1916 = vmatpush1.xpose.msra.mxu0 0.0
    %1917 = vmatprep.subr.mxu0 0.0
    %1918 = vmatpush1.xpose.msra.mxu0 0.0
    %1919 = vmatprep.subr.mxu0 0.0
    %1920 = vmatpush1.xpose.msra.mxu0 0.0
    %1921 = vmatprep.subr.mxu0 0.0
    %1922 = vmatpush1.xpose.msra.mxu0 0.0
    %1923 = vmatprep.subr.mxu0 0.0
    %1924 = vmatpush1.xpose.msra.mxu0 0.0
    %1925 = vmatprep.subr.mxu0 0.0
    %1926 = vmatpush1.xpose.msra.mxu0 0.0
    %1927 = vmatprep.subr.mxu0 0.0
    %1928 = vmatpush1.xpose.msra.mxu0 0.0
    %1929 = vmatprep.subr.mxu0 0.0
    %1930 = vmatpush1.xpose.msra.mxu0 0.0
    %1931 = vmatprep.subr.mxu0 0.0
    %1932 = vmatpush1.xpose.msra.mxu0 0.0
    %1933 = vmatprep.subr.mxu0 0.0
    %1934 = vmatpush1.xpose.msra.mxu0 0.0
    %1935 = vmatprep.subr.mxu0 0.0
    %1936 = vmatpush1.xpose.msra.mxu0 0.0
    %1937 = vmatprep.subr.mxu0 0.0
    %1938 = vmatpush1.xpose.msra.mxu0 0.0
    %1939 = vmatprep.subr.mxu0 0.0
    %1940 = vmatpush1.xpose.msra.mxu0 0.0
    %1941 = vmatprep.mubr.f32.mxu0 0.0
    %1942 = vmatmul.mubr.f32.gmra.mrb[0].mxu0 %v1869
    %v1943 = vpop.f32.mrb[0].mxu0
    %v1944 = vadd.f32 %v44, %v1943
    %v1945 = vpop.f32.mrb[0].mxu0
    %1946 = vmatprep.mubr.f32.mxu0 0.0
    %1947 = vmatmul.mubr.f32.gmra.mrb[0].mxu0 %v1871
    %v1948 = vpop.f32.mrb[0].mxu0
    %v1949 = vadd.f32 %v45, %v1948
    %v1950 = vpop.f32.mrb[0].mxu0
    %1951 = vdwg.mxu0
    %v1952 = vsel %vm287, %v1944, -inf
    %1953 = vmax.xlane.f32.xlu0 %v1952
    %v1954 = vpop.xlane.xlu0 %1953
    %v1955 = vsel %vm287, %v1949, -inf
    %1956 = vmax.xlane.f32.xlu0 %v1955
    %v1957 = vpop.xlane.xlu0 %1956
    %v1958 = vsub.f32 %v1944, %v1954
    %v1959 = vsub.f32 %v1949, %v1957
    %v1960 = vmul.f32 %v1958, 1.442695
    %v1961 = vpow.pop %v1960
    %v1962 = vmul.f32 %v1959, 1.442695
    %v1963 = vpow.pop %v1962
    %v1964 = vsel %vm287, %v1961, 0.0
    %1965 = vadd.xlane.f32.xlu0 %v1964
    %v1966 = vpop.xlane.xlu0 %1965
    %v1967 = vsel %vm287, %v1963, 0.0
    %1968 = vadd.xlane.f32.xlu0 %v1967
    %v1969 = vpop.xlane.xlu0 %1968
    %v1970 = vrcp.pop %v1966
    %v1971 = vmul.f32 %v1961, %v1970
    %v1972 = vrcp.pop %v1969
    %v1973 = vmul.f32 %v1963, %v1972
    %v1977 = vsel %vm287, %v1971, 0
    %v1980 = vsel %vm287, %v1973, 0
    %1982 = vmatprep.subr.mxu0 0.0
    %1983 = vmatpush1.msra.mxu0 %v1866
    %1984 = vmatprep.subr.mxu0 0.0
    %1985 = vmatpush1.msra.mxu0 %v1868
    %1986 = vmatprep.subr.mxu0 0.0
    %1987 = vmatpush1.msra.mxu0 0.0
    %1988 = vmatprep.subr.mxu0 0.0
    %1989 = vmatpush1.msra.mxu0 0.0
    %1990 = vmatprep.subr.mxu0 0.0
    %1991 = vmatpush1.msra.mxu0 0.0
    %1992 = vmatprep.subr.mxu0 0.0
    %1993 = vmatpush1.msra.mxu0 0.0
    %1994 = vmatprep.subr.mxu0 0.0
    %1995 = vmatpush1.msra.mxu0 0.0
    %1996 = vmatprep.subr.mxu0 0.0
    %1997 = vmatpush1.msra.mxu0 0.0
    %1998 = vmatprep.subr.mxu0 0.0
    %1999 = vmatpush1.msra.mxu0 0.0
    %2000 = vmatprep.subr.mxu0 0.0
    %2001 = vmatpush1.msra.mxu0 0.0
    %2002 = vmatprep.subr.mxu0 0.0
    %2003 = vmatpush1.msra.mxu0 0.0
    %2004 = vmatprep.subr.mxu0 0.0
    %2005 = vmatpush1.msra.mxu0 0.0
    %2006 = vmatprep.subr.mxu0 0.0
    %2007 = vmatpush1.msra.mxu0 0.0
    %2008 = vmatprep.subr.mxu0 0.0
    %2009 = vmatpush1.msra.mxu0 0.0
    %2010 = vmatprep.subr.mxu0 0.0
    %2011 = vmatpush1.msra.mxu0 0.0
    %2012 = vmatprep.subr.mxu0 0.0
    %2013 = vmatpush1.msra.mxu0 0.0
    %2014 = vmatprep.subr.mxu0 0.0
    %2015 = vmatpush1.msra.mxu0 0.0
    %2016 = vmatprep.subr.mxu0 0.0
    %2017 = vmatpush1.msra.mxu0 0.0
    %2018 = vmatprep.subr.mxu0 0.0
    %2019 = vmatpush1.msra.mxu0 0.0
    %2020 = vmatprep.subr.mxu0 0.0
    %2021 = vmatpush1.msra.mxu0 0.0
    %2022 = vmatprep.subr.mxu0 0.0
    %2023 = vmatpush1.msra.mxu0 0.0
    %2024 = vmatprep.subr.mxu0 0.0
    %2025 = vmatpush1.msra.mxu0 0.0
    %2026 = vmatprep.subr.mxu0 0.0
    %2027 = vmatpush1.msra.mxu0 0.0
    %2028 = vmatprep.subr.mxu0 0.0
    %2029 = vmatpush1.msra.mxu0 0.0
    %2030 = vmatprep.subr.mxu0 0.0
    %2031 = vmatpush1.msra.mxu0 0.0
    %2032 = vmatprep.subr.mxu0 0.0
    %2033 = vmatpush1.msra.mxu0 0.0
    %2034 = vmatprep.subr.mxu0 0.0
    %2035 = vmatpush1.msra.mxu0 0.0
    %2036 = vmatprep.subr.mxu0 0.0
    %2037 = vmatpush1.msra.mxu0 0.0
    %2038 = vmatprep.subr.mxu0 0.0
    %2039 = vmatpush1.msra.mxu0 0.0
    %2040 = vmatprep.subr.mxu0 0.0
    %2041 = vmatpush1.msra.mxu0 0.0
    %2042 = vmatprep.subr.mxu0 0.0
    %2043 = vmatpush1.msra.mxu0 0.0
    %2044 = vmatprep.subr.mxu0 0.0
    %2045 = vmatpush1.msra.mxu0 0.0
    %2046 = vmatprep.mubr.f32.mxu0 0.0
    %2047 = vmatmul.mubr.f32.gmra.mrb[0].mxu0 %v1977
    %v2048 = vpop.f32.mrb[0].mxu0
    %v2049 = vadd.f32 0.0, %v2048
    %v2050 = vpop.f32.mrb[0].mxu0
    %2051 = vmatprep.mubr.f32.mxu0 0.0
    %2052 = vmatmul.mubr.f32.gmra.mrb[0].mxu0 %v1980
    %v2053 = vpop.f32.mrb[0].mxu0
    %v2054 = vadd.f32 0.0, %v2053
    %v2055 = vpop.f32.mrb[0].mxu0
    %2056 = vdwg.mxu0
    %2057 = vrot.lane.b32.xlu0 %v1473, 104
    %v2058 = vpop.permute.xlu0 %2057
    %2059 = vrot.lane.b32.xlu0 %v1474, 104
    %v2060 = vpop.permute.xlu0 %2059
    %2061 = vrot.lane.b32.xlu0 %v1465, 104
    %v2062 = vpop.permute.xlu0 %2061
    %2063 = vrot.lane.b32.xlu0 %v1470, 104
    %v2064 = vpop.permute.xlu0 %2063
    %v2065 = vsel %vm199, %v2058, 0
    %v2067 = vsel %vm199, %v2060, 0
    %v2069 = vsel %vm199, %v2062, 0
    %v2071 = vsel %vm199, %v2064, 0
    %2073 = vmatprep.subr.mxu0 0.0
    %2074 = vmatpush1.xpose.msra.mxu0 %v2069
    %2075 = vmatprep.subr.mxu0 0.0
    %2076 = vmatpush1.xpose.msra.mxu0 %v2071
    %2077 = vmatprep.subr.mxu0 0.0
    %2078 = vmatpush1.xpose.msra.mxu0 0.0
    %2079 = vmatprep.subr.mxu0 0.0
    %2080 = vmatpush1.xpose.msra.mxu0 0.0
    %2081 = vmatprep.subr.mxu0 0.0
    %2082 = vmatpush1.xpose.msra.mxu0 0.0
    %2083 = vmatprep.subr.mxu0 0.0
    %2084 = vmatpush1.xpose.msra.mxu0 0.0
    %2085 = vmatprep.subr.mxu0 0.0
    %2086 = vmatpush1.xpose.msra.mxu0 0.0
    %2087 = vmatprep.subr.mxu0 0.0
    %2088 = vmatpush1.xpose.msra.mxu0 0.0
    %2089 = vmatprep.subr.mxu0 0.0
    %2090 = vmatpush1.xpose.msra.mxu0 0.0
    %2091 = vmatprep.subr.mxu0 0.0
    %2092 = vmatpush1.xpose.msra.mxu0 0.0
    %2093 = vmatprep.subr.mxu0 0.0
    %2094 = vmatpush1.xpose.msra.mxu0 0.0
    %2095 = vmatprep.subr.mxu0 0.0
    %2096 = vmatpush1.xpose.msra.mxu0 0.0
    %2097 = vmatprep.subr.mxu0 0.0
    %2098 = vmatpush1.xpose.msra.mxu0 0.0
    %2099 = vmatprep.subr.mxu0 0.0
    %2100 = vmatpush1.xpose.msra.mxu0 0.0
    %2101 = vmatprep.subr.mxu0 0.0
    %2102 = vmatpush1.xpose.msra.mxu0 0.0
    %2103 = vmatprep.subr.mxu0 0.0
    %2104 = vmatpush1.xpose.msra.mxu0 0.0
    %2105 = vmatprep.subr.mxu0 0.0
    %2106 = vmatpush1.xpose.msra.mxu0 0.0
    %2107 = vmatprep.subr.mxu0 0.0
    %2108 = vmatpush1.xpose.msra.mxu0 0.0
    %2109 = vmatprep.subr.mxu0 0.0
    %2110 = vmatpush1.xpose.msra.mxu0 0.0
    %2111 = vmatprep.subr.mxu0 0.0
    %2112 = vmatpush1.xpose.msra.mxu0 0.0
    %2113 = vmatprep.subr.mxu0 0.0
    %2114 = vmatpush1.xpose.msra.mxu0 0.0
    %2115 = vmatprep.subr.mxu0 0.0
    %2116 = vmatpush1.xpose.msra.mxu0 0.0
    %2117 = vmatprep.subr.mxu0 0.0
    %2118 = vmatpush1.xpose.msra.mxu0 0.0
    %2119 = vmatprep.subr.mxu0 0.0
    %2120 = vmatpush1.xpose.msra.mxu0 0.0
    %2121 = vmatprep.subr.mxu0 0.0
    %2122 = vmatpush1.xpose.msra.mxu0 0.0
    %2123 = vmatprep.subr.mxu0 0.0
    %2124 = vmatpush1.xpose.msra.mxu0 0.0
    %2125 = vmatprep.subr.mxu0 0.0
    %2126 = vmatpush1.xpose.msra.mxu0 0.0
    %2127 = vmatprep.subr.mxu0 0.0
    %2128 = vmatpush1.xpose.msra.mxu0 0.0
    %2129 = vmatprep.subr.mxu0 0.0
    %2130 = vmatpush1.xpose.msra.mxu0 0.0
    %2131 = vmatprep.subr.mxu0 0.0
    %2132 = vmatpush1.xpose.msra.mxu0 0.0
    %2133 = vmatprep.subr.mxu0 0.0
    %2134 = vmatpush1.xpose.msra.mxu0 0.0
    %2135 = vmatprep.subr.mxu0 0.0
    %2136 = vmatpush1.xpose.msra.mxu0 0.0
    %2137 = vmatprep.mubr.f32.mxu0 0.0
    %2138 = vmatmul.mubr.f32.gmra.mrb[0].mxu0 %v2065
    %v2139 = vpop.f32.mrb[0].mxu0
    %v2140 = vadd.f32 %v44, %v2139
    %v2141 = vpop.f32.mrb[0].mxu0
    %2142 = vmatprep.mubr.f32.mxu0 0.0
    %2143 = vmatmul.mubr.f32.gmra.mrb[0].mxu0 %v2067
    %v2144 = vpop.f32.mrb[0].mxu0
    %v2145 = vadd.f32 %v45, %v2144
    %v2146 = vpop.f32.mrb[0].mxu0
    %2147 = vdwg.mxu0
    %v2148 = vsel %vm287, %v2140, -inf
    %2149 = vmax.xlane.f32.xlu0 %v2148
    %v2150 = vpop.xlane.xlu0 %2149
    %v2151 = vsel %vm287, %v2145, -inf
    %2152 = vmax.xlane.f32.xlu0 %v2151
    %v2153 = vpop.xlane.xlu0 %2152
    %v2154 = vsub.f32 %v2140, %v2150
    %v2155 = vsub.f32 %v2145, %v2153
    %v2156 = vmul.f32 %v2154, 1.442695
    %v2157 = vpow.pop %v2156
    %v2158 = vmul.f32 %v2155, 1.442695
    %v2159 = vpow.pop %v2158
    %v2160 = vsel %vm287, %v2157, 0.0
    %2161 = vadd.xlane.f32.xlu0 %v2160
    %v2162 = vpop.xlane.xlu0 %2161
    %v2163 = vsel %vm287, %v2159, 0.0
    %2164 = vadd.xlane.f32.xlu0 %v2163
    %v2165 = vpop.xlane.xlu0 %2164
    %v2166 = vrcp.pop %v2162
    %v2167 = vmul.f32 %v2157, %v2166
    %v2168 = vrcp.pop %v2165
    %v2169 = vmul.f32 %v2159, %v2168
    %v2173 = vsel %vm287, %v2167, 0
    %v2176 = vsel %vm287, %v2169, 0
    %2178 = vmatprep.subr.mxu0 0.0
    %2179 = vmatpush1.msra.mxu0 %v2062
    %2180 = vmatprep.subr.mxu0 0.0
    %2181 = vmatpush1.msra.mxu0 %v2064
    %2182 = vmatprep.subr.mxu0 0.0
    %2183 = vmatpush1.msra.mxu0 0.0
    %2184 = vmatprep.subr.mxu0 0.0
    %2185 = vmatpush1.msra.mxu0 0.0
    %2186 = vmatprep.subr.mxu0 0.0
    %2187 = vmatpush1.msra.mxu0 0.0
    %2188 = vmatprep.subr.mxu0 0.0
    %2189 = vmatpush1.msra.mxu0 0.0
    %2190 = vmatprep.subr.mxu0 0.0
    %2191 = vmatpush1.msra.mxu0 0.0
    %2192 = vmatprep.subr.mxu0 0.0
    %2193 = vmatpush1.msra.mxu0 0.0
    %2194 = vmatprep.subr.mxu0 0.0
    %2195 = vmatpush1.msra.mxu0 0.0
    %2196 = vmatprep.subr.mxu0 0.0
    %2197 = vmatpush1.msra.mxu0 0.0
    %2198 = vmatprep.subr.mxu0 0.0
    %2199 = vmatpush1.msra.mxu0 0.0
    %2200 = vmatprep.subr.mxu0 0.0
    %2201 = vmatpush1.msra.mxu0 0.0
    %2202 = vmatprep.subr.mxu0 0.0
    %2203 = vmatpush1.msra.mxu0 0.0
    %2204 = vmatprep.subr.mxu0 0.0
    %2205 = vmatpush1.msra.mxu0 0.0
    %2206 = vmatprep.subr.mxu0 0.0
    %2207 = vmatpush1.msra.mxu0 0.0
    %2208 = vmatprep.subr.mxu0 0.0
    %2209 = vmatpush1.msra.mxu0 0.0
    %2210 = vmatprep.subr.mxu0 0.0
    %2211 = vmatpush1.msra.mxu0 0.0
    %2212 = vmatprep.subr.mxu0 0.0
    %2213 = vmatpush1.msra.mxu0 0.0
    %2214 = vmatprep.subr.mxu0 0.0
    %2215 = vmatpush1.msra.mxu0 0.0
    %2216 = vmatprep.subr.mxu0 0.0
    %2217 = vmatpush1.msra.mxu0 0.0
    %2218 = vmatprep.subr.mxu0 0.0
    %2219 = vmatpush1.msra.mxu0 0.0
    %2220 = vmatprep.subr.mxu0 0.0
    %2221 = vmatpush1.msra.mxu0 0.0
    %2222 = vmatprep.subr.mxu0 0.0
    %2223 = vmatpush1.msra.mxu0 0.0
    %2224 = vmatprep.subr.mxu0 0.0
    %2225 = vmatpush1.msra.mxu0 0.0
    %2226 = vmatprep.subr.mxu0 0.0
    %2227 = vmatpush1.msra.mxu0 0.0
    %2228 = vmatprep.subr.mxu0 0.0
    %2229 = vmatpush1.msra.mxu0 0.0
    %2230 = vmatprep.subr.mxu0 0.0
    %2231 = vmatpush1.msra.mxu0 0.0
    %2232 = vmatprep.subr.mxu0 0.0
    %2233 = vmatpush1.msra.mxu0 0.0
    %2234 = vmatprep.subr.mxu0 0.0
    %2235 = vmatpush1.msra.mxu0 0.0
    %2236 = vmatprep.subr.mxu0 0.0
    %2237 = vmatpush1.msra.mxu0 0.0
    %2238 = vmatprep.subr.mxu0 0.0
    %2239 = vmatpush1.msra.mxu0 0.0
    %2240 = vmatprep.subr.mxu0 0.0
    %2241 = vmatpush1.msra.mxu0 0.0
    %2242 = vmatprep.mubr.f32.mxu0 0.0
    %2243 = vmatmul.mubr.f32.gmra.mrb[0].mxu0 %v2173
    %v2244 = vpop.f32.mrb[0].mxu0
    %v2245 = vadd.f32 0.0, %v2244
    %v2246 = vpop.f32.mrb[0].mxu0
    %2247 = vmatprep.mubr.f32.mxu0 0.0
    %2248 = vmatmul.mubr.f32.gmra.mrb[0].mxu0 %v2176
    %v2249 = vpop.f32.mrb[0].mxu0
    %v2250 = vadd.f32 0.0, %v2249
    %v2251 = vpop.f32.mrb[0].mxu0
    %2252 = vdwg.mxu0
    %2255 = vrot.lane.b32.xlu0 %v1853, 8
    %v2256 = vpop.permute.xlu0 %2255
    %2257 = vrot.lane.b32.xlu0 %v1858, 8
    %v2258 = vpop.permute.xlu0 %2257
    %2263 = vrot.lane.b32.xlu0 %v2049, 16
    %v2264 = vpop.permute.xlu0 %2263
    %2265 = vrot.lane.b32.xlu0 %v2054, 16
    %v2266 = vpop.permute.xlu0 %2265
    %2271 = vrot.lane.b32.xlu0 %v2245, 24
    %v2272 = vpop.permute.xlu0 %2271
    %2273 = vrot.lane.b32.xlu0 %v2250, 24
    %v2274 = vpop.permute.xlu0 %2273
    %v2277 = vsel %vm199, %v1657, %v2256
    %v2278 = vsel %vm199, %v1662, %v2258
    %v2279 = vsel %vm287, %v2277, %v2264
    %v2280 = vsel %vm287, %v2278, %v2266
    %v2281 = vsel %vm1007, %v2279, %v2272
    %v2282 = vsel %vm1007, %v2280, %v2274
    %v2283 = vlaneseq
    %v2284 = vshrl.u32 %v2283, 7
    %v2285 = vsub.s32 0, %v2284
    %v2286 = vrot.slane %v1343, %v2285
    %v2288 = vsel %vm72, %v2281, 0
    %v2291 = vsel %vm72, %v2282, 0
    %2293 = vmatprep.subr.mxu0 0.0
    %2294 = vmatpush1.msra.mxu0 %v1328
    %2295 = vmatprep.subr.mxu0 0.0
    %2296 = vmatpush1.msra.mxu0 %v1329
    %2297 = vmatprep.subr.mxu0 0.0
    %2298 = vmatpush1.msra.mxu0 %v1330
    %2299 = vmatprep.subr.mxu0 0.0
    %2300 = vmatpush1.msra.mxu0 %v1331
    %2301 = vmatprep.subr.mxu0 0.0
    %2302 = vmatpush1.msra.mxu0 0.0
    %2303 = vmatprep.subr.mxu0 0.0
    %2304 = vmatpush1.msra.mxu0 0.0
    %2305 = vmatprep.subr.mxu0 0.0
    %2306 = vmatpush1.msra.mxu0 0.0
    %2307 = vmatprep.subr.mxu0 0.0
    %2308 = vmatpush1.msra.mxu0 0.0
    %2309 = vmatprep.subr.mxu0 0.0
    %2310 = vmatpush1.msra.mxu0 0.0
    %2311 = vmatprep.subr.mxu0 0.0
    %2312 = vmatpush1.msra.mxu0 0.0
    %2313 = vmatprep.subr.mxu0 0.0
    %2314 = vmatpush1.msra.mxu0 0.0
    %2315 = vmatprep.subr.mxu0 0.0
    %2316 = vmatpush1.msra.mxu0 0.0
    %2317 = vmatprep.subr.mxu0 0.0
    %2318 = vmatpush1.msra.mxu0 0.0
    %2319 = vmatprep.subr.mxu0 0.0
    %2320 = vmatpush1.msra.mxu0 0.0
    %2321 = vmatprep.subr.mxu0 0.0
    %2322 = vmatpush1.msra.mxu0 0.0
    %2323 = vmatprep.subr.mxu0 0.0
    %2324 = vmatpush1.msra.mxu0 0.0
    %2325 = vmatprep.subr.mxu0 0.0
    %2326 = vmatpush1.msra.mxu0 0.0
    %2327 = vmatprep.subr.mxu0 0.0
    %2328 = vmatpush1.msra.mxu0 0.0
    %2329 = vmatprep.subr.mxu0 0.0
    %2330 = vmatpush1.msra.mxu0 0.0
    %2331 = vmatprep.subr.mxu0 0.0
    %2332 = vmatpush1.msra.mxu0 0.0
    %2333 = vmatprep.subr.mxu0 0.0
    %2334 = vmatpush1.msra.mxu0 0.0
    %2335 = vmatprep.subr.mxu0 0.0
    %2336 = vmatpush1.msra.mxu0 0.0
    %2337 = vmatprep.subr.mxu0 0.0
    %2338 = vmatpush1.msra.mxu0 0.0
    %2339 = vmatprep.subr.mxu0 0.0
    %2340 = vmatpush1.msra.mxu0 0.0
    %2341 = vmatprep.subr.mxu0 0.0
    %2342 = vmatpush1.msra.mxu0 0.0
    %2343 = vmatprep.subr.mxu0 0.0
    %2344 = vmatpush1.msra.mxu0 0.0
    %2345 = vmatprep.subr.mxu0 0.0
    %2346 = vmatpush1.msra.mxu0 0.0
    %2347 = vmatprep.subr.mxu0 0.0
    %2348 = vmatpush1.msra.mxu0 0.0
    %2349 = vmatprep.subr.mxu0 0.0
    %2350 = vmatpush1.msra.mxu0 0.0
    %2351 = vmatprep.subr.mxu0 0.0
    %2352 = vmatpush1.msra.mxu0 0.0
    %2353 = vmatprep.subr.mxu0 0.0
    %2354 = vmatpush1.msra.mxu0 0.0
    %2355 = vmatprep.subr.mxu0 0.0
    %2356 = vmatpush1.msra.mxu0 0.0
    %2357 = vmatprep.mubr.f32.mxu0 0.0
    %2358 = vmatmul.mubr.f32.gmra.mrb[0].mxu0 %v2288
    %v2359 = vpop.f32.mrb[0].mxu0
    %v2360 = vadd.f32 %v2286, %v2359
    %v2361 = vpop.f32.mrb[0].mxu0
    %2362 = vmatprep.mubr.f32.mxu0 0.0
    %2363 = vmatmul.mubr.f32.gmra.mrb[0].mxu0 %v2291
    %v2364 = vpop.f32.mrb[0].mxu0
    %v2365 = vadd.f32 %v2286, %v2364
    %v2366 = vpop.f32.mrb[0].mxu0
    %2367 = vdwg.mxu0
    %v2368 = vadd.f32 %v1320, %v2360
    %v2369 = vadd.f32 %v1321, %v2365
    %v2370 = vsel %vm72, %v2368, 0.0
    %2371 = vadd.xlane.f32.xlu0 %v2370
    %v2372 = vpop.xlane.xlu0 %2371
    %v2373 = vsel %vm72, %v2369, 0.0
    %2374 = vadd.xlane.f32.xlu0 %v2373
    %v2375 = vpop.xlane.xlu0 %2374
    %v2376 = vmul.f32 %v2372, %v79
    %v2377 = vmul.f32 %v2375, %v79
    %v2378 = vsub.f32 %v2368, %v2376
    %v2379 = vsub.f32 %v2369, %v2377
    %v2380 = vmul.f32 %v2378, %v2378
    %v2381 = vmul.f32 %v2379, %v2379
    %v2382 = vsel %vm72, %v2380, 0.0
    %2383 = vadd.xlane.f32.xlu0 %v2382
    %v2384 = vpop.xlane.xlu0 %2383
    %v2385 = vsel %vm72, %v2381, 0.0
    %2386 = vadd.xlane.f32.xlu0 %v2385
    %v2387 = vpop.xlane.xlu0 %2386
    %v2388 = vmul.f32 %v2384, %v79
    %v2389 = vmul.f32 %v2387, %v79
    %v2390 = vadd.f32 %v2388, 1e-05
    %v2391 = vadd.f32 %v2389, 1e-05
    %v2392 = vrsqrt.pop %v2390
    %v2393 = vrsqrt.pop %v2391
    %v2394 = vmul.f32 %v2378, %v2392
    %v2395 = vmul.f32 %v2379, %v2393
    %v2396 = vlaneseq
    %v2397 = vshrl.u32 %v2396, 7
    %v2398 = vsub.s32 0, %v2397
    %v2399 = vrot.slane %v1348, %v2398
    %v2400 = vmul.f32 %v2394, %v2399
    %v2401 = vmul.f32 %v2395, %v2399
    %v2402 = vlaneseq
    %v2403 = vshrl.u32 %v2402, 7
    %v2404 = vsub.s32 0, %v2403
    %v2405 = vrot.slane %v1349, %v2404
    %v2406 = vadd.f32 %v2400, %v2405
    %v2407 = vadd.f32 %v2401, %v2405
    %v2408 = vlaneseq
    %v2409 = vshrl.u32 %v2408, 7
    %v2410 = vsub.s32 0, %v2409
    %v2411 = vrot.slane %v1344, %v2410
    %v2413 = vsel %vm72, %v2406, 0
    %v2416 = vsel %vm72, %v2407, 0
    %2418 = vmatprep.subr.mxu0 0.0
    %2419 = vmatpush1.msra.mxu0 %v1333
    %2420 = vmatprep.subr.mxu0 0.0
    %2421 = vmatpush1.msra.mxu0 %v1334
    %2422 = vmatprep.subr.mxu0 0.0
    %2423 = vmatpush1.msra.mxu0 %v1335
    %2424 = vmatprep.subr.mxu0 0.0
    %2425 = vmatpush1.msra.mxu0 %v1336
    %2426 = vmatprep.subr.mxu0 0.0
    %2427 = vmatpush1.msra.mxu0 0.0
    %2428 = vmatprep.subr.mxu0 0.0
    %2429 = vmatpush1.msra.mxu0 0.0
    %2430 = vmatprep.subr.mxu0 0.0
    %2431 = vmatpush1.msra.mxu0 0.0
    %2432 = vmatprep.subr.mxu0 0.0
    %2433 = vmatpush1.msra.mxu0 0.0
    %2434 = vmatprep.subr.mxu0 0.0
    %2435 = vmatpush1.msra.mxu0 0.0
    %2436 = vmatprep.subr.mxu0 0.0
    %2437 = vmatpush1.msra.mxu0 0.0
    %2438 = vmatprep.subr.mxu0 0.0
    %2439 = vmatpush1.msra.mxu0 0.0
    %2440 = vmatprep.subr.mxu0 0.0
    %2441 = vmatpush1.msra.mxu0 0.0
    %2442 = vmatprep.subr.mxu0 0.0
    %2443 = vmatpush1.msra.mxu0 0.0
    %2444 = vmatprep.subr.mxu0 0.0
    %2445 = vmatpush1.msra.mxu0 0.0
    %2446 = vmatprep.subr.mxu0 0.0
    %2447 = vmatpush1.msra.mxu0 0.0
    %2448 = vmatprep.subr.mxu0 0.0
    %2449 = vmatpush1.msra.mxu0 0.0
    %2450 = vmatprep.subr.mxu0 0.0
    %2451 = vmatpush1.msra.mxu0 0.0
    %2452 = vmatprep.subr.mxu0 0.0
    %2453 = vmatpush1.msra.mxu0 0.0
    %2454 = vmatprep.subr.mxu0 0.0
    %2455 = vmatpush1.msra.mxu0 0.0
    %2456 = vmatprep.subr.mxu0 0.0
    %2457 = vmatpush1.msra.mxu0 0.0
    %2458 = vmatprep.subr.mxu0 0.0
    %2459 = vmatpush1.msra.mxu0 0.0
    %2460 = vmatprep.subr.mxu0 0.0
    %2461 = vmatpush1.msra.mxu0 0.0
    %2462 = vmatprep.subr.mxu0 0.0
    %2463 = vmatpush1.msra.mxu0 0.0
    %2464 = vmatprep.subr.mxu0 0.0
    %2465 = vmatpush1.msra.mxu0 0.0
    %2466 = vmatprep.subr.mxu0 0.0
    %2467 = vmatpush1.msra.mxu0 0.0
    %2468 = vmatprep.subr.mxu0 0.0
    %2469 = vmatpush1.msra.mxu0 0.0
    %2470 = vmatprep.subr.mxu0 0.0
    %2471 = vmatpush1.msra.mxu0 0.0
    %2472 = vmatprep.subr.mxu0 0.0
    %2473 = vmatpush1.msra.mxu0 0.0
    %2474 = vmatprep.subr.mxu0 0.0
    %2475 = vmatpush1.msra.mxu0 0.0
    %2476 = vmatprep.subr.mxu0 0.0
    %2477 = vmatpush1.msra.mxu0 0.0
    %2478 = vmatprep.subr.mxu0 0.0
    %2479 = vmatpush1.msra.mxu0 0.0
    %2480 = vmatprep.subr.mxu0 0.0
    %2481 = vmatpush1.msra.mxu0 0.0
    %2482 = vmatprep.mubr.f32.mxu0 0.0
    %2483 = vmatmul.mubr.f32.gmra.mrb[0].mxu0 %v2413
    %v2484 = vpop.f32.mrb[0].mxu0
    %v2485 = vadd.f32 %v2411, %v2484
    %v2486 = vpop.f32.mrb[0].mxu0
    %2487 = vmatprep.mubr.f32.mxu0 0.0
    %2488 = vmatmul.mubr.f32.gmra.mrb[0].mxu0 %v2416
    %v2489 = vpop.f32.mrb[0].mxu0
    %v2490 = vadd.f32 %v2411, %v2489
    %v2491 = vpop.f32.mrb[0].mxu0
    %2492 = vdwg.mxu0
    %v2493 = vmax.f32 %v2485, 0.0
    %v2494 = vmax.f32 %v2490, 0.0
    %v2495 = vlaneseq
    %v2496 = vshrl.u32 %v2495, 7
    %v2497 = vsub.s32 0, %v2496
    %v2498 = vrot.slane %v1345, %v2497
    %v2500 = vsel %vm1226, %v2493, 0
    %v2503 = vsel %vm1226, %v2494, 0
    %v2506 = vsel %vm1226, %v1338, 0
    %v2509 = vsel %vm1226, %v1339, 0
    %v2512 = vsel %vm1226, %v1340, 0
    %v2515 = vsel %vm1226, %v1341, 0
    %2517 = vmatprep.subr.mxu0 0.0
    %2518 = vmatpush1.xpose.msra.mxu0 %v2506
    %2519 = vmatprep.subr.mxu0 0.0
    %2520 = vmatpush1.xpose.msra.mxu0 %v2509
    %2521 = vmatprep.subr.mxu0 0.0
    %2522 = vmatpush1.xpose.msra.mxu0 %v2512
    %2523 = vmatprep.subr.mxu0 0.0
    %2524 = vmatpush1.xpose.msra.mxu0 %v2515
    %2525 = vmatprep.subr.mxu0 0.0
    %2526 = vmatpush1.xpose.msra.mxu0 0.0
    %2527 = vmatprep.subr.mxu0 0.0
    %2528 = vmatpush1.xpose.msra.mxu0 0.0
    %2529 = vmatprep.subr.mxu0 0.0
    %2530 = vmatpush1.xpose.msra.mxu0 0.0
    %2531 = vmatprep.subr.mxu0 0.0
    %2532 = vmatpush1.xpose.msra.mxu0 0.0
    %2533 = vmatprep.subr.mxu0 0.0
    %2534 = vmatpush1.xpose.msra.mxu0 0.0
    %2535 = vmatprep.subr.mxu0 0.0
    %2536 = vmatpush1.xpose.msra.mxu0 0.0
    %2537 = vmatprep.subr.mxu0 0.0
    %2538 = vmatpush1.xpose.msra.mxu0 0.0
    %2539 = vmatprep.subr.mxu0 0.0
    %2540 = vmatpush1.xpose.msra.mxu0 0.0
    %2541 = vmatprep.subr.mxu0 0.0
    %2542 = vmatpush1.xpose.msra.mxu0 0.0
    %2543 = vmatprep.subr.mxu0 0.0
    %2544 = vmatpush1.xpose.msra.mxu0 0.0
    %2545 = vmatprep.subr.mxu0 0.0
    %2546 = vmatpush1.xpose.msra.mxu0 0.0
    %2547 = vmatprep.subr.mxu0 0.0
    %2548 = vmatpush1.xpose.msra.mxu0 0.0
    %2549 = vmatprep.subr.mxu0 0.0
    %2550 = vmatpush1.xpose.msra.mxu0 0.0
    %2551 = vmatprep.subr.mxu0 0.0
    %2552 = vmatpush1.xpose.msra.mxu0 0.0
    %2553 = vmatprep.subr.mxu0 0.0
    %2554 = vmatpush1.xpose.msra.mxu0 0.0
    %2555 = vmatprep.subr.mxu0 0.0
    %2556 = vmatpush1.xpose.msra.mxu0 0.0
    %2557 = vmatprep.subr.mxu0 0.0
    %2558 = vmatpush1.xpose.msra.mxu0 0.0
    %2559 = vmatprep.subr.mxu0 0.0
    %2560 = vmatpush1.xpose.msra.mxu0 0.0
    %2561 = vmatprep.subr.mxu0 0.0
    %2562 = vmatpush1.xpose.msra.mxu0 0.0
    %2563 = vmatprep.subr.mxu0 0.0
    %2564 = vmatpush1.xpose.msra.mxu0 0.0
    %2565 = vmatprep.subr.mxu0 0.0
    %2566 = vmatpush1.xpose.msra.mxu0 0.0
    %2567 = vmatprep.subr.mxu0 0.0
    %2568 = vmatpush1.xpose.msra.mxu0 0.0
    %2569 = vmatprep.subr.mxu0 0.0
    %2570 = vmatpush1.xpose.msra.mxu0 0.0
    %2571 = vmatprep.subr.mxu0 0.0
    %2572 = vmatpush1.xpose.msra.mxu0 0.0
    %2573 = vmatprep.subr.mxu0 0.0
    %2574 = vmatpush1.xpose.msra.mxu0 0.0
    %2575 = vmatprep.subr.mxu0 0.0
    %2576 = vmatpush1.xpose.msra.mxu0 0.0
    %2577 = vmatprep.subr.mxu0 0.0
    %2578 = vmatpush1.xpose.msra.mxu0 0.0
    %2579 = vmatprep.subr.mxu0 0.0
    %2580 = vmatpush1.xpose.msra.mxu0 0.0
    %2581 = vmatprep.mubr.f32.mxu0 0.0
    %2582 = vmatmul.mubr.f32.gmra.mrb[0].mxu0 %v2500
    %v2583 = vpop.f32.mrb[0].mxu0
    %v2584 = vadd.f32 %v2498, %v2583
    %v2585 = vpop.f32.mrb[0].mxu0
    %2586 = vmatprep.mubr.f32.mxu0 0.0
    %2587 = vmatmul.mubr.f32.gmra.mrb[0].mxu0 %v2503
    %v2588 = vpop.f32.mrb[0].mxu0
    %v2589 = vadd.f32 %v2498, %v2588
    %v2590 = vpop.f32.mrb[0].mxu0
    %2591 = vdwg.mxu0
    %v2592 = vadd.f32 %v2368, %v2584
    %v2593 = vadd.f32 %v2369, %v2589
    %v2594 = vld [vmem:[%s4 + $0x10] sm:$0x1]
    %v2595 = vld [vmem:[%s4 + $0x11] sm:$0x1]
    %v2596 = vsel %vm72, %v2592, 0.0
    %2597 = vadd.xlane.f32.xlu0 %v2596
    %v2598 = vpop.xlane.xlu0 %2597
    %v2599 = vsel %vm72, %v2593, 0.0
    %2600 = vadd.xlane.f32.xlu0 %v2599
    %v2601 = vpop.xlane.xlu0 %2600
    %v2602 = vmul.f32 %v2598, %v79
    %v2603 = vmul.f32 %v2601, %v79
    %v2604 = vsub.f32 %v2592, %v2602
    %v2605 = vsub.f32 %v2593, %v2603
    %v2606 = vmul.f32 %v2604, %v2604
    %v2607 = vmul.f32 %v2605, %v2605
    %v2608 = vsel %vm72, %v2606, 0.0
    %2609 = vadd.xlane.f32.xlu0 %v2608
    %v2610 = vpop.xlane.xlu0 %2609
    %v2611 = vsel %vm72, %v2607, 0.0
    %2612 = vadd.xlane.f32.xlu0 %v2611
    %v2613 = vpop.xlane.xlu0 %2612
    %v2614 = vmul.f32 %v2610, %v79
    %v2615 = vmul.f32 %v2613, %v79
    %v2616 = vadd.f32 %v2614, 1e-05
    %v2617 = vadd.f32 %v2615, 1e-05
    %v2618 = vrsqrt.pop %v2616
    %v2619 = vrsqrt.pop %v2617
    %v2620 = vmul.f32 %v2604, %v2618
    %v2621 = vmul.f32 %v2605, %v2619
    %v2622 = vlaneseq
    %v2623 = vshrl.u32 %v2622, 7
    %v2624 = vsub.s32 0, %v2623
    %v2625 = vrot.slane %v2594, %v2624
    %v2626 = vmul.f32 %v2620, %v2625
    %v2627 = vmul.f32 %v2621, %v2625
    %v2628 = vlaneseq
    %v2629 = vshrl.u32 %v2628, 7
    %v2630 = vsub.s32 0, %v2629
    %v2631 = vrot.slane %v2595, %v2630
    %v2632 = vadd.f32 %v2626, %v2631
    %v2633 = vadd.f32 %v2627, %v2631
    %2634 = vst.msk [vmem:[#allocation5] sm:$0xff] %vm72, %v2632
    %2635 = vst.msk [vmem:[#allocation5 + $0x8] sm:$0xff] %vm72, %v2633
    // Predicated region
    $region26: #{encoder_forward.1} parent=1 // pred_check
      _
    $region27: #{encoder_forward.1} parent=1 // pred_check_branch
      %2637 = sbr.rel (0) target = $region29
    $region28: #{encoder_forward.1} parent=1 // pred_region
      %s2639 = ssub.s32 256, 256
      %2640 = vsyncadd [#allocation4], %s2639
      %s2641 = sshll.u32 [#allocation5], 4
      %s2642 = int_to_ptr.vmem [resolvable:$true] %s2641
      %2647 = dma.vmem_to_hbm [thread:$0]  %s2642, 256, %s5, [#allocation4], 128, 128, 8
    $region29: #{encoder_forward.1} parent=1 // pred_fallthru
      _
    // Predicated region
    $region30: #{encoder_forward.1} parent=1 // pred_check
      _
    $region31: #{encoder_forward.1} parent=1 // pred_check_branch
      %2649 = sbr.rel (0) target = $region33
    $region32: #{encoder_forward.1} parent=1 // pred_region
      %2650 = dma.done [#allocation4], 256
    $region33: #{encoder_forward.1} parent=1 // pred_fallthru
      _
    %2651 = vsyncpa [#allocation3], 1
    %2652 = vsyncpa [#allocation4], 1

</llo_original>
